<compile_context>
chip_gen: v6e
topology: v6e:2x2x1
jax: 0.10.0
libtpu: 0.0.40
codegen_flags: <defaults>
</compile_context>

<pallas_src>
import functools

import jax
import jax.numpy as jnp
from jax import lax
from jax.experimental import pallas as pl
from jax.experimental.pallas import tpu as pltpu


def _softplus(x):
    # numerically stable softplus (matches torch.nn.functional.softplus)
    return jnp.maximum(x, 0.0) + jnp.log1p(jnp.exp(-jnp.abs(x)))


def _round_up(v, m):
    return ((v + m - 1) // m) * m


def gru_linear_kernel(x_ref, wih_ref, whh_ref, bcomb_ref, bhn_ref,
                      wlin_ref, blin_ref, out_ref,
                      gi_scr, hs_scr, h_scr, *, d_out, mxu_dtype):
    # x_ref:    (T, BP, Din)   time-major, batch-padded, bf16
    # wih_ref:  (Din, 3*HP)    weight_ih.T (gate-major r|z|n, hidden padded) bf16
    # whh_ref:  (HP, 3*HP)     weight_hh.T, bf16
    # bcomb_ref:(1, 3*HP)      b_ih with b_hr / b_hz pre-added, f32
    # bhn_ref:  (1, HP)        b_hn (must stay inside r*(...)), f32
    # wlin_ref: (HP, DPAD)     linear.weight.T, output padded to 128 lanes, bf16
    # blin_ref: (1, DPAD)      f32
    # out_ref:  (T*BP, DPAD)   lane-dense f32 output slab
    # gi_scr:   (T, BP, 3*HP)  precomputed input projection (f32)
    # hs_scr:   (T, BP, HP)    all hidden states (f32)
    # h_scr:    (BP, HP)       running hidden state (f32)
    T, BP, Din = x_ref.shape
    HP = h_scr.shape[1]
    DPAD = out_ref.shape[-1]

    # ---- hoisted input projection: one big matmul, bias pre-merged --------
    x_flat = x_ref[...].reshape(T * BP, Din)
    gi_all = jnp.dot(x_flat, wih_ref[...],
                     preferred_element_type=jnp.float32) + bcomb_ref[...]
    gi_scr[...] = gi_all.reshape(T, BP, 3 * HP)

    h_scr[...] = jnp.zeros_like(h_scr)
    b_hn = bhn_ref[...]                      # (1, HP), hoisted

    # ---- serial recurrence: exactly one MXU dot + gate math per step ------
    def step(t, carry):
        h_prev = h_scr[...]                                        # f32
        gh = jnp.dot(h_prev.astype(mxu_dtype), whh_ref[...],
                     preferred_element_type=jnp.float32)           # (BP, 3HP)
        gi = gi_scr[t]                                             # (BP, 3HP)
        r = jax.nn.sigmoid(gi[:, 0:HP] + gh[:, 0:HP])
        z = jax.nn.sigmoid(gi[:, HP:2 * HP] + gh[:, HP:2 * HP])
        n = jnp.tanh(gi[:, 2 * HP:] + r * (gh[:, 2 * HP:] + b_hn))
        h_new = (1.0 - z) * n + z * h_prev
        h_scr[...] = h_new
        hs_scr[t] = h_new
        return carry

    lax.fori_loop(0, T, step, 0, unroll=True)

    # ---- deferred linear head + partial softplus, one lane-dense store ----
    hs = hs_scr[...].reshape(T * BP, HP)
    y = jnp.dot(hs.astype(mxu_dtype), wlin_ref[...],
                preferred_element_type=jnp.float32) + blin_ref[...]
    col = lax.broadcasted_iota(jnp.int32, (T * BP, DPAD), 1)
    sp_mask = (col >= d_out - 3) & (col < d_out)
    out_ref[...] = jnp.where(sp_mask, _softplus(y), y)


def gru_model_forward(x, params, *, mxu_dtype=jnp.bfloat16):
    """x: (B, T, D_in) batch-first (like the PyTorch module). Returns (B, T, D_out)."""
    B, T, Din = x.shape
    Dout, H = params["w_lin"].shape
    f32 = jnp.float32

    HP = _round_up(H, 128)     # lane-aligned hidden (725 -> 768)
    BP = _round_up(B, 8)       # sublane-aligned batch
    DPAD = _round_up(Dout, 128)  # lane-dense output slab

    # gate-split (r|z|n) and pad the hidden dim with zeros
    w_ih3 = jnp.pad(params["w_ih"].reshape(3, H, Din),
                    ((0, 0), (0, HP - H), (0, 0)))                 # (3, HP, Din)
    w_hh3 = jnp.pad(params["w_hh"].reshape(3, H, H),
                    ((0, 0), (0, HP - H), (0, HP - H)))            # (3, HP, HP)
    b_ih3 = jnp.pad(params["b_ih"].reshape(3, H), ((0, 0), (0, HP - H)))
    b_hh3 = jnp.pad(params["b_hh"].reshape(3, H), ((0, 0), (0, HP - H)))

    # pre-merge biases: gi carries b_ih (+ b_hr for r, + b_hz for z); only b_hn
    # has to remain separate (it sits inside r * (W_hn h + b_hn)).
    b_comb = (b_ih3.at[0].add(b_hh3[0]).at[1].add(b_hh3[1])
              ).reshape(1, 3 * HP).astype(f32)
    b_hn = b_hh3[2].reshape(1, HP).astype(f32)

    wih_t = jnp.transpose(w_ih3, (2, 0, 1)).reshape(Din, 3 * HP).astype(mxu_dtype)
    whh_t = jnp.transpose(w_hh3, (2, 0, 1)).reshape(HP, 3 * HP).astype(mxu_dtype)

    w_lin_p = jnp.pad(params["w_lin"], ((0, DPAD - Dout), (0, HP - H)))
    wlin_t = jnp.transpose(w_lin_p).astype(mxu_dtype)              # (HP, DPAD)
    blin = jnp.pad(params["b_lin"], (0, DPAD - Dout)).reshape(1, DPAD).astype(f32)

    # batch-pad + time-major; bf16 MXU inputs, f32 accumulation in-kernel
    x_tm = jnp.transpose(jnp.pad(x, ((0, BP - B), (0, 0), (0, 0))),
                         (1, 0, 2)).astype(mxu_dtype)              # (T, BP, Din)

    kernel = functools.partial(gru_linear_kernel, d_out=Dout, mxu_dtype=mxu_dtype)

    out2d = pl.pallas_call(
        kernel,
        out_shape=jax.ShapeDtypeStruct((T * BP, DPAD), f32),
        grid_spec=pltpu.PrefetchScalarGridSpec(
            num_scalar_prefetch=0,
            grid=(1,),
            in_specs=[
                pl.BlockSpec((T, BP, Din), lambda i: (0, 0, 0)),
                pl.BlockSpec((Din, 3 * HP), lambda i: (0, 0)),
                pl.BlockSpec((HP, 3 * HP), lambda i: (0, 0)),
                pl.BlockSpec((1, 3 * HP), lambda i: (0, 0)),
                pl.BlockSpec((1, HP), lambda i: (0, 0)),
                pl.BlockSpec((HP, DPAD), lambda i: (0, 0)),
                pl.BlockSpec((1, DPAD), lambda i: (0, 0)),
            ],
            out_specs=pl.BlockSpec((T * BP, DPAD), lambda i: (0, 0)),
            scratch_shapes=[
                pltpu.VMEM((T, BP, 3 * HP), f32),   # precomputed gi
                pltpu.VMEM((T, BP, HP), f32),       # all hidden states
                pltpu.VMEM((BP, HP), f32),          # running hidden state
            ],
        ),
        compiler_params=pltpu.CompilerParams(
            dimension_semantics=("arbitrary",)),
    )(x_tm, wih_t, whh_t, b_comb, b_hn, wlin_t, blin)

    out = out2d.reshape(T, BP, DPAD)
    out = jnp.transpose(out, (1, 0, 2))[:B, :, :Dout]              # (B, T, Dout)
    return out


def reference_forward(x, params):
    """Pure-JAX f32 reference reproducing the PyTorch forward."""
    B, T, Din = x.shape
    H = params["w_hh"].shape[1]
    w_ih, w_hh = params["w_ih"], params["w_hh"]
    b_ih, b_hh = params["b_ih"], params["b_hh"]

    def step(h, x_t):
        gi = x_t @ w_ih.T + b_ih
        gh = h @ w_hh.T + b_hh
        r = jax.nn.sigmoid(gi[:, :H] + gh[:, :H])
        z = jax.nn.sigmoid(gi[:, H:2 * H] + gh[:, H:2 * H])
        n = jnp.tanh(gi[:, 2 * H:] + r * gh[:, 2 * H:])
        h_new = (1.0 - z) * n + z * h
        return h_new, h_new

    h0 = jnp.zeros((B, H), jnp.float32)
    _, hs = lax.scan(step, h0, jnp.transpose(x, (1, 0, 2)))
    hs = jnp.transpose(hs, (1, 0, 2))                              # (B, T, H)
    y = hs @ params["w_lin"].T + params["b_lin"]
    y = y.at[:, :, -3:].set(_softplus(y[:, :, -3:]))
    return y


if __name__ == "__main__":
    # Small shapes consistent with the module: D_in=2, D_out=6; hidden shrunk
    # from 725 -> 100 for the demo (non-multiple of 128 to exercise the same
    # lane-padding path that 725 -> 768 uses in production).
    B, T, Din, Dout, H = 2, 8, 2, 6, 100

    key = jax.random.PRNGKey(0)
    ks = jax.random.split(key, 7)
    k = 1.0 / jnp.sqrt(jnp.float32(H))
    params = {
        "w_ih": jax.random.uniform(ks[0], (3 * H, Din), jnp.float32, -k, k),
        "w_hh": jax.random.uniform(ks[1], (3 * H, H), jnp.float32, -k, k),
        "b_ih": jax.random.uniform(ks[2], (3 * H,), jnp.float32, -k, k),
        "b_hh": jax.random.uniform(ks[3], (3 * H,), jnp.float32, -k, k),
        "w_lin": jax.random.uniform(ks[4], (Dout, H), jnp.float32, -k, k),
        "b_lin": jax.random.uniform(ks[5], (Dout,), jnp.float32, -k, k),
    }
    x = jax.random.normal(ks[6], (B, T, Din), jnp.float32)

    out = jax.block_until_ready(gru_model_forward(x, params))
    ref = reference_forward(x, params)

    assert out.shape == (B, T, Dout), out.shape
    # kernel uses bf16 MXU inputs (f32 accumulation) vs the pure-f32 reference
    err = float(jnp.max(jnp.abs(out - ref)))
    assert err < 5e-2, err

    print("KERNEL_OK")
</pallas_src>

<mosaic_0001>
module attributes {stable_mosaic.version = 11 : i64} {
  func.func @gru_linear_kernel(%arg0: i32, %arg1: memref<8x8x2xbf16, #tpu.memory_space<vmem>>, %arg2: memref<2x384xbf16, #tpu.memory_space<vmem>>, %arg3: memref<128x384xbf16, #tpu.memory_space<vmem>>, %arg4: memref<1x384xf32, #tpu.memory_space<vmem>>, %arg5: memref<1x128xf32, #tpu.memory_space<vmem>>, %arg6: memref<128x128xbf16, #tpu.memory_space<vmem>>, %arg7: memref<1x128xf32, #tpu.memory_space<vmem>>, %arg8: memref<64x128xf32, #tpu.memory_space<vmem>>, %arg9: memref<8x8x384xf32, #tpu.memory_space<vmem>>, %arg10: memref<8x8x128xf32, #tpu.memory_space<vmem>>, %arg11: memref<8x128xf32, #tpu.memory_space<vmem>>) attributes {dimension_semantics = [#tpu.dimension_semantics<arbitrary>], iteration_bounds = array<i64: 1>, scalar_prefetch = 0 : i64, scratch_operands = 3 : i64, tpu.core_type = #tpu.core_type<tc>, window_params = [{pipeline_mode = #tpu.pipeline_mode<synchronous>, transform_indices = @transform_0, window_bounds = array<i64: 8, 8, 2>}, {pipeline_mode = #tpu.pipeline_mode<synchronous>, transform_indices = @transform_1, window_bounds = array<i64: 2, 384>}, {pipeline_mode = #tpu.pipeline_mode<synchronous>, transform_indices = @transform_2, window_bounds = array<i64: 128, 384>}, {pipeline_mode = #tpu.pipeline_mode<synchronous>, transform_indices = @transform_3, window_bounds = array<i64: 1, 384>}, {pipeline_mode = #tpu.pipeline_mode<synchronous>, transform_indices = @transform_4, window_bounds = array<i64: 1, 128>}, {pipeline_mode = #tpu.pipeline_mode<synchronous>, transform_indices = @transform_5, window_bounds = array<i64: 128, 128>}, {pipeline_mode = #tpu.pipeline_mode<synchronous>, transform_indices = @transform_6, window_bounds = array<i64: 1, 128>}, {pipeline_mode = #tpu.pipeline_mode<synchronous>, transform_indices = @transform_7, window_bounds = array<i64: 64, 128>}]} {
    %c0 = arith.constant 0 : index
    %c0_0 = arith.constant 0 : index
    %c0_1 = arith.constant 0 : index
    %0 = vector.load %arg1[%c0, %c0_0, %c0_1] : memref<8x8x2xbf16, #tpu.memory_space<vmem>>, vector<8x8x2xbf16>
    %1 = vector.shape_cast %0 : vector<8x8x2xbf16> to vector<64x2xbf16>
    %c0_2 = arith.constant 0 : index
    %c0_3 = arith.constant 0 : index
    %2 = vector.load %arg2[%c0_2, %c0_3] : memref<2x384xbf16, #tpu.memory_space<vmem>>, vector<2x384xbf16>
    %cst = arith.constant dense<0.000000e+00> : vector<64x384xf32>
    %3 = tpu.matmul %1, %2, %cst {dimension_numbers = #tpu.dot_dimension_numbers<[1], [0], [0], [1], [0, 0, 1, 1], [], []>} : vector<64x2xbf16>, vector<2x384xbf16>, vector<64x384xf32> -> vector<64x384xf32>
    %c0_4 = arith.constant 0 : index
    %c0_5 = arith.constant 0 : index
    %4 = vector.load %arg4[%c0_4, %c0_5] : memref<1x384xf32, #tpu.memory_space<vmem>>, vector<1x384xf32>
    %5 = vector.broadcast %4 : vector<1x384xf32> to vector<64x384xf32>
    %6 = arith.addf %3, %5 : vector<64x384xf32>
    %7 = vector.shape_cast %6 : vector<64x384xf32> to vector<8x8x384xf32>
    %c0_6 = arith.constant 0 : index
    %c0_7 = arith.constant 0 : index
    %c0_8 = arith.constant 0 : index
    %8 = vector.load %arg9[%c0_6, %c0_7, %c0_8] : memref<8x8x384xf32, #tpu.memory_space<vmem>>, vector<8x8x384xf32>
    tpu.vector_store %arg9[%c0_6, %c0_7, %c0_8], %7 {strides = array<i32>} : memref<8x8x384xf32, #tpu.memory_space<vmem>>, vector<8x8x384xf32>,
    %cst_9 = arith.constant 0.000000e+00 : f32
    %9 = vector.broadcast %cst_9 : f32 to vector<8x128xf32>
    %c0_10 = arith.constant 0 : index
    %c0_11 = arith.constant 0 : index
    %10 = vector.load %arg11[%c0_10, %c0_11] : memref<8x128xf32, #tpu.memory_space<vmem>>, vector<8x128xf32>
    tpu.vector_store %arg11[%c0_10, %c0_11], %9 {strides = array<i32>} : memref<8x128xf32, #tpu.memory_space<vmem>>, vector<8x128xf32>,
    %c0_12 = arith.constant 0 : index
    %c0_13 = arith.constant 0 : index
    %11 = vector.load %arg5[%c0_12, %c0_13] : memref<1x128xf32, #tpu.memory_space<vmem>>, vector<1x128xf32>
    %c0_i32 = arith.constant 0 : i32
    %c0_14 = arith.constant 0 : index
    %c0_15 = arith.constant 0 : index
    %12 = vector.load %arg11[%c0_14, %c0_15] : memref<8x128xf32, #tpu.memory_space<vmem>>, vector<8x128xf32>
    %13 = arith.truncf %12 : vector<8x128xf32> to vector<8x128xbf16>
    %c0_16 = arith.constant 0 : index
    %c0_17 = arith.constant 0 : index
    %14 = vector.load %arg3[%c0_16, %c0_17] : memref<128x384xbf16, #tpu.memory_space<vmem>>, vector<128x384xbf16>
    %cst_18 = arith.constant dense<0.000000e+00> : vector<8x384xf32>
    %15 = tpu.matmul %13, %14, %cst_18 {dimension_numbers = #tpu.dot_dimension_numbers<[1], [0], [0], [1], [0, 0, 1, 1], [], []>} : vector<8x128xbf16>, vector<128x384xbf16>, vector<8x384xf32> -> vector<8x384xf32>
    %16 = arith.index_cast %c0_i32 : i32 to index
    %c0_19 = arith.constant 0 : index
    %c0_20 = arith.constant 0 : index
    %17 = vector.load %arg9[%16, %c0_19, %c0_20] : memref<8x8x384xf32, #tpu.memory_space<vmem>>, vector<1x8x384xf32>
    %18 = vector.shape_cast %17 : vector<1x8x384xf32> to vector<8x384xf32>
    %19 = vector.extract_strided_slice %18 {offsets = [0, 0], sizes = [8, 128], strides = [1, 1]} : vector<8x384xf32> to vector<8x128xf32>
    %20 = vector.extract_strided_slice %15 {offsets = [0, 0], sizes = [8, 128], strides = [1, 1]} : vector<8x384xf32> to vector<8x128xf32>
    %21 = arith.addf %19, %20 : vector<8x128xf32>
    %22 = arith.negf %21 : vector<8x128xf32>
    %23 = math.exp %22 : vector<8x128xf32>
    %cst_21 = arith.constant 1.000000e+00 : f32
    %24 = vector.broadcast %cst_21 : f32 to vector<8x128xf32>
    %25 = arith.addf %24, %23 : vector<8x128xf32>
    %26 = arith.divf %24, %25 : vector<8x128xf32>
    %27 = vector.extract_strided_slice %18 {offsets = [0, 128], sizes = [8, 128], strides = [1, 1]} : vector<8x384xf32> to vector<8x128xf32>
    %28 = vector.extract_strided_slice %15 {offsets = [0, 128], sizes = [8, 128], strides = [1, 1]} : vector<8x384xf32> to vector<8x128xf32>
    %29 = arith.addf %27, %28 : vector<8x128xf32>
    %30 = arith.negf %29 : vector<8x128xf32>
    %31 = math.exp %30 : vector<8x128xf32>
    %cst_22 = arith.constant 1.000000e+00 : f32
    %32 = vector.broadcast %cst_22 : f32 to vector<8x128xf32>
    %33 = arith.addf %32, %31 : vector<8x128xf32>
    %34 = arith.divf %32, %33 : vector<8x128xf32>
    %35 = vector.extract_strided_slice %18 {offsets = [0, 256], sizes = [8, 128], strides = [1, 1]} : vector<8x384xf32> to vector<8x128xf32>
    %36 = vector.extract_strided_slice %15 {offsets = [0, 256], sizes = [8, 128], strides = [1, 1]} : vector<8x384xf32> to vector<8x128xf32>
    %37 = vector.broadcast %11 : vector<1x128xf32> to vector<8x128xf32>
    %38 = arith.addf %36, %37 : vector<8x128xf32>
    %39 = arith.mulf %26, %38 : vector<8x128xf32>
    %40 = arith.addf %35, %39 : vector<8x128xf32>
    %41 = math.tanh %40 : vector<8x128xf32>
    %cst_23 = arith.constant 1.000000e+00 : f32
    %42 = vector.broadcast %cst_23 : f32 to vector<8x128xf32>
    %43 = arith.subf %42, %34 : vector<8x128xf32>
    %44 = arith.mulf %43, %41 : vector<8x128xf32>
    %45 = arith.mulf %34, %12 : vector<8x128xf32>
    %46 = arith.addf %44, %45 : vector<8x128xf32>
    %c0_24 = arith.constant 0 : index
    %c0_25 = arith.constant 0 : index
    %47 = vector.load %arg11[%c0_24, %c0_25] : memref<8x128xf32, #tpu.memory_space<vmem>>, vector<8x128xf32>
    tpu.vector_store %arg11[%c0_24, %c0_25], %46 {strides = array<i32>} : memref<8x128xf32, #tpu.memory_space<vmem>>, vector<8x128xf32>,
    %48 = arith.index_cast %c0_i32 : i32 to index
    %c0_26 = arith.constant 0 : index
    %c0_27 = arith.constant 0 : index
    %49 = vector.load %arg10[%48, %c0_26, %c0_27] : memref<8x8x128xf32, #tpu.memory_space<vmem>>, vector<1x8x128xf32>
    %50 = vector.shape_cast %49 : vector<1x8x128xf32> to vector<8x128xf32>
    %51 = vector.shape_cast %46 : vector<8x128xf32> to vector<1x8x128xf32>
    tpu.vector_store %arg10[%48, %c0_26, %c0_27], %51 {strides = array<i32>} : memref<8x8x128xf32, #tpu.memory_space<vmem>>, vector<1x8x128xf32>,
    %c1_i32 = arith.constant 1 : i32
    %c0_28 = arith.constant 0 : index
    %c0_29 = arith.constant 0 : index
    %52 = vector.load %arg11[%c0_28, %c0_29] : memref<8x128xf32, #tpu.memory_space<vmem>>, vector<8x128xf32>
    %53 = arith.truncf %52 : vector<8x128xf32> to vector<8x128xbf16>
    %c0_30 = arith.constant 0 : index
    %c0_31 = arith.constant 0 : index
    %54 = vector.load %arg3[%c0_30, %c0_31] : memref<128x384xbf16, #tpu.memory_space<vmem>>, vector<128x384xbf16>
    %cst_32 = arith.constant dense<0.000000e+00> : vector<8x384xf32>
    %55 = tpu.matmul %53, %54, %cst_32 {dimension_numbers = #tpu.dot_dimension_numbers<[1], [0], [0], [1], [0, 0, 1, 1], [], []>} : vector<8x128xbf16>, vector<128x384xbf16>, vector<8x384xf32> -> vector<8x384xf32>
    %56 = arith.index_cast %c1_i32 : i32 to index
    %c0_33 = arith.constant 0 : index
    %c0_34 = arith.constant 0 : index
    %57 = vector.load %arg9[%56, %c0_33, %c0_34] : memref<8x8x384xf32, #tpu.memory_space<vmem>>, vector<1x8x384xf32>
    %58 = vector.shape_cast %57 : vector<1x8x384xf32> to vector<8x384xf32>
    %59 = vector.extract_strided_slice %58 {offsets = [0, 0], sizes = [8, 128], strides = [1, 1]} : vector<8x384xf32> to vector<8x128xf32>
    %60 = vector.extract_strided_slice %55 {offsets = [0, 0], sizes = [8, 128], strides = [1, 1]} : vector<8x384xf32> to vector<8x128xf32>
    %61 = arith.addf %59, %60 : vector<8x128xf32>
    %62 = arith.negf %61 : vector<8x128xf32>
    %63 = math.exp %62 : vector<8x128xf32>
    %cst_35 = arith.constant 1.000000e+00 : f32
    %64 = vector.broadcast %cst_35 : f32 to vector<8x128xf32>
    %65 = arith.addf %64, %63 : vector<8x128xf32>
    %66 = arith.divf %64, %65 : vector<8x128xf32>
    %67 = vector.extract_strided_slice %58 {offsets = [0, 128], sizes = [8, 128], strides = [1, 1]} : vector<8x384xf32> to vector<8x128xf32>
    %68 = vector.extract_strided_slice %55 {offsets = [0, 128], sizes = [8, 128], strides = [1, 1]} : vector<8x384xf32> to vector<8x128xf32>
    %69 = arith.addf %67, %68 : vector<8x128xf32>
    %70 = arith.negf %69 : vector<8x128xf32>
    %71 = math.exp %70 : vector<8x128xf32>
    %cst_36 = arith.constant 1.000000e+00 : f32
    %72 = vector.broadcast %cst_36 : f32 to vector<8x128xf32>
    %73 = arith.addf %72, %71 : vector<8x128xf32>
    %74 = arith.divf %72, %73 : vector<8x128xf32>
    %75 = vector.extract_strided_slice %58 {offsets = [0, 256], sizes = [8, 128], strides = [1, 1]} : vector<8x384xf32> to vector<8x128xf32>
    %76 = vector.extract_strided_slice %55 {offsets = [0, 256], sizes = [8, 128], strides = [1, 1]} : vector<8x384xf32> to vector<8x128xf32>
    %77 = vector.broadcast %11 : vector<1x128xf32> to vector<8x128xf32>
    %78 = arith.addf %76, %77 : vector<8x128xf32>
    %79 = arith.mulf %66, %78 : vector<8x128xf32>
    %80 = arith.addf %75, %79 : vector<8x128xf32>
    %81 = math.tanh %80 : vector<8x128xf32>
    %cst_37 = arith.constant 1.000000e+00 : f32
    %82 = vector.broadcast %cst_37 : f32 to vector<8x128xf32>
    %83 = arith.subf %82, %74 : vector<8x128xf32>
    %84 = arith.mulf %83, %81 : vector<8x128xf32>
    %85 = arith.mulf %74, %52 : vector<8x128xf32>
    %86 = arith.addf %84, %85 : vector<8x128xf32>
    %c0_38 = arith.constant 0 : index
    %c0_39 = arith.constant 0 : index
    %87 = vector.load %arg11[%c0_38, %c0_39] : memref<8x128xf32, #tpu.memory_space<vmem>>, vector<8x128xf32>
    tpu.vector_store %arg11[%c0_38, %c0_39], %86 {strides = array<i32>} : memref<8x128xf32, #tpu.memory_space<vmem>>, vector<8x128xf32>,
    %88 = arith.index_cast %c1_i32 : i32 to index
    %c0_40 = arith.constant 0 : index
    %c0_41 = arith.constant 0 : index
    %89 = vector.load %arg10[%88, %c0_40, %c0_41] : memref<8x8x128xf32, #tpu.memory_space<vmem>>, vector<1x8x128xf32>
    %90 = vector.shape_cast %89 : vector<1x8x128xf32> to vector<8x128xf32>
    %91 = vector.shape_cast %86 : vector<8x128xf32> to vector<1x8x128xf32>
    tpu.vector_store %arg10[%88, %c0_40, %c0_41], %91 {strides = array<i32>} : memref<8x8x128xf32, #tpu.memory_space<vmem>>, vector<1x8x128xf32>,
    %c2_i32 = arith.constant 2 : i32
    %c0_42 = arith.constant 0 : index
    %c0_43 = arith.constant 0 : index
    %92 = vector.load %arg11[%c0_42, %c0_43] : memref<8x128xf32, #tpu.memory_space<vmem>>, vector<8x128xf32>
    %93 = arith.truncf %92 : vector<8x128xf32> to vector<8x128xbf16>
    %c0_44 = arith.constant 0 : index
    %c0_45 = arith.constant 0 : index
    %94 = vector.load %arg3[%c0_44, %c0_45] : memref<128x384xbf16, #tpu.memory_space<vmem>>, vector<128x384xbf16>
    %cst_46 = arith.constant dense<0.000000e+00> : vector<8x384xf32>
    %95 = tpu.matmul %93, %94, %cst_46 {dimension_numbers = #tpu.dot_dimension_numbers<[1], [0], [0], [1], [0, 0, 1, 1], [], []>} : vector<8x128xbf16>, vector<128x384xbf16>, vector<8x384xf32> -> vector<8x384xf32>
    %96 = arith.index_cast %c2_i32 : i32 to index
    %c0_47 = arith.constant 0 : index
    %c0_48 = arith.constant 0 : index
    %97 = vector.load %arg9[%96, %c0_47, %c0_48] : memref<8x8x384xf32, #tpu.memory_space<vmem>>, vector<1x8x384xf32>
    %98 = vector.shape_cast %97 : vector<1x8x384xf32> to vector<8x384xf32>
    %99 = vector.extract_strided_slice %98 {offsets = [0, 0], sizes = [8, 128], strides = [1, 1]} : vector<8x384xf32> to vector<8x128xf32>
    %100 = vector.extract_strided_slice %95 {offsets = [0, 0], sizes = [8, 128], strides = [1, 1]} : vector<8x384xf32> to vector<8x128xf32>
    %101 = arith.addf %99, %100 : vector<8x128xf32>
    %102 = arith.negf %101 : vector<8x128xf32>
    %103 = math.exp %102 : vector<8x128xf32>
    %cst_49 = arith.constant 1.000000e+00 : f32
    %104 = vector.broadcast %cst_49 : f32 to vector<8x128xf32>
    %105 = arith.addf %104, %103 : vector<8x128xf32>
    %106 = arith.divf %104, %105 : vector<8x128xf32>
    %107 = vector.extract_strided_slice %98 {offsets = [0, 128], sizes = [8, 128], strides = [1, 1]} : vector<8x384xf32> to vector<8x128xf32>
    %108 = vector.extract_strided_slice %95 {offsets = [0, 128], sizes = [8, 128], strides = [1, 1]} : vector<8x384xf32> to vector<8x128xf32>
    %109 = arith.addf %107, %108 : vector<8x128xf32>
    %110 = arith.negf %109 : vector<8x128xf32>
    %111 = math.exp %110 : vector<8x128xf32>
    %cst_50 = arith.constant 1.000000e+00 : f32
    %112 = vector.broadcast %cst_50 : f32 to vector<8x128xf32>
    %113 = arith.addf %112, %111 : vector<8x128xf32>
    %114 = arith.divf %112, %113 : vector<8x128xf32>
    %115 = vector.extract_strided_slice %98 {offsets = [0, 256], sizes = [8, 128], strides = [1, 1]} : vector<8x384xf32> to vector<8x128xf32>
    %116 = vector.extract_strided_slice %95 {offsets = [0, 256], sizes = [8, 128], strides = [1, 1]} : vector<8x384xf32> to vector<8x128xf32>
    %117 = vector.broadcast %11 : vector<1x128xf32> to vector<8x128xf32>
    %118 = arith.addf %116, %117 : vector<8x128xf32>
    %119 = arith.mulf %106, %118 : vector<8x128xf32>
    %120 = arith.addf %115, %119 : vector<8x128xf32>
    %121 = math.tanh %120 : vector<8x128xf32>
    %cst_51 = arith.constant 1.000000e+00 : f32
    %122 = vector.broadcast %cst_51 : f32 to vector<8x128xf32>
    %123 = arith.subf %122, %114 : vector<8x128xf32>
    %124 = arith.mulf %123, %121 : vector<8x128xf32>
    %125 = arith.mulf %114, %92 : vector<8x128xf32>
    %126 = arith.addf %124, %125 : vector<8x128xf32>
    %c0_52 = arith.constant 0 : index
    %c0_53 = arith.constant 0 : index
    %127 = vector.load %arg11[%c0_52, %c0_53] : memref<8x128xf32, #tpu.memory_space<vmem>>, vector<8x128xf32>
    tpu.vector_store %arg11[%c0_52, %c0_53], %126 {strides = array<i32>} : memref<8x128xf32, #tpu.memory_space<vmem>>, vector<8x128xf32>,
    %128 = arith.index_cast %c2_i32 : i32 to index
    %c0_54 = arith.constant 0 : index
    %c0_55 = arith.constant 0 : index
    %129 = vector.load %arg10[%128, %c0_54, %c0_55] : memref<8x8x128xf32, #tpu.memory_space<vmem>>, vector<1x8x128xf32>
    %130 = vector.shape_cast %129 : vector<1x8x128xf32> to vector<8x128xf32>
    %131 = vector.shape_cast %126 : vector<8x128xf32> to vector<1x8x128xf32>
    tpu.vector_store %arg10[%128, %c0_54, %c0_55], %131 {strides = array<i32>} : memref<8x8x128xf32, #tpu.memory_space<vmem>>, vector<1x8x128xf32>,
    %c3_i32 = arith.constant 3 : i32
    %c0_56 = arith.constant 0 : index
    %c0_57 = arith.constant 0 : index
    %132 = vector.load %arg11[%c0_56, %c0_57] : memref<8x128xf32, #tpu.memory_space<vmem>>, vector<8x128xf32>
    %133 = arith.truncf %132 : vector<8x128xf32> to vector<8x128xbf16>
    %c0_58 = arith.constant 0 : index
    %c0_59 = arith.constant 0 : index
    %134 = vector.load %arg3[%c0_58, %c0_59] : memref<128x384xbf16, #tpu.memory_space<vmem>>, vector<128x384xbf16>
    %cst_60 = arith.constant dense<0.000000e+00> : vector<8x384xf32>
    %135 = tpu.matmul %133, %134, %cst_60 {dimension_numbers = #tpu.dot_dimension_numbers<[1], [0], [0], [1], [0, 0, 1, 1], [], []>} : vector<8x128xbf16>, vector<128x384xbf16>, vector<8x384xf32> -> vector<8x384xf32>
    %136 = arith.index_cast %c3_i32 : i32 to index
    %c0_61 = arith.constant 0 : index
    %c0_62 = arith.constant 0 : index
    %137 = vector.load %arg9[%136, %c0_61, %c0_62] : memref<8x8x384xf32, #tpu.memory_space<vmem>>, vector<1x8x384xf32>
    %138 = vector.shape_cast %137 : vector<1x8x384xf32> to vector<8x384xf32>
    %139 = vector.extract_strided_slice %138 {offsets = [0, 0], sizes = [8, 128], strides = [1, 1]} : vector<8x384xf32> to vector<8x128xf32>
    %140 = vector.extract_strided_slice %135 {offsets = [0, 0], sizes = [8, 128], strides = [1, 1]} : vector<8x384xf32> to vector<8x128xf32>
    %141 = arith.addf %139, %140 : vector<8x128xf32>
    %142 = arith.negf %141 : vector<8x128xf32>
    %143 = math.exp %142 : vector<8x128xf32>
    %cst_63 = arith.constant 1.000000e+00 : f32
    %144 = vector.broadcast %cst_63 : f32 to vector<8x128xf32>
    %145 = arith.addf %144, %143 : vector<8x128xf32>
    %146 = arith.divf %144, %145 : vector<8x128xf32>
    %147 = vector.extract_strided_slice %138 {offsets = [0, 128], sizes = [8, 128], strides = [1, 1]} : vector<8x384xf32> to vector<8x128xf32>
    %148 = vector.extract_strided_slice %135 {offsets = [0, 128], sizes = [8, 128], strides = [1, 1]} : vector<8x384xf32> to vector<8x128xf32>
    %149 = arith.addf %147, %148 : vector<8x128xf32>
    %150 = arith.negf %149 : vector<8x128xf32>
    %151 = math.exp %150 : vector<8x128xf32>
    %cst_64 = arith.constant 1.000000e+00 : f32
    %152 = vector.broadcast %cst_64 : f32 to vector<8x128xf32>
    %153 = arith.addf %152, %151 : vector<8x128xf32>
    %154 = arith.divf %152, %153 : vector<8x128xf32>
    %155 = vector.extract_strided_slice %138 {offsets = [0, 256], sizes = [8, 128], strides = [1, 1]} : vector<8x384xf32> to vector<8x128xf32>
    %156 = vector.extract_strided_slice %135 {offsets = [0, 256], sizes = [8, 128], strides = [1, 1]} : vector<8x384xf32> to vector<8x128xf32>
    %157 = vector.broadcast %11 : vector<1x128xf32> to vector<8x128xf32>
    %158 = arith.addf %156, %157 : vector<8x128xf32>
    %159 = arith.mulf %146, %158 : vector<8x128xf32>
    %160 = arith.addf %155, %159 : vector<8x128xf32>
    %161 = math.tanh %160 : vector<8x128xf32>
    %cst_65 = arith.constant 1.000000e+00 : f32
    %162 = vector.broadcast %cst_65 : f32 to vector<8x128xf32>
    %163 = arith.subf %162, %154 : vector<8x128xf32>
    %164 = arith.mulf %163, %161 : vector<8x128xf32>
    %165 = arith.mulf %154, %132 : vector<8x128xf32>
    %166 = arith.addf %164, %165 : vector<8x128xf32>
    %c0_66 = arith.constant 0 : index
    %c0_67 = arith.constant 0 : index
    %167 = vector.load %arg11[%c0_66, %c0_67] : memref<8x128xf32, #tpu.memory_space<vmem>>, vector<8x128xf32>
    tpu.vector_store %arg11[%c0_66, %c0_67], %166 {strides = array<i32>} : memref<8x128xf32, #tpu.memory_space<vmem>>, vector<8x128xf32>,
    %168 = arith.index_cast %c3_i32 : i32 to index
    %c0_68 = arith.constant 0 : index
    %c0_69 = arith.constant 0 : index
    %169 = vector.load %arg10[%168, %c0_68, %c0_69] : memref<8x8x128xf32, #tpu.memory_space<vmem>>, vector<1x8x128xf32>
    %170 = vector.shape_cast %169 : vector<1x8x128xf32> to vector<8x128xf32>
    %171 = vector.shape_cast %166 : vector<8x128xf32> to vector<1x8x128xf32>
    tpu.vector_store %arg10[%168, %c0_68, %c0_69], %171 {strides = array<i32>} : memref<8x8x128xf32, #tpu.memory_space<vmem>>, vector<1x8x128xf32>,
    %c4_i32 = arith.constant 4 : i32
    %c0_70 = arith.constant 0 : index
    %c0_71 = arith.constant 0 : index
    %172 = vector.load %arg11[%c0_70, %c0_71] : memref<8x128xf32, #tpu.memory_space<vmem>>, vector<8x128xf32>
    %173 = arith.truncf %172 : vector<8x128xf32> to vector<8x128xbf16>
    %c0_72 = arith.constant 0 : index
    %c0_73 = arith.constant 0 : index
    %174 = vector.load %arg3[%c0_72, %c0_73] : memref<128x384xbf16, #tpu.memory_space<vmem>>, vector<128x384xbf16>
    %cst_74 = arith.constant dense<0.000000e+00> : vector<8x384xf32>
    %175 = tpu.matmul %173, %174, %cst_74 {dimension_numbers = #tpu.dot_dimension_numbers<[1], [0], [0], [1], [0, 0, 1, 1], [], []>} : vector<8x128xbf16>, vector<128x384xbf16>, vector<8x384xf32> -> vector<8x384xf32>
    %176 = arith.index_cast %c4_i32 : i32 to index
    %c0_75 = arith.constant 0 : index
    %c0_76 = arith.constant 0 : index
    %177 = vector.load %arg9[%176, %c0_75, %c0_76] : memref<8x8x384xf32, #tpu.memory_space<vmem>>, vector<1x8x384xf32>
    %178 = vector.shape_cast %177 : vector<1x8x384xf32> to vector<8x384xf32>
    %179 = vector.extract_strided_slice %178 {offsets = [0, 0], sizes = [8, 128], strides = [1, 1]} : vector<8x384xf32> to vector<8x128xf32>
    %180 = vector.extract_strided_slice %175 {offsets = [0, 0], sizes = [8, 128], strides = [1, 1]} : vector<8x384xf32> to vector<8x128xf32>
    %181 = arith.addf %179, %180 : vector<8x128xf32>
    %182 = arith.negf %181 : vector<8x128xf32>
    %183 = math.exp %182 : vector<8x128xf32>
    %cst_77 = arith.constant 1.000000e+00 : f32
    %184 = vector.broadcast %cst_77 : f32 to vector<8x128xf32>
    %185 = arith.addf %184, %183 : vector<8x128xf32>
    %186 = arith.divf %184, %185 : vector<8x128xf32>
    %187 = vector.extract_strided_slice %178 {offsets = [0, 128], sizes = [8, 128], strides = [1, 1]} : vector<8x384xf32> to vector<8x128xf32>
    %188 = vector.extract_strided_slice %175 {offsets = [0, 128], sizes = [8, 128], strides = [1, 1]} : vector<8x384xf32> to vector<8x128xf32>
    %189 = arith.addf %187, %188 : vector<8x128xf32>
    %190 = arith.negf %189 : vector<8x128xf32>
    %191 = math.exp %190 : vector<8x128xf32>
    %cst_78 = arith.constant 1.000000e+00 : f32
    %192 = vector.broadcast %cst_78 : f32 to vector<8x128xf32>
    %193 = arith.addf %192, %191 : vector<8x128xf32>
    %194 = arith.divf %192, %193 : vector<8x128xf32>
    %195 = vector.extract_strided_slice %178 {offsets = [0, 256], sizes = [8, 128], strides = [1, 1]} : vector<8x384xf32> to vector<8x128xf32>
    %196 = vector.extract_strided_slice %175 {offsets = [0, 256], sizes = [8, 128], strides = [1, 1]} : vector<8x384xf32> to vector<8x128xf32>
    %197 = vector.broadcast %11 : vector<1x128xf32> to vector<8x128xf32>
    %198 = arith.addf %196, %197 : vector<8x128xf32>
    %199 = arith.mulf %186, %198 : vector<8x128xf32>
    %200 = arith.addf %195, %199 : vector<8x128xf32>
    %201 = math.tanh %200 : vector<8x128xf32>
    %cst_79 = arith.constant 1.000000e+00 : f32
    %202 = vector.broadcast %cst_79 : f32 to vector<8x128xf32>
    %203 = arith.subf %202, %194 : vector<8x128xf32>
    %204 = arith.mulf %203, %201 : vector<8x128xf32>
    %205 = arith.mulf %194, %172 : vector<8x128xf32>
    %206 = arith.addf %204, %205 : vector<8x128xf32>
    %c0_80 = arith.constant 0 : index
    %c0_81 = arith.constant 0 : index
    %207 = vector.load %arg11[%c0_80, %c0_81] : memref<8x128xf32, #tpu.memory_space<vmem>>, vector<8x128xf32>
    tpu.vector_store %arg11[%c0_80, %c0_81], %206 {strides = array<i32>} : memref<8x128xf32, #tpu.memory_space<vmem>>, vector<8x128xf32>,
    %208 = arith.index_cast %c4_i32 : i32 to index
    %c0_82 = arith.constant 0 : index
    %c0_83 = arith.constant 0 : index
    %209 = vector.load %arg10[%208, %c0_82, %c0_83] : memref<8x8x128xf32, #tpu.memory_space<vmem>>, vector<1x8x128xf32>
    %210 = vector.shape_cast %209 : vector<1x8x128xf32> to vector<8x128xf32>
    %211 = vector.shape_cast %206 : vector<8x128xf32> to vector<1x8x128xf32>
    tpu.vector_store %arg10[%208, %c0_82, %c0_83], %211 {strides = array<i32>} : memref<8x8x128xf32, #tpu.memory_space<vmem>>, vector<1x8x128xf32>,
    %c5_i32 = arith.constant 5 : i32
    %c0_84 = arith.constant 0 : index
    %c0_85 = arith.constant 0 : index
    %212 = vector.load %arg11[%c0_84, %c0_85] : memref<8x128xf32, #tpu.memory_space<vmem>>, vector<8x128xf32>
    %213 = arith.truncf %212 : vector<8x128xf32> to vector<8x128xbf16>
    %c0_86 = arith.constant 0 : index
    %c0_87 = arith.constant 0 : index
    %214 = vector.load %arg3[%c0_86, %c0_87] : memref<128x384xbf16, #tpu.memory_space<vmem>>, vector<128x384xbf16>
    %cst_88 = arith.constant dense<0.000000e+00> : vector<8x384xf32>
    %215 = tpu.matmul %213, %214, %cst_88 {dimension_numbers = #tpu.dot_dimension_numbers<[1], [0], [0], [1], [0, 0, 1, 1], [], []>} : vector<8x128xbf16>, vector<128x384xbf16>, vector<8x384xf32> -> vector<8x384xf32>
    %216 = arith.index_cast %c5_i32 : i32 to index
    %c0_89 = arith.constant 0 : index
    %c0_90 = arith.constant 0 : index
    %217 = vector.load %arg9[%216, %c0_89, %c0_90] : memref<8x8x384xf32, #tpu.memory_space<vmem>>, vector<1x8x384xf32>
    %218 = vector.shape_cast %217 : vector<1x8x384xf32> to vector<8x384xf32>
    %219 = vector.extract_strided_slice %218 {offsets = [0, 0], sizes = [8, 128], strides = [1, 1]} : vector<8x384xf32> to vector<8x128xf32>
    %220 = vector.extract_strided_slice %215 {offsets = [0, 0], sizes = [8, 128], strides = [1, 1]} : vector<8x384xf32> to vector<8x128xf32>
    %221 = arith.addf %219, %220 : vector<8x128xf32>
    %222 = arith.negf %221 : vector<8x128xf32>
    %223 = math.exp %222 : vector<8x128xf32>
    %cst_91 = arith.constant 1.000000e+00 : f32
    %224 = vector.broadcast %cst_91 : f32 to vector<8x128xf32>
    %225 = arith.addf %224, %223 : vector<8x128xf32>
    %226 = arith.divf %224, %225 : vector<8x128xf32>
    %227 = vector.extract_strided_slice %218 {offsets = [0, 128], sizes = [8, 128], strides = [1, 1]} : vector<8x384xf32> to vector<8x128xf32>
    %228 = vector.extract_strided_slice %215 {offsets = [0, 128], sizes = [8, 128], strides = [1, 1]} : vector<8x384xf32> to vector<8x128xf32>
    %229 = arith.addf %227, %228 : vector<8x128xf32>
    %230 = arith.negf %229 : vector<8x128xf32>
    %231 = math.exp %230 : vector<8x128xf32>
    %cst_92 = arith.constant 1.000000e+00 : f32
    %232 = vector.broadcast %cst_92 : f32 to vector<8x128xf32>
    %233 = arith.addf %232, %231 : vector<8x128xf32>
    %234 = arith.divf %232, %233 : vector<8x128xf32>
    %235 = vector.extract_strided_slice %218 {offsets = [0, 256], sizes = [8, 128], strides = [1, 1]} : vector<8x384xf32> to vector<8x128xf32>
    %236 = vector.extract_strided_slice %215 {offsets = [0, 256], sizes = [8, 128], strides = [1, 1]} : vector<8x384xf32> to vector<8x128xf32>
    %237 = vector.broadcast %11 : vector<1x128xf32> to vector<8x128xf32>
    %238 = arith.addf %236, %237 : vector<8x128xf32>
    %239 = arith.mulf %226, %238 : vector<8x128xf32>
    %240 = arith.addf %235, %239 : vector<8x128xf32>
    %241 = math.tanh %240 : vector<8x128xf32>
    %cst_93 = arith.constant 1.000000e+00 : f32
    %242 = vector.broadcast %cst_93 : f32 to vector<8x128xf32>
    %243 = arith.subf %242, %234 : vector<8x128xf32>
    %244 = arith.mulf %243, %241 : vector<8x128xf32>
    %245 = arith.mulf %234, %212 : vector<8x128xf32>
    %246 = arith.addf %244, %245 : vector<8x128xf32>
    %c0_94 = arith.constant 0 : index
    %c0_95 = arith.constant 0 : index
    %247 = vector.load %arg11[%c0_94, %c0_95] : memref<8x128xf32, #tpu.memory_space<vmem>>, vector<8x128xf32>
    tpu.vector_store %arg11[%c0_94, %c0_95], %246 {strides = array<i32>} : memref<8x128xf32, #tpu.memory_space<vmem>>, vector<8x128xf32>,
    %248 = arith.index_cast %c5_i32 : i32 to index
    %c0_96 = arith.constant 0 : index
    %c0_97 = arith.constant 0 : index
    %249 = vector.load %arg10[%248, %c0_96, %c0_97] : memref<8x8x128xf32, #tpu.memory_space<vmem>>, vector<1x8x128xf32>
    %250 = vector.shape_cast %249 : vector<1x8x128xf32> to vector<8x128xf32>
    %251 = vector.shape_cast %246 : vector<8x128xf32> to vector<1x8x128xf32>
    tpu.vector_store %arg10[%248, %c0_96, %c0_97], %251 {strides = array<i32>} : memref<8x8x128xf32, #tpu.memory_space<vmem>>, vector<1x8x128xf32>,
    %c6_i32 = arith.constant 6 : i32
    %c0_98 = arith.constant 0 : index
    %c0_99 = arith.constant 0 : index
    %252 = vector.load %arg11[%c0_98, %c0_99] : memref<8x128xf32, #tpu.memory_space<vmem>>, vector<8x128xf32>
    %253 = arith.truncf %252 : vector<8x128xf32> to vector<8x128xbf16>
    %c0_100 = arith.constant 0 : index
    %c0_101 = arith.constant 0 : index
    %254 = vector.load %arg3[%c0_100, %c0_101] : memref<128x384xbf16, #tpu.memory_space<vmem>>, vector<128x384xbf16>
    %cst_102 = arith.constant dense<0.000000e+00> : vector<8x384xf32>
    %255 = tpu.matmul %253, %254, %cst_102 {dimension_numbers = #tpu.dot_dimension_numbers<[1], [0], [0], [1], [0, 0, 1, 1], [], []>} : vector<8x128xbf16>, vector<128x384xbf16>, vector<8x384xf32> -> vector<8x384xf32>
    %256 = arith.index_cast %c6_i32 : i32 to index
    %c0_103 = arith.constant 0 : index
    %c0_104 = arith.constant 0 : index
    %257 = vector.load %arg9[%256, %c0_103, %c0_104] : memref<8x8x384xf32, #tpu.memory_space<vmem>>, vector<1x8x384xf32>
    %258 = vector.shape_cast %257 : vector<1x8x384xf32> to vector<8x384xf32>
    %259 = vector.extract_strided_slice %258 {offsets = [0, 0], sizes = [8, 128], strides = [1, 1]} : vector<8x384xf32> to vector<8x128xf32>
    %260 = vector.extract_strided_slice %255 {offsets = [0, 0], sizes = [8, 128], strides = [1, 1]} : vector<8x384xf32> to vector<8x128xf32>
    %261 = arith.addf %259, %260 : vector<8x128xf32>
    %262 = arith.negf %261 : vector<8x128xf32>
    %263 = math.exp %262 : vector<8x128xf32>
    %cst_105 = arith.constant 1.000000e+00 : f32
    %264 = vector.broadcast %cst_105 : f32 to vector<8x128xf32>
    %265 = arith.addf %264, %263 : vector<8x128xf32>
    %266 = arith.divf %264, %265 : vector<8x128xf32>
    %267 = vector.extract_strided_slice %258 {offsets = [0, 128], sizes = [8, 128], strides = [1, 1]} : vector<8x384xf32> to vector<8x128xf32>
    %268 = vector.extract_strided_slice %255 {offsets = [0, 128], sizes = [8, 128], strides = [1, 1]} : vector<8x384xf32> to vector<8x128xf32>
    %269 = arith.addf %267, %268 : vector<8x128xf32>
    %270 = arith.negf %269 : vector<8x128xf32>
    %271 = math.exp %270 : vector<8x128xf32>
    %cst_106 = arith.constant 1.000000e+00 : f32
    %272 = vector.broadcast %cst_106 : f32 to vector<8x128xf32>
    %273 = arith.addf %272, %271 : vector<8x128xf32>
    %274 = arith.divf %272, %273 : vector<8x128xf32>
    %275 = vector.extract_strided_slice %258 {offsets = [0, 256], sizes = [8, 128], strides = [1, 1]} : vector<8x384xf32> to vector<8x128xf32>
    %276 = vector.extract_strided_slice %255 {offsets = [0, 256], sizes = [8, 128], strides = [1, 1]} : vector<8x384xf32> to vector<8x128xf32>
    %277 = vector.broadcast %11 : vector<1x128xf32> to vector<8x128xf32>
    %278 = arith.addf %276, %277 : vector<8x128xf32>
    %279 = arith.mulf %266, %278 : vector<8x128xf32>
    %280 = arith.addf %275, %279 : vector<8x128xf32>
    %281 = math.tanh %280 : vector<8x128xf32>
    %cst_107 = arith.constant 1.000000e+00 : f32
    %282 = vector.broadcast %cst_107 : f32 to vector<8x128xf32>
    %283 = arith.subf %282, %274 : vector<8x128xf32>
    %284 = arith.mulf %283, %281 : vector<8x128xf32>
    %285 = arith.mulf %274, %252 : vector<8x128xf32>
    %286 = arith.addf %284, %285 : vector<8x128xf32>
    %c0_108 = arith.constant 0 : index
    %c0_109 = arith.constant 0 : index
    %287 = vector.load %arg11[%c0_108, %c0_109] : memref<8x128xf32, #tpu.memory_space<vmem>>, vector<8x128xf32>
    tpu.vector_store %arg11[%c0_108, %c0_109], %286 {strides = array<i32>} : memref<8x128xf32, #tpu.memory_space<vmem>>, vector<8x128xf32>,
    %288 = arith.index_cast %c6_i32 : i32 to index
    %c0_110 = arith.constant 0 : index
    %c0_111 = arith.constant 0 : index
    %289 = vector.load %arg10[%288, %c0_110, %c0_111] : memref<8x8x128xf32, #tpu.memory_space<vmem>>, vector<1x8x128xf32>
    %290 = vector.shape_cast %289 : vector<1x8x128xf32> to vector<8x128xf32>
    %291 = vector.shape_cast %286 : vector<8x128xf32> to vector<1x8x128xf32>
    tpu.vector_store %arg10[%288, %c0_110, %c0_111], %291 {strides = array<i32>} : memref<8x8x128xf32, #tpu.memory_space<vmem>>, vector<1x8x128xf32>,
    %c7_i32 = arith.constant 7 : i32
    %c0_112 = arith.constant 0 : index
    %c0_113 = arith.constant 0 : index
    %292 = vector.load %arg11[%c0_112, %c0_113] : memref<8x128xf32, #tpu.memory_space<vmem>>, vector<8x128xf32>
    %293 = arith.truncf %292 : vector<8x128xf32> to vector<8x128xbf16>
    %c0_114 = arith.constant 0 : index
    %c0_115 = arith.constant 0 : index
    %294 = vector.load %arg3[%c0_114, %c0_115] : memref<128x384xbf16, #tpu.memory_space<vmem>>, vector<128x384xbf16>
    %cst_116 = arith.constant dense<0.000000e+00> : vector<8x384xf32>
    %295 = tpu.matmul %293, %294, %cst_116 {dimension_numbers = #tpu.dot_dimension_numbers<[1], [0], [0], [1], [0, 0, 1, 1], [], []>} : vector<8x128xbf16>, vector<128x384xbf16>, vector<8x384xf32> -> vector<8x384xf32>
    %296 = arith.index_cast %c7_i32 : i32 to index
    %c0_117 = arith.constant 0 : index
    %c0_118 = arith.constant 0 : index
    %297 = vector.load %arg9[%296, %c0_117, %c0_118] : memref<8x8x384xf32, #tpu.memory_space<vmem>>, vector<1x8x384xf32>
    %298 = vector.shape_cast %297 : vector<1x8x384xf32> to vector<8x384xf32>
    %299 = vector.extract_strided_slice %298 {offsets = [0, 0], sizes = [8, 128], strides = [1, 1]} : vector<8x384xf32> to vector<8x128xf32>
    %300 = vector.extract_strided_slice %295 {offsets = [0, 0], sizes = [8, 128], strides = [1, 1]} : vector<8x384xf32> to vector<8x128xf32>
    %301 = arith.addf %299, %300 : vector<8x128xf32>
    %302 = arith.negf %301 : vector<8x128xf32>
    %303 = math.exp %302 : vector<8x128xf32>
    %cst_119 = arith.constant 1.000000e+00 : f32
    %304 = vector.broadcast %cst_119 : f32 to vector<8x128xf32>
    %305 = arith.addf %304, %303 : vector<8x128xf32>
    %306 = arith.divf %304, %305 : vector<8x128xf32>
    %307 = vector.extract_strided_slice %298 {offsets = [0, 128], sizes = [8, 128], strides = [1, 1]} : vector<8x384xf32> to vector<8x128xf32>
    %308 = vector.extract_strided_slice %295 {offsets = [0, 128], sizes = [8, 128], strides = [1, 1]} : vector<8x384xf32> to vector<8x128xf32>
    %309 = arith.addf %307, %308 : vector<8x128xf32>
    %310 = arith.negf %309 : vector<8x128xf32>
    %311 = math.exp %310 : vector<8x128xf32>
    %cst_120 = arith.constant 1.000000e+00 : f32
    %312 = vector.broadcast %cst_120 : f32 to vector<8x128xf32>
    %313 = arith.addf %312, %311 : vector<8x128xf32>
    %314 = arith.divf %312, %313 : vector<8x128xf32>
    %315 = vector.extract_strided_slice %298 {offsets = [0, 256], sizes = [8, 128], strides = [1, 1]} : vector<8x384xf32> to vector<8x128xf32>
    %316 = vector.extract_strided_slice %295 {offsets = [0, 256], sizes = [8, 128], strides = [1, 1]} : vector<8x384xf32> to vector<8x128xf32>
    %317 = vector.broadcast %11 : vector<1x128xf32> to vector<8x128xf32>
    %318 = arith.addf %316, %317 : vector<8x128xf32>
    %319 = arith.mulf %306, %318 : vector<8x128xf32>
    %320 = arith.addf %315, %319 : vector<8x128xf32>
    %321 = math.tanh %320 : vector<8x128xf32>
    %cst_121 = arith.constant 1.000000e+00 : f32
    %322 = vector.broadcast %cst_121 : f32 to vector<8x128xf32>
    %323 = arith.subf %322, %314 : vector<8x128xf32>
    %324 = arith.mulf %323, %321 : vector<8x128xf32>
    %325 = arith.mulf %314, %292 : vector<8x128xf32>
    %326 = arith.addf %324, %325 : vector<8x128xf32>
    %c0_122 = arith.constant 0 : index
    %c0_123 = arith.constant 0 : index
    %327 = vector.load %arg11[%c0_122, %c0_123] : memref<8x128xf32, #tpu.memory_space<vmem>>, vector<8x128xf32>
    tpu.vector_store %arg11[%c0_122, %c0_123], %326 {strides = array<i32>} : memref<8x128xf32, #tpu.memory_space<vmem>>, vector<8x128xf32>,
    %328 = arith.index_cast %c7_i32 : i32 to index
    %c0_124 = arith.constant 0 : index
    %c0_125 = arith.constant 0 : index
    %329 = vector.load %arg10[%328, %c0_124, %c0_125] : memref<8x8x128xf32, #tpu.memory_space<vmem>>, vector<1x8x128xf32>
    %330 = vector.shape_cast %329 : vector<1x8x128xf32> to vector<8x128xf32>
    %331 = vector.shape_cast %326 : vector<8x128xf32> to vector<1x8x128xf32>
    tpu.vector_store %arg10[%328, %c0_124, %c0_125], %331 {strides = array<i32>} : memref<8x8x128xf32, #tpu.memory_space<vmem>>, vector<1x8x128xf32>,
    %c8_i32 = arith.constant 8 : i32
    %c0_126 = arith.constant 0 : index
    %c0_127 = arith.constant 0 : index
    %c0_128 = arith.constant 0 : index
    %332 = vector.load %arg10[%c0_126, %c0_127, %c0_128] : memref<8x8x128xf32, #tpu.memory_space<vmem>>, vector<8x8x128xf32>
    %333 = vector.shape_cast %332 : vector<8x8x128xf32> to vector<64x128xf32>
    %334 = arith.truncf %333 : vector<64x128xf32> to vector<64x128xbf16>
    %c0_129 = arith.constant 0 : index
    %c0_130 = arith.constant 0 : index
    %335 = vector.load %arg6[%c0_129, %c0_130] : memref<128x128xbf16, #tpu.memory_space<vmem>>, vector<128x128xbf16>
    %cst_131 = arith.constant dense<0.000000e+00> : vector<64x128xf32>
    %336 = tpu.matmul %334, %335, %cst_131 {dimension_numbers = #tpu.dot_dimension_numbers<[1], [0], [0], [1], [0, 0, 1, 1], [], []>} : vector<64x128xbf16>, vector<128x128xbf16>, vector<64x128xf32> -> vector<64x128xf32>
    %c0_132 = arith.constant 0 : index
    %c0_133 = arith.constant 0 : index
    %337 = vector.load %arg7[%c0_132, %c0_133] : memref<1x128xf32, #tpu.memory_space<vmem>>, vector<1x128xf32>
    %338 = vector.broadcast %337 : vector<1x128xf32> to vector<64x128xf32>
    %339 = arith.addf %336, %338 : vector<64x128xf32>
    %340 = tpu.iota {dimensions = array<i32: 1>} : vector<64x128xi32>
    %c3_i32_134 = arith.constant 3 : i32
    %341 = vector.broadcast %c3_i32_134 : i32 to vector<64x128xi32>
    %342 = arith.cmpi sge, %340, %341 : vector<64x128xi32>
    %c6_i32_135 = arith.constant 6 : i32
    %343 = vector.broadcast %c6_i32_135 : i32 to vector<64x128xi32>
    %344 = arith.cmpi slt, %340, %343 : vector<64x128xi32>
    %345 = arith.andi %342, %344 : vector<64x128xi1>
    %cst_136 = arith.constant 0.000000e+00 : f32
    %346 = vector.broadcast %cst_136 : f32 to vector<64x128xf32>
    %347 = arith.maximumf %339, %346 : vector<64x128xf32>
    %348 = math.absf %339 : vector<64x128xf32>
    %cst_137 = arith.constant 0.000000e+00 : f32
    %349 = vector.broadcast %cst_137 : f32 to vector<64x128xf32>
    %350 = arith.subf %349, %348 : vector<64x128xf32>
    %351 = math.exp %350 : vector<64x128xf32>
    %352 = math.log1p %351 : vector<64x128xf32>
    %353 = arith.addf %347, %352 : vector<64x128xf32>
    %354 = arith.select %345, %353, %339 : vector<64x128xi1>, vector<64x128xf32>
    %c0_138 = arith.constant 0 : index
    %c0_139 = arith.constant 0 : index
    %355 = vector.load %arg8[%c0_138, %c0_139] : memref<64x128xf32, #tpu.memory_space<vmem>>, vector<64x128xf32>
    tpu.vector_store %arg8[%c0_138, %c0_139], %354 {strides = array<i32>} : memref<64x128xf32, #tpu.memory_space<vmem>>, vector<64x128xf32>,
    return
  }
  func.func @transform_0(%arg0: i32) -> (i32, i32, i32) {
    %c0_i32 = arith.constant 0 : i32
    %c0_i32_0 = arith.constant 0 : i32
    %c0_i32_1 = arith.constant 0 : i32
    %c0_i32_2 = arith.constant 0 : i32
    return %c0_i32, %c0_i32_0, %c0_i32_1 : i32, i32, i32
  }
  func.func @transform_1(%arg0: i32) -> (i32, i32) {
    %c0_i32 = arith.constant 0 : i32
    %c0_i32_0 = arith.constant 0 : i32
    %c0_i32_1 = arith.constant 0 : i32
    return %c0_i32, %c0_i32_0 : i32, i32
  }
  func.func @transform_2(%arg0: i32) -> (i32, i32) {
    %c0_i32 = arith.constant 0 : i32
    %c0_i32_0 = arith.constant 0 : i32
    %c0_i32_1 = arith.constant 0 : i32
    return %c0_i32, %c0_i32_0 : i32, i32
  }
  func.func @transform_3(%arg0: i32) -> (i32, i32) {
    %c0_i32 = arith.constant 0 : i32
    %c0_i32_0 = arith.constant 0 : i32
    %c0_i32_1 = arith.constant 0 : i32
    return %c0_i32, %c0_i32_0 : i32, i32
  }
  func.func @transform_4(%arg0: i32) -> (i32, i32) {
    %c0_i32 = arith.constant 0 : i32
    %c0_i32_0 = arith.constant 0 : i32
    %c0_i32_1 = arith.constant 0 : i32
    return %c0_i32, %c0_i32_0 : i32, i32
  }
  func.func @transform_5(%arg0: i32) -> (i32, i32) {
    %c0_i32 = arith.constant 0 : i32
    %c0_i32_0 = arith.constant 0 : i32
    %c0_i32_1 = arith.constant 0 : i32
    return %c0_i32, %c0_i32_0 : i32, i32
  }
  func.func @transform_6(%arg0: i32) -> (i32, i32) {
    %c0_i32 = arith.constant 0 : i32
    %c0_i32_0 = arith.constant 0 : i32
    %c0_i32_1 = arith.constant 0 : i32
    return %c0_i32, %c0_i32_0 : i32, i32
  }
  func.func @transform_7(%arg0: i32) -> (i32, i32) {
    %c0_i32 = arith.constant 0 : i32
    %c0_i32_0 = arith.constant 0 : i32
    %c0_i32_1 = arith.constant 0 : i32
    return %c0_i32, %c0_i32_0 : i32, i32
  }
}

</mosaic_0001>

<llo_original>
// kernel: tpu_custom_call.1
$region0: #{tpu_custom_call.1}
  #allocation0 [shape = 'u32[]', space=smem, size = 0x4, offset = 0x4, fixed_abs, tag = 'smem constant byte address 0x4 - core index']
  #allocation1 [shape = 'u32[144,128]{1,0:T(1,128)}', space=vmem, size = 0x12000, scoped, tag = 'internal scratch']
  #allocation2 [shape = 'f32[8,8,384]{2,1,0:T(8,128)}', space=vmem, size = 0x18000, scoped, tag = 'scratch operand']
  #allocation3 [shape = 'f32[8,8,128]{2,1,0:T(8,128)}', space=vmem, size = 0x8000, scoped, tag = 'scratch operand']
  #allocation4 [shape = 'f32[8,128]{1,0:T(8,128)}', space=vmem, size = 0x1000, scoped, tag = 'scratch operand']
  %s0 = inlined_call_operand.vmem [shape: bf16[8,8,2], index: 0, kind: input, shape index: {}]
  %s1 = inlined_call_operand.vmem [shape: bf16[2,384], index: 1, kind: input, shape index: {}]
  %s2 = inlined_call_operand.hbm [shape: bf16[128,384], index: 2, kind: input, shape index: {}]
  %s3 = inlined_call_operand.vmem [shape: f32[1,384], index: 3, kind: input, shape index: {}]
  %s4 = inlined_call_operand.vmem [shape: f32[1,128], index: 4, kind: input, shape index: {}]
  %s5 = inlined_call_operand.hbm [shape: bf16[128,128], index: 5, kind: input, shape index: {}]
  %s6 = inlined_call_operand.vmem [shape: f32[1,128], index: 6, kind: input, shape index: {}]
  %s7 = inlined_call_operand.hbm [shape: f32[64,128], index: 7, kind: output, shape index: {}]
  %s8 = sld [smem:[#allocation0]]
  $region46: #{tpu_custom_call.1} parent=0
    _
  %s10 = ssub.s32 1, %s8
  %s11 = scalar_select 0, %s10, %s8
  $region1: #{tpu_custom_call.1} parent=0
    #allocation5 [shape = 'u8[98304]{0}', space=vmem, size = 0x18000, scoped, tag = 'input window, operand 2, single buffered']
    #allocation6 [shape = 's32[1]{0}', space=sflag, size = 0x4, scoped, tag = 'scoped memory for tpu_custom_call.1']
    #allocation7 [shape = 's32[1]{0}', space=sflag, size = 0x4, scoped, tag = 'scoped memory for tpu_custom_call.1']
    #allocation8 [shape = 'u8[32768]{0}', space=vmem, size = 0x8000, scoped, tag = 'input window, operand 5, single buffered']
    #allocation9 [shape = 's32[1]{0}', space=sflag, size = 0x4, scoped, tag = 'scoped memory for tpu_custom_call.1']
    #allocation10 [shape = 'u8[32768]{0}', space=vmem, size = 0x8000, scoped, tag = 'output window, operand 0, single buffered']
    %12 = vsyncpa [#allocation6], 0
    %13 = vsyncpa [#allocation9], 0
    %14 = vsyncpa [#allocation7], 0
    // Predicated region
    $region2: #{tpu_custom_call.1} parent=1 // pred_check
      _
    $region3: #{tpu_custom_call.1} parent=1 // pred_check_branch
      %16 = sbr.rel (0) target = $region5
    $region4: #{tpu_custom_call.1} parent=1 // pred_region
      _
    $region5: #{tpu_custom_call.1} parent=1 // pred_fallthru
      _
    // Predicated region
    $region6: #{tpu_custom_call.1} parent=1 // pred_check
      _
    $region7: #{tpu_custom_call.1} parent=1 // pred_check_branch
      %18 = sbr.rel (0) target = $region9
    $region8: #{tpu_custom_call.1} parent=1 // pred_region
      _
    $region9: #{tpu_custom_call.1} parent=1 // pred_fallthru
      _
    // Predicated region
    $region10: #{tpu_custom_call.1} parent=1 // pred_check
      _
    $region11: #{tpu_custom_call.1} parent=1 // pred_check_branch
      %20 = sbr.rel (0) target = $region13
    $region12: #{tpu_custom_call.1} parent=1 // pred_region
      %s22 = ssub.s32 3072, 3072
      %23 = vsyncadd [#allocation6], %s22
      %s24 = sshll.u32 [#allocation5], 4
      %s25 = int_to_ptr.vmem [resolvable:$true] %s24
      %30 = dma.hbm_to_vmem [thread:$0]  %s2, 3072, %s25, [#allocation6], 192, 192, 12
    $region13: #{tpu_custom_call.1} parent=1 // pred_fallthru
      _
    // Predicated region
    $region14: #{tpu_custom_call.1} parent=1 // pred_check
      _
    $region15: #{tpu_custom_call.1} parent=1 // pred_check_branch
      %32 = sbr.rel (0) target = $region17
    $region16: #{tpu_custom_call.1} parent=1 // pred_region
      _
    $region17: #{tpu_custom_call.1} parent=1 // pred_fallthru
      _
    // Predicated region
    $region18: #{tpu_custom_call.1} parent=1 // pred_check
      _
    $region19: #{tpu_custom_call.1} parent=1 // pred_check_branch
      %34 = sbr.rel (0) target = $region21
    $region20: #{tpu_custom_call.1} parent=1 // pred_region
      _
    $region21: #{tpu_custom_call.1} parent=1 // pred_fallthru
      _
    // Predicated region
    $region22: #{tpu_custom_call.1} parent=1 // pred_check
      _
    $region23: #{tpu_custom_call.1} parent=1 // pred_check_branch
      %36 = sbr.rel (0) target = $region25
    $region24: #{tpu_custom_call.1} parent=1 // pred_region
      %s38 = ssub.s32 1024, 1024
      %39 = vsyncadd [#allocation9], %s38
      %s40 = sshll.u32 [#allocation8], 4
      %s41 = int_to_ptr.vmem [resolvable:$true] %s40
      %46 = dma.hbm_to_vmem [thread:$0]  %s5, 1024, %s41, [#allocation9], 64, 64, 4
    $region25: #{tpu_custom_call.1} parent=1 // pred_fallthru
      _
    // Predicated region
    $region26: #{tpu_custom_call.1} parent=1 // pred_check
      _
    $region27: #{tpu_custom_call.1} parent=1 // pred_check_branch
      %48 = sbr.rel (0) target = $region29
    $region28: #{tpu_custom_call.1} parent=1 // pred_region
      _
    $region29: #{tpu_custom_call.1} parent=1 // pred_fallthru
      _
    // Predicated region
    $region30: #{tpu_custom_call.1} parent=1 // pred_check
      _
    $region31: #{tpu_custom_call.1} parent=1 // pred_check_branch
      %50 = sbr.rel (0) target = $region33
    $region32: #{tpu_custom_call.1} parent=1 // pred_region
      %51 = dma.done [#allocation6], 3072
    $region33: #{tpu_custom_call.1} parent=1 // pred_fallthru
      _
    // Predicated region
    $region34: #{tpu_custom_call.1} parent=1 // pred_check
      _
    $region35: #{tpu_custom_call.1} parent=1 // pred_check_branch
      %53 = sbr.rel (0) target = $region37
    $region36: #{tpu_custom_call.1} parent=1 // pred_region
      %54 = dma.done [#allocation9], 1024
    $region37: #{tpu_custom_call.1} parent=1 // pred_fallthru
      _
    %v56 = vld [vmem:[%s0] sm:$0xf]
    %v57 = vld [vmem:[%s0 + $0x4] sm:$0xf]
    %v58 = vld [vmem:[%s0 + $0x8] sm:$0xf]
    %v59 = vld [vmem:[%s0 + $0xc] sm:$0xf]
    %v60 = vld [vmem:[%s0 + $0x10] sm:$0xf]
    %v61 = vld [vmem:[%s0 + $0x14] sm:$0xf]
    %v62 = vld [vmem:[%s0 + $0x18] sm:$0xf]
    %v63 = vld [vmem:[%s0 + $0x1c] sm:$0xf]
    %v64 = vld [vmem:[%s1] sm:$0x7]
    %v65 = vld [vmem:[%s3] sm:$0x7]
    %v67 = vlaneseq
    %v68 = vshrl.u32 %v67, 7
    %v69 = vsub.s32 0, %v68
    %v70 = vrot.slane %v65, %v69
    %v71 = vlaneseq
    %v72 = vshrl.u32 %v71, 7
    %v73 = vsub.s32 1, %v72
    %v74 = vrot.slane %v65, %v73
    %v75 = vlaneseq
    %v76 = vshrl.u32 %v75, 7
    %v77 = vsub.s32 2, %v76
    %v78 = vrot.slane %v65, %v77
    %v90 = vunpack.c.l.b16 %v56
    %v91 = vunpack.c.l.b16 %v57
    %v92 = vunpack.c.l.b16 %v58
    %v93 = vunpack.c.l.b16 %v59
    %v94 = vunpack.c.l.b16 %v60
    %v95 = vunpack.c.l.b16 %v61
    %v96 = vunpack.c.l.b16 %v62
    %v97 = vunpack.c.l.b16 %v63
    %v98 = vpack.c.b16 %v91, %v90
    %v99 = vpack.c.b16 %v93, %v92
    %v100 = vpack.c.b16 %v95, %v94
    %v101 = vpack.c.b16 %v97, %v96
    %v104 = vunpack.c.l.s4 1966171168
    %v105 = vunpack.c.0.s8 %v104
    %v106 = vlaneseq
    %v107 = vshrl.u32 %v106, 7
    %v108 = vsub.s32 %v105, %v107
    %v109 = vrot.slane %v64, %v108
    %v110 = vcombine.high %v109, %v109
    %v112 = vunpack.c.l.s4 1966171168
    %v113 = vunpack.c.0.s8 %v112
    %v114 = vlaneseq
    %v115 = vshrl.u32 %v114, 7
    %v116 = vsub.s32 %v113, %v115
    %v117 = vrot.slane %v109, %v116
    %v119 = vunpack.c.l.s4 1966171168
    %v120 = vunpack.c.0.s8 %v119
    %v121 = vlaneseq
    %v122 = vshrl.u32 %v121, 7
    %v123 = vsub.s32 %v120, %v122
    %v124 = vrot.slane %v110, %v123
    %v125 = vcombine.high %v117, %v117
    %vm126 = vcmask 15360
    %v128 = vsel %vm126, %v98, 0
    %v131 = vsel %vm126, %v99, 0
    %v134 = vsel %vm126, %v100, 0
    %v137 = vsel %vm126, %v101, 0
    %vm139 = vcmask 1040384
    %v141 = vsel %vm139, %v117, 0
    %v144 = vsel %vm139, %v124, 0
    %v147 = vsel %vm139, %v125, 0
    %149 = vmatprep.subr.bf16.mxu0 0
    %150 = vmatpush1.bf16.msra.mxu0 0
    %151 = vmatprep.subr.bf16.mxu0 0
    %152 = vmatpush1.bf16.msra.mxu0 0
    %153 = vmatprep.subr.bf16.mxu0 0
    %154 = vmatpush1.bf16.msra.mxu0 0
    %155 = vmatprep.subr.bf16.mxu0 0
    %156 = vmatpush1.bf16.msra.mxu0 0
    %157 = vmatprep.subr.bf16.mxu0 0
    %158 = vmatpush1.bf16.msra.mxu0 0
    %159 = vmatprep.subr.bf16.mxu0 0
    %160 = vmatpush1.bf16.msra.mxu0 0
    %161 = vmatprep.subr.bf16.mxu0 0
    %162 = vmatpush1.bf16.msra.mxu0 0
    %163 = vmatprep.subr.bf16.mxu0 %v144
    %164 = vmatpush1.bf16.msra.mxu0 %v141
    %165 = vmatprep.subr.bf16.mxu0 0
    %166 = vmatpush2.bf16.msra.mxu0 0
    %167 = vmatprep.subr.bf16.mxu0 0
    %168 = vmatpush2.bf16.msra.mxu0 0
    %169 = vmatprep.subr.bf16.mxu0 0
    %170 = vmatpush2.bf16.msra.mxu0 0
    %171 = vmatprep.subr.bf16.mxu0 0
    %172 = vmatpush2.bf16.msra.mxu0 0
    %173 = vmatprep.subr.bf16.mxu0 0
    %174 = vmatpush2.bf16.msra.mxu0 0
    %175 = vmatprep.subr.bf16.mxu0 0
    %176 = vmatpush2.bf16.msra.mxu0 0
    %177 = vmatprep.subr.bf16.mxu0 0
    %178 = vmatpush2.bf16.msra.mxu0 0
    %179 = vmatprep.subr.bf16.mxu0 0
    %180 = vmatpush2.bf16.msra.mxu0 0
    %181 = vmatprep.mubr.bf16.mxu0 0
    %182 = vmatmul.mubr.bf16.gmra.mxu0 %v128
    %v183 = vpop.f32.mrf.mxu0
    %v184 = vadd.f32 %v70, %v183
    %v185 = vpop.f32.mrf.mxu0
    %v186 = vadd.f32 %v74, %v185
    %v187 = vpop.f32.mrf.mxu0
    %v188 = vadd.f32 %v70, %v187
    %v189 = vpop.f32.mrf.mxu0
    %v190 = vadd.f32 %v74, %v189
    %191 = vmatprep.mubr.bf16.mxu0 0
    %192 = vmatmul.mubr.bf16.gmra.mxu0 %v131
    %v193 = vpop.f32.mrf.mxu0
    %v194 = vadd.f32 %v70, %v193
    %v195 = vpop.f32.mrf.mxu0
    %v196 = vadd.f32 %v74, %v195
    %v197 = vpop.f32.mrf.mxu0
    %v198 = vadd.f32 %v70, %v197
    %v199 = vpop.f32.mrf.mxu0
    %v200 = vadd.f32 %v74, %v199
    %201 = vmatprep.mubr.bf16.mxu0 0
    %202 = vmatmul.mubr.bf16.gmra.mxu0 %v134
    %v203 = vpop.f32.mrf.mxu0
    %v204 = vadd.f32 %v70, %v203
    %v205 = vpop.f32.mrf.mxu0
    %v206 = vadd.f32 %v74, %v205
    %v207 = vpop.f32.mrf.mxu0
    %v208 = vadd.f32 %v70, %v207
    %v209 = vpop.f32.mrf.mxu0
    %v210 = vadd.f32 %v74, %v209
    %211 = vmatprep.mubr.bf16.mxu0 0
    %212 = vmatmul.mubr.bf16.gmra.mxu0 %v137
    %v213 = vpop.f32.mrf.mxu0
    %v214 = vadd.f32 %v70, %v213
    %v215 = vpop.f32.mrf.mxu0
    %v216 = vadd.f32 %v74, %v215
    %v217 = vpop.f32.mrf.mxu0
    %v218 = vadd.f32 %v70, %v217
    %v219 = vpop.f32.mrf.mxu0
    %v220 = vadd.f32 %v74, %v219
    %221 = vdwg.mxu0
    %222 = vmatprep.subr.bf16.mxu0 0
    %223 = vmatpush1.bf16.msra.mxu0 0
    %224 = vmatprep.subr.bf16.mxu0 0
    %225 = vmatpush1.bf16.msra.mxu0 0
    %226 = vmatprep.subr.bf16.mxu0 0
    %227 = vmatpush1.bf16.msra.mxu0 0
    %228 = vmatprep.subr.bf16.mxu0 0
    %229 = vmatpush1.bf16.msra.mxu0 0
    %230 = vmatprep.subr.bf16.mxu0 0
    %231 = vmatpush1.bf16.msra.mxu0 0
    %232 = vmatprep.subr.bf16.mxu0 0
    %233 = vmatpush1.bf16.msra.mxu0 0
    %234 = vmatprep.subr.bf16.mxu0 0
    %235 = vmatpush1.bf16.msra.mxu0 0
    %236 = vmatprep.subr.bf16.mxu0 0
    %237 = vmatpush1.bf16.msra.mxu0 %v147
    %238 = vmatprep.subr.bf16.mxu0 0
    %239 = vmatpush2.bf16.msra.mxu0 0
    %240 = vmatprep.subr.bf16.mxu0 0
    %241 = vmatpush2.bf16.msra.mxu0 0
    %242 = vmatprep.subr.bf16.mxu0 0
    %243 = vmatpush2.bf16.msra.mxu0 0
    %244 = vmatprep.subr.bf16.mxu0 0
    %245 = vmatpush2.bf16.msra.mxu0 0
    %246 = vmatprep.subr.bf16.mxu0 0
    %247 = vmatpush2.bf16.msra.mxu0 0
    %248 = vmatprep.subr.bf16.mxu0 0
    %249 = vmatpush2.bf16.msra.mxu0 0
    %250 = vmatprep.subr.bf16.mxu0 0
    %251 = vmatpush2.bf16.msra.mxu0 0
    %252 = vmatprep.subr.bf16.mxu0 0
    %253 = vmatpush2.bf16.msra.mxu0 0
    %254 = vmatprep.mubr.bf16.mxu0 0
    %255 = vmatmul.mubr.bf16.gmra.mxu0 %v128
    %v256 = vpop.f32.mrf.mxu0
    %v257 = vadd.f32 %v78, %v256
    %v258 = vpop.f32.mrf.mxu0
    %v259 = vpop.f32.mrf.mxu0
    %v260 = vadd.f32 %v78, %v259
    %v261 = vpop.f32.mrf.mxu0
    %262 = vmatprep.mubr.bf16.mxu0 0
    %263 = vmatmul.mubr.bf16.gmra.mxu0 %v131
    %v264 = vpop.f32.mrf.mxu0
    %v265 = vadd.f32 %v78, %v264
    %v266 = vpop.f32.mrf.mxu0
    %v267 = vpop.f32.mrf.mxu0
    %v268 = vadd.f32 %v78, %v267
    %v269 = vpop.f32.mrf.mxu0
    %270 = vmatprep.mubr.bf16.mxu0 0
    %271 = vmatmul.mubr.bf16.gmra.mxu0 %v134
    %v272 = vpop.f32.mrf.mxu0
    %v273 = vadd.f32 %v78, %v272
    %v274 = vpop.f32.mrf.mxu0
    %v275 = vpop.f32.mrf.mxu0
    %v276 = vadd.f32 %v78, %v275
    %v277 = vpop.f32.mrf.mxu0
    %278 = vmatprep.mubr.bf16.mxu0 0
    %279 = vmatmul.mubr.bf16.gmra.mxu0 %v137
    %v280 = vpop.f32.mrf.mxu0
    %v281 = vadd.f32 %v78, %v280
    %v282 = vpop.f32.mrf.mxu0
    %v283 = vpop.f32.mrf.mxu0
    %v284 = vadd.f32 %v78, %v283
    %v285 = vpop.f32.mrf.mxu0
    %286 = vdwg.mxu0
    %287 = vst [vmem:[#allocation2] sm:$0xff] %v184
    %288 = vst [vmem:[#allocation2 + $0x8] sm:$0xff] %v186
    %289 = vst [vmem:[#allocation2 + $0x10] sm:$0xff] %v257
    %290 = vst [vmem:[#allocation2 + $0x18] sm:$0xff] %v188
    %291 = vst [vmem:[#allocation2 + $0x20] sm:$0xff] %v190
    %292 = vst [vmem:[#allocation2 + $0x28] sm:$0xff] %v260
    %293 = vst [vmem:[#allocation2 + $0x30] sm:$0xff] %v194
    %294 = vst [vmem:[#allocation2 + $0x38] sm:$0xff] %v196
    %295 = vst [vmem:[#allocation2 + $0x40] sm:$0xff] %v265
    %296 = vst [vmem:[#allocation2 + $0x48] sm:$0xff] %v198
    %297 = vst [vmem:[#allocation2 + $0x50] sm:$0xff] %v200
    %298 = vst [vmem:[#allocation2 + $0x58] sm:$0xff] %v268
    %299 = vst [vmem:[#allocation2 + $0x60] sm:$0xff] %v204
    %300 = vst [vmem:[#allocation2 + $0x68] sm:$0xff] %v206
    %301 = vst [vmem:[#allocation2 + $0x70] sm:$0xff] %v273
    %302 = vst [vmem:[#allocation2 + $0x78] sm:$0xff] %v208
    %303 = vst [vmem:[#allocation2 + $0x80] sm:$0xff] %v210
    %304 = vst [vmem:[#allocation2 + $0x88] sm:$0xff] %v276
    %305 = vst [vmem:[#allocation2 + $0x90] sm:$0xff] %v214
    %306 = vst [vmem:[#allocation2 + $0x98] sm:$0xff] %v216
    %307 = vst [vmem:[#allocation2 + $0xa0] sm:$0xff] %v281
    %308 = vst [vmem:[#allocation2 + $0xa8] sm:$0xff] %v218
    %309 = vst [vmem:[#allocation2 + $0xb0] sm:$0xff] %v220
    %310 = vst [vmem:[#allocation2 + $0xb8] sm:$0xff] %v284
    %311 = vst [vmem:[#allocation4] sm:$0xff] 0.0
    %v312 = vld [vmem:[%s4] sm:$0x1]
    %v313 = vld [vmem:[#allocation4] sm:$0xff]
    %v314 = vpack.c.bf16 %v313, %v313
    %v315 = vld [vmem:[#allocation5] sm:$0xff]
    %v316 = vld [vmem:[#allocation5 + $0x8] sm:$0xf]
    %v317 = vld [vmem:[#allocation5 + $0xc] sm:$0xff]
    %v318 = vld [vmem:[#allocation5 + $0x14] sm:$0xf]
    %v319 = vld [vmem:[#allocation5 + $0x18] sm:$0xff]
    %v320 = vld [vmem:[#allocation5 + $0x20] sm:$0xf]
    %v321 = vld [vmem:[#allocation5 + $0x24] sm:$0xff]
    %v322 = vld [vmem:[#allocation5 + $0x2c] sm:$0xf]
    %v323 = vld [vmem:[#allocation5 + $0x30] sm:$0xff]
    %v324 = vld [vmem:[#allocation5 + $0x38] sm:$0xf]
    %v325 = vld [vmem:[#allocation5 + $0x3c] sm:$0xff]
    %v326 = vld [vmem:[#allocation5 + $0x44] sm:$0xf]
    %v327 = vld [vmem:[#allocation5 + $0x48] sm:$0xff]
    %v328 = vld [vmem:[#allocation5 + $0x50] sm:$0xf]
    %v329 = vld [vmem:[#allocation5 + $0x54] sm:$0xff]
    %v330 = vld [vmem:[#allocation5 + $0x5c] sm:$0xf]
    %v331 = vld [vmem:[#allocation5 + $0x60] sm:$0xff]
    %v332 = vld [vmem:[#allocation5 + $0x68] sm:$0xf]
    %v333 = vld [vmem:[#allocation5 + $0x6c] sm:$0xff]
    %v334 = vld [vmem:[#allocation5 + $0x74] sm:$0xf]
    %v335 = vld [vmem:[#allocation5 + $0x78] sm:$0xff]
    %v336 = vld [vmem:[#allocation5 + $0x80] sm:$0xf]
    %v337 = vld [vmem:[#allocation5 + $0x84] sm:$0xff]
    %v338 = vld [vmem:[#allocation5 + $0x8c] sm:$0xf]
    %v339 = vld [vmem:[#allocation5 + $0x90] sm:$0xff]
    %v340 = vld [vmem:[#allocation5 + $0x98] sm:$0xf]
    %v341 = vld [vmem:[#allocation5 + $0x9c] sm:$0xff]
    %v342 = vld [vmem:[#allocation5 + $0xa4] sm:$0xf]
    %v343 = vld [vmem:[#allocation5 + $0xa8] sm:$0xff]
    %v344 = vld [vmem:[#allocation5 + $0xb0] sm:$0xf]
    %v345 = vld [vmem:[#allocation5 + $0xb4] sm:$0xff]
    %v346 = vld [vmem:[#allocation5 + $0xbc] sm:$0xf]
    %v379 = vunpack.c.l.b16 %v315
    %v380 = vunpack.c.h.b16 %v315
    %v381 = vunpack.c.l.b16 %v316
    %v382 = vunpack.c.l.b16 %v317
    %v383 = vunpack.c.h.b16 %v317
    %v384 = vunpack.c.l.b16 %v318
    %v385 = vunpack.c.l.b16 %v319
    %v386 = vunpack.c.h.b16 %v319
    %v387 = vunpack.c.l.b16 %v320
    %v388 = vunpack.c.l.b16 %v321
    %v389 = vunpack.c.h.b16 %v321
    %v390 = vunpack.c.l.b16 %v322
    %v391 = vunpack.c.l.b16 %v323
    %v392 = vunpack.c.h.b16 %v323
    %v393 = vunpack.c.l.b16 %v324
    %v394 = vunpack.c.l.b16 %v325
    %v395 = vunpack.c.h.b16 %v325
    %v396 = vunpack.c.l.b16 %v326
    %v397 = vunpack.c.l.b16 %v327
    %v398 = vunpack.c.h.b16 %v327
    %v399 = vunpack.c.l.b16 %v328
    %v400 = vunpack.c.l.b16 %v329
    %v401 = vunpack.c.h.b16 %v329
    %v402 = vunpack.c.l.b16 %v330
    %v403 = vunpack.c.l.b16 %v331
    %v404 = vunpack.c.h.b16 %v331
    %v405 = vunpack.c.l.b16 %v332
    %v406 = vunpack.c.l.b16 %v333
    %v407 = vunpack.c.h.b16 %v333
    %v408 = vunpack.c.l.b16 %v334
    %v409 = vunpack.c.l.b16 %v335
    %v410 = vunpack.c.h.b16 %v335
    %v411 = vunpack.c.l.b16 %v336
    %v412 = vunpack.c.l.b16 %v337
    %v413 = vunpack.c.h.b16 %v337
    %v414 = vunpack.c.l.b16 %v338
    %v415 = vunpack.c.l.b16 %v339
    %v416 = vunpack.c.h.b16 %v339
    %v417 = vunpack.c.l.b16 %v340
    %v418 = vunpack.c.l.b16 %v341
    %v419 = vunpack.c.h.b16 %v341
    %v420 = vunpack.c.l.b16 %v342
    %v421 = vunpack.c.l.b16 %v343
    %v422 = vunpack.c.h.b16 %v343
    %v423 = vunpack.c.l.b16 %v344
    %v424 = vunpack.c.l.b16 %v345
    %v425 = vunpack.c.h.b16 %v345
    %v426 = vunpack.c.l.b16 %v346
    %v427 = vpack.c.b16 %v382, %v379
    %v428 = vpack.c.b16 %v383, %v380
    %v429 = vpack.c.b16 %v384, %v381
    %v430 = vpack.c.b16 %v388, %v385
    %v431 = vpack.c.b16 %v389, %v386
    %v432 = vpack.c.b16 %v390, %v387
    %v433 = vpack.c.b16 %v394, %v391
    %v434 = vpack.c.b16 %v395, %v392
    %v435 = vpack.c.b16 %v396, %v393
    %v436 = vpack.c.b16 %v400, %v397
    %v437 = vpack.c.b16 %v401, %v398
    %v438 = vpack.c.b16 %v402, %v399
    %v439 = vpack.c.b16 %v406, %v403
    %v440 = vpack.c.b16 %v407, %v404
    %v441 = vpack.c.b16 %v408, %v405
    %v442 = vpack.c.b16 %v412, %v409
    %v443 = vpack.c.b16 %v413, %v410
    %v444 = vpack.c.b16 %v414, %v411
    %v445 = vpack.c.b16 %v418, %v415
    %v446 = vpack.c.b16 %v419, %v416
    %v447 = vpack.c.b16 %v420, %v417
    %v448 = vpack.c.b16 %v424, %v421
    %v449 = vpack.c.b16 %v425, %v422
    %v450 = vpack.c.b16 %v426, %v423
    %475 = vmatprep.subr.bf16.mxu0 %v449
    %476 = vmatpush1.bf16.msra.mxu0 %v448
    %477 = vmatprep.subr.bf16.mxu0 %v446
    %478 = vmatpush1.bf16.msra.mxu0 %v445
    %479 = vmatprep.subr.bf16.mxu0 %v443
    %480 = vmatpush1.bf16.msra.mxu0 %v442
    %481 = vmatprep.subr.bf16.mxu0 %v440
    %482 = vmatpush1.bf16.msra.mxu0 %v439
    %483 = vmatprep.subr.bf16.mxu0 %v437
    %484 = vmatpush1.bf16.msra.mxu0 %v436
    %485 = vmatprep.subr.bf16.mxu0 %v434
    %486 = vmatpush1.bf16.msra.mxu0 %v433
    %487 = vmatprep.subr.bf16.mxu0 %v431
    %488 = vmatpush1.bf16.msra.mxu0 %v430
    %489 = vmatprep.subr.bf16.mxu0 %v428
    %490 = vmatpush1.bf16.msra.mxu0 %v427
    %491 = vmatprep.subr.bf16.mxu0 0
    %492 = vmatpush2.bf16.msra.mxu0 0
    %493 = vmatprep.subr.bf16.mxu0 0
    %494 = vmatpush2.bf16.msra.mxu0 0
    %495 = vmatprep.subr.bf16.mxu0 0
    %496 = vmatpush2.bf16.msra.mxu0 0
    %497 = vmatprep.subr.bf16.mxu0 0
    %498 = vmatpush2.bf16.msra.mxu0 0
    %499 = vmatprep.subr.bf16.mxu0 0
    %500 = vmatpush2.bf16.msra.mxu0 0
    %501 = vmatprep.subr.bf16.mxu0 0
    %502 = vmatpush2.bf16.msra.mxu0 0
    %503 = vmatprep.subr.bf16.mxu0 0
    %504 = vmatpush2.bf16.msra.mxu0 0
    %505 = vmatprep.subr.bf16.mxu0 0
    %506 = vmatpush2.bf16.msra.mxu0 0
    %507 = vmatprep.mubr.bf16.mxu0 0
    %508 = vmatmul.mubr.bf16.gmra.mxu0 %v314
    %v509 = vpop.f32.mrf.mxu0
    %v510 = vadd.f32 0.0, %v509
    %v511 = vpop.f32.mrf.mxu0
    %v512 = vadd.f32 0.0, %v511
    %v513 = vpop.f32.mrf.mxu0
    %v514 = vpop.f32.mrf.mxu0
    %515 = vdwg.mxu0
    %516 = vmatprep.subr.bf16.mxu0 0
    %517 = vmatpush1.bf16.msra.mxu0 %v450
    %518 = vmatprep.subr.bf16.mxu0 0
    %519 = vmatpush1.bf16.msra.mxu0 %v447
    %520 = vmatprep.subr.bf16.mxu0 0
    %521 = vmatpush1.bf16.msra.mxu0 %v444
    %522 = vmatprep.subr.bf16.mxu0 0
    %523 = vmatpush1.bf16.msra.mxu0 %v441
    %524 = vmatprep.subr.bf16.mxu0 0
    %525 = vmatpush1.bf16.msra.mxu0 %v438
    %526 = vmatprep.subr.bf16.mxu0 0
    %527 = vmatpush1.bf16.msra.mxu0 %v435
    %528 = vmatprep.subr.bf16.mxu0 0
    %529 = vmatpush1.bf16.msra.mxu0 %v432
    %530 = vmatprep.subr.bf16.mxu0 0
    %531 = vmatpush1.bf16.msra.mxu0 %v429
    %532 = vmatprep.subr.bf16.mxu0 0
    %533 = vmatpush2.bf16.msra.mxu0 0
    %534 = vmatprep.subr.bf16.mxu0 0
    %535 = vmatpush2.bf16.msra.mxu0 0
    %536 = vmatprep.subr.bf16.mxu0 0
    %537 = vmatpush2.bf16.msra.mxu0 0
    %538 = vmatprep.subr.bf16.mxu0 0
    %539 = vmatpush2.bf16.msra.mxu0 0
    %540 = vmatprep.subr.bf16.mxu0 0
    %541 = vmatpush2.bf16.msra.mxu0 0
    %542 = vmatprep.subr.bf16.mxu0 0
    %543 = vmatpush2.bf16.msra.mxu0 0
    %544 = vmatprep.subr.bf16.mxu0 0
    %545 = vmatpush2.bf16.msra.mxu0 0
    %546 = vmatprep.subr.bf16.mxu0 0
    %547 = vmatpush2.bf16.msra.mxu0 0
    %548 = vmatprep.mubr.bf16.mxu0 0
    %549 = vmatmul.mubr.bf16.gmra.mxu0 %v314
    %v550 = vpop.f32.mrf.mxu0
    %v551 = vadd.f32 0.0, %v550
    %v552 = vpop.f32.mrf.mxu0
    %v553 = vpop.f32.mrf.mxu0
    %v554 = vpop.f32.mrf.mxu0
    %555 = vdwg.mxu0
    %v556 = vld [vmem:[#allocation2] sm:$0xff]
    %v557 = vld [vmem:[#allocation2 + $0x8] sm:$0xff]
    %v558 = vld [vmem:[#allocation2 + $0x10] sm:$0xff]
    %v559 = vadd.f32 %v556, %v510
    %v560 = vxor.u32 %v559, 2147483648
    %v561 = vmul.f32 %v560, 1.442695
    %v562 = vpow.pop %v561
    %v563 = vadd.f32 %v562, 1.0
    %v564 = vrcp.pop %v563
    %v565 = vmul.f32 1.0, %v564
    %v566 = vadd.f32 %v557, %v512
    %v567 = vxor.u32 %v566, 2147483648
    %v568 = vmul.f32 %v567, 1.442695
    %v569 = vpow.pop %v568
    %v570 = vadd.f32 %v569, 1.0
    %v571 = vrcp.pop %v570
    %v572 = vmul.f32 1.0, %v571
    %v574 = vlaneseq
    %v575 = vshrl.u32 %v574, 7
    %v576 = vsub.s32 0, %v575
    %v577 = vrot.slane %v312, %v576
    %v579 = vadd.f32 %v551, %v577
    %v580 = vmul.f32 %v565, %v579
    %v581 = vadd.f32 %v558, %v580
    %v582 = vtanh.pop %v581
    %v583 = vsub.f32 1.0, %v572
    %v584 = vmul.f32 %v583, %v582
    %v585 = vmul.f32 %v572, %v313
    %v586 = vadd.f32 %v584, %v585
    %587 = vst [vmem:[#allocation4] sm:$0xff] %v586
    %588 = vst [vmem:[#allocation3] sm:$0xff] %v586
    %v589 = vld [vmem:[#allocation4] sm:$0xff]
    %v590 = vpack.c.bf16 %v589, %v589
    %v591 = vld [vmem:[#allocation5] sm:$0xff]
    %v592 = vld [vmem:[#allocation5 + $0x8] sm:$0xf]
    %v593 = vld [vmem:[#allocation5 + $0xc] sm:$0xff]
    %v594 = vld [vmem:[#allocation5 + $0x14] sm:$0xf]
    %v595 = vld [vmem:[#allocation5 + $0x18] sm:$0xff]
    %v596 = vld [vmem:[#allocation5 + $0x20] sm:$0xf]
    %v597 = vld [vmem:[#allocation5 + $0x24] sm:$0xff]
    %v598 = vld [vmem:[#allocation5 + $0x2c] sm:$0xf]
    %v599 = vld [vmem:[#allocation5 + $0x30] sm:$0xff]
    %v600 = vld [vmem:[#allocation5 + $0x38] sm:$0xf]
    %v601 = vld [vmem:[#allocation5 + $0x3c] sm:$0xff]
    %v602 = vld [vmem:[#allocation5 + $0x44] sm:$0xf]
    %v603 = vld [vmem:[#allocation5 + $0x48] sm:$0xff]
    %v604 = vld [vmem:[#allocation5 + $0x50] sm:$0xf]
    %v605 = vld [vmem:[#allocation5 + $0x54] sm:$0xff]
    %v606 = vld [vmem:[#allocation5 + $0x5c] sm:$0xf]
    %v607 = vld [vmem:[#allocation5 + $0x60] sm:$0xff]
    %v608 = vld [vmem:[#allocation5 + $0x68] sm:$0xf]
    %v609 = vld [vmem:[#allocation5 + $0x6c] sm:$0xff]
    %v610 = vld [vmem:[#allocation5 + $0x74] sm:$0xf]
    %v611 = vld [vmem:[#allocation5 + $0x78] sm:$0xff]
    %v612 = vld [vmem:[#allocation5 + $0x80] sm:$0xf]
    %v613 = vld [vmem:[#allocation5 + $0x84] sm:$0xff]
    %v614 = vld [vmem:[#allocation5 + $0x8c] sm:$0xf]
    %v615 = vld [vmem:[#allocation5 + $0x90] sm:$0xff]
    %v616 = vld [vmem:[#allocation5 + $0x98] sm:$0xf]
    %v617 = vld [vmem:[#allocation5 + $0x9c] sm:$0xff]
    %v618 = vld [vmem:[#allocation5 + $0xa4] sm:$0xf]
    %v619 = vld [vmem:[#allocation5 + $0xa8] sm:$0xff]
    %v620 = vld [vmem:[#allocation5 + $0xb0] sm:$0xf]
    %v621 = vld [vmem:[#allocation5 + $0xb4] sm:$0xff]
    %v622 = vld [vmem:[#allocation5 + $0xbc] sm:$0xf]
    %v655 = vunpack.c.l.b16 %v591
    %v656 = vunpack.c.h.b16 %v591
    %v657 = vunpack.c.l.b16 %v592
    %v658 = vunpack.c.l.b16 %v593
    %v659 = vunpack.c.h.b16 %v593
    %v660 = vunpack.c.l.b16 %v594
    %v661 = vunpack.c.l.b16 %v595
    %v662 = vunpack.c.h.b16 %v595
    %v663 = vunpack.c.l.b16 %v596
    %v664 = vunpack.c.l.b16 %v597
    %v665 = vunpack.c.h.b16 %v597
    %v666 = vunpack.c.l.b16 %v598
    %v667 = vunpack.c.l.b16 %v599
    %v668 = vunpack.c.h.b16 %v599
    %v669 = vunpack.c.l.b16 %v600
    %v670 = vunpack.c.l.b16 %v601
    %v671 = vunpack.c.h.b16 %v601
    %v672 = vunpack.c.l.b16 %v602
    %v673 = vunpack.c.l.b16 %v603
    %v674 = vunpack.c.h.b16 %v603
    %v675 = vunpack.c.l.b16 %v604
    %v676 = vunpack.c.l.b16 %v605
    %v677 = vunpack.c.h.b16 %v605
    %v678 = vunpack.c.l.b16 %v606
    %v679 = vunpack.c.l.b16 %v607
    %v680 = vunpack.c.h.b16 %v607
    %v681 = vunpack.c.l.b16 %v608
    %v682 = vunpack.c.l.b16 %v609
    %v683 = vunpack.c.h.b16 %v609
    %v684 = vunpack.c.l.b16 %v610
    %v685 = vunpack.c.l.b16 %v611
    %v686 = vunpack.c.h.b16 %v611
    %v687 = vunpack.c.l.b16 %v612
    %v688 = vunpack.c.l.b16 %v613
    %v689 = vunpack.c.h.b16 %v613
    %v690 = vunpack.c.l.b16 %v614
    %v691 = vunpack.c.l.b16 %v615
    %v692 = vunpack.c.h.b16 %v615
    %v693 = vunpack.c.l.b16 %v616
    %v694 = vunpack.c.l.b16 %v617
    %v695 = vunpack.c.h.b16 %v617
    %v696 = vunpack.c.l.b16 %v618
    %v697 = vunpack.c.l.b16 %v619
    %v698 = vunpack.c.h.b16 %v619
    %v699 = vunpack.c.l.b16 %v620
    %v700 = vunpack.c.l.b16 %v621
    %v701 = vunpack.c.h.b16 %v621
    %v702 = vunpack.c.l.b16 %v622
    %v703 = vpack.c.b16 %v658, %v655
    %v704 = vpack.c.b16 %v659, %v656
    %v705 = vpack.c.b16 %v660, %v657
    %v706 = vpack.c.b16 %v664, %v661
    %v707 = vpack.c.b16 %v665, %v662
    %v708 = vpack.c.b16 %v666, %v663
    %v709 = vpack.c.b16 %v670, %v667
    %v710 = vpack.c.b16 %v671, %v668
    %v711 = vpack.c.b16 %v672, %v669
    %v712 = vpack.c.b16 %v676, %v673
    %v713 = vpack.c.b16 %v677, %v674
    %v714 = vpack.c.b16 %v678, %v675
    %v715 = vpack.c.b16 %v682, %v679
    %v716 = vpack.c.b16 %v683, %v680
    %v717 = vpack.c.b16 %v684, %v681
    %v718 = vpack.c.b16 %v688, %v685
    %v719 = vpack.c.b16 %v689, %v686
    %v720 = vpack.c.b16 %v690, %v687
    %v721 = vpack.c.b16 %v694, %v691
    %v722 = vpack.c.b16 %v695, %v692
    %v723 = vpack.c.b16 %v696, %v693
    %v724 = vpack.c.b16 %v700, %v697
    %v725 = vpack.c.b16 %v701, %v698
    %v726 = vpack.c.b16 %v702, %v699
    %751 = vmatprep.subr.bf16.mxu0 %v725
    %752 = vmatpush1.bf16.msra.mxu0 %v724
    %753 = vmatprep.subr.bf16.mxu0 %v722
    %754 = vmatpush1.bf16.msra.mxu0 %v721
    %755 = vmatprep.subr.bf16.mxu0 %v719
    %756 = vmatpush1.bf16.msra.mxu0 %v718
    %757 = vmatprep.subr.bf16.mxu0 %v716
    %758 = vmatpush1.bf16.msra.mxu0 %v715
    %759 = vmatprep.subr.bf16.mxu0 %v713
    %760 = vmatpush1.bf16.msra.mxu0 %v712
    %761 = vmatprep.subr.bf16.mxu0 %v710
    %762 = vmatpush1.bf16.msra.mxu0 %v709
    %763 = vmatprep.subr.bf16.mxu0 %v707
    %764 = vmatpush1.bf16.msra.mxu0 %v706
    %765 = vmatprep.subr.bf16.mxu0 %v704
    %766 = vmatpush1.bf16.msra.mxu0 %v703
    %767 = vmatprep.subr.bf16.mxu0 0
    %768 = vmatpush2.bf16.msra.mxu0 0
    %769 = vmatprep.subr.bf16.mxu0 0
    %770 = vmatpush2.bf16.msra.mxu0 0
    %771 = vmatprep.subr.bf16.mxu0 0
    %772 = vmatpush2.bf16.msra.mxu0 0
    %773 = vmatprep.subr.bf16.mxu0 0
    %774 = vmatpush2.bf16.msra.mxu0 0
    %775 = vmatprep.subr.bf16.mxu0 0
    %776 = vmatpush2.bf16.msra.mxu0 0
    %777 = vmatprep.subr.bf16.mxu0 0
    %778 = vmatpush2.bf16.msra.mxu0 0
    %779 = vmatprep.subr.bf16.mxu0 0
    %780 = vmatpush2.bf16.msra.mxu0 0
    %781 = vmatprep.subr.bf16.mxu0 0
    %782 = vmatpush2.bf16.msra.mxu0 0
    %783 = vmatprep.mubr.bf16.mxu0 0
    %784 = vmatmul.mubr.bf16.gmra.mxu0 %v590
    %v785 = vpop.f32.mrf.mxu0
    %v786 = vadd.f32 0.0, %v785
    %v787 = vpop.f32.mrf.mxu0
    %v788 = vadd.f32 0.0, %v787
    %v789 = vpop.f32.mrf.mxu0
    %v790 = vpop.f32.mrf.mxu0
    %791 = vdwg.mxu0
    %792 = vmatprep.subr.bf16.mxu0 0
    %793 = vmatpush1.bf16.msra.mxu0 %v726
    %794 = vmatprep.subr.bf16.mxu0 0
    %795 = vmatpush1.bf16.msra.mxu0 %v723
    %796 = vmatprep.subr.bf16.mxu0 0
    %797 = vmatpush1.bf16.msra.mxu0 %v720
    %798 = vmatprep.subr.bf16.mxu0 0
    %799 = vmatpush1.bf16.msra.mxu0 %v717
    %800 = vmatprep.subr.bf16.mxu0 0
    %801 = vmatpush1.bf16.msra.mxu0 %v714
    %802 = vmatprep.subr.bf16.mxu0 0
    %803 = vmatpush1.bf16.msra.mxu0 %v711
    %804 = vmatprep.subr.bf16.mxu0 0
    %805 = vmatpush1.bf16.msra.mxu0 %v708
    %806 = vmatprep.subr.bf16.mxu0 0
    %807 = vmatpush1.bf16.msra.mxu0 %v705
    %808 = vmatprep.subr.bf16.mxu0 0
    %809 = vmatpush2.bf16.msra.mxu0 0
    %810 = vmatprep.subr.bf16.mxu0 0
    %811 = vmatpush2.bf16.msra.mxu0 0
    %812 = vmatprep.subr.bf16.mxu0 0
    %813 = vmatpush2.bf16.msra.mxu0 0
    %814 = vmatprep.subr.bf16.mxu0 0
    %815 = vmatpush2.bf16.msra.mxu0 0
    %816 = vmatprep.subr.bf16.mxu0 0
    %817 = vmatpush2.bf16.msra.mxu0 0
    %818 = vmatprep.subr.bf16.mxu0 0
    %819 = vmatpush2.bf16.msra.mxu0 0
    %820 = vmatprep.subr.bf16.mxu0 0
    %821 = vmatpush2.bf16.msra.mxu0 0
    %822 = vmatprep.subr.bf16.mxu0 0
    %823 = vmatpush2.bf16.msra.mxu0 0
    %824 = vmatprep.mubr.bf16.mxu0 0
    %825 = vmatmul.mubr.bf16.gmra.mxu0 %v590
    %v826 = vpop.f32.mrf.mxu0
    %v827 = vadd.f32 0.0, %v826
    %v828 = vpop.f32.mrf.mxu0
    %v829 = vpop.f32.mrf.mxu0
    %v830 = vpop.f32.mrf.mxu0
    %831 = vdwg.mxu0
    %s832 = scalar_lea.vmem [#allocation2], 24
    %v833 = vld [vmem:[%s832] sm:$0xff]
    %v834 = vld [vmem:[%s832 + $0x8] sm:$0xff]
    %v835 = vld [vmem:[%s832 + $0x10] sm:$0xff]
    %v836 = vadd.f32 %v833, %v786
    %v837 = vxor.u32 %v836, 2147483648
    %v838 = vmul.f32 %v837, 1.442695
    %v839 = vpow.pop %v838
    %v840 = vadd.f32 %v839, 1.0
    %v841 = vrcp.pop %v840
    %v842 = vmul.f32 1.0, %v841
    %v843 = vadd.f32 %v834, %v788
    %v844 = vxor.u32 %v843, 2147483648
    %v845 = vmul.f32 %v844, 1.442695
    %v846 = vpow.pop %v845
    %v847 = vadd.f32 %v846, 1.0
    %v848 = vrcp.pop %v847
    %v849 = vmul.f32 1.0, %v848
    %v850 = vadd.f32 %v827, %v577
    %v851 = vmul.f32 %v842, %v850
    %v852 = vadd.f32 %v835, %v851
    %v853 = vtanh.pop %v852
    %v854 = vsub.f32 1.0, %v849
    %v855 = vmul.f32 %v854, %v853
    %v856 = vmul.f32 %v849, %v589
    %v857 = vadd.f32 %v855, %v856
    %858 = vst [vmem:[#allocation4] sm:$0xff] %v857
    %s859 = scalar_lea.vmem [#allocation3], 8
    %860 = vst [vmem:[%s859] sm:$0xff] %v857
    %v861 = vld [vmem:[#allocation4] sm:$0xff]
    %v862 = vpack.c.bf16 %v861, %v861
    %v863 = vld [vmem:[#allocation5] sm:$0xff]
    %v864 = vld [vmem:[#allocation5 + $0x8] sm:$0xf]
    %v865 = vld [vmem:[#allocation5 + $0xc] sm:$0xff]
    %v866 = vld [vmem:[#allocation5 + $0x14] sm:$0xf]
    %v867 = vld [vmem:[#allocation5 + $0x18] sm:$0xff]
    %v868 = vld [vmem:[#allocation5 + $0x20] sm:$0xf]
    %v869 = vld [vmem:[#allocation5 + $0x24] sm:$0xff]
    %v870 = vld [vmem:[#allocation5 + $0x2c] sm:$0xf]
    %v871 = vld [vmem:[#allocation5 + $0x30] sm:$0xff]
    %v872 = vld [vmem:[#allocation5 + $0x38] sm:$0xf]
    %v873 = vld [vmem:[#allocation5 + $0x3c] sm:$0xff]
    %v874 = vld [vmem:[#allocation5 + $0x44] sm:$0xf]
    %v875 = vld [vmem:[#allocation5 + $0x48] sm:$0xff]
    %v876 = vld [vmem:[#allocation5 + $0x50] sm:$0xf]
    %v877 = vld [vmem:[#allocation5 + $0x54] sm:$0xff]
    %v878 = vld [vmem:[#allocation5 + $0x5c] sm:$0xf]
    %v879 = vld [vmem:[#allocation5 + $0x60] sm:$0xff]
    %v880 = vld [vmem:[#allocation5 + $0x68] sm:$0xf]
    %v881 = vld [vmem:[#allocation5 + $0x6c] sm:$0xff]
    %v882 = vld [vmem:[#allocation5 + $0x74] sm:$0xf]
    %v883 = vld [vmem:[#allocation5 + $0x78] sm:$0xff]
    %v884 = vld [vmem:[#allocation5 + $0x80] sm:$0xf]
    %v885 = vld [vmem:[#allocation5 + $0x84] sm:$0xff]
    %v886 = vld [vmem:[#allocation5 + $0x8c] sm:$0xf]
    %v887 = vld [vmem:[#allocation5 + $0x90] sm:$0xff]
    %v888 = vld [vmem:[#allocation5 + $0x98] sm:$0xf]
    %v889 = vld [vmem:[#allocation5 + $0x9c] sm:$0xff]
    %v890 = vld [vmem:[#allocation5 + $0xa4] sm:$0xf]
    %v891 = vld [vmem:[#allocation5 + $0xa8] sm:$0xff]
    %v892 = vld [vmem:[#allocation5 + $0xb0] sm:$0xf]
    %v893 = vld [vmem:[#allocation5 + $0xb4] sm:$0xff]
    %v894 = vld [vmem:[#allocation5 + $0xbc] sm:$0xf]
    %v927 = vunpack.c.l.b16 %v863
    %v928 = vunpack.c.h.b16 %v863
    %v929 = vunpack.c.l.b16 %v864
    %v930 = vunpack.c.l.b16 %v865
    %v931 = vunpack.c.h.b16 %v865
    %v932 = vunpack.c.l.b16 %v866
    %v933 = vunpack.c.l.b16 %v867
    %v934 = vunpack.c.h.b16 %v867
    %v935 = vunpack.c.l.b16 %v868
    %v936 = vunpack.c.l.b16 %v869
    %v937 = vunpack.c.h.b16 %v869
    %v938 = vunpack.c.l.b16 %v870
    %v939 = vunpack.c.l.b16 %v871
    %v940 = vunpack.c.h.b16 %v871
    %v941 = vunpack.c.l.b16 %v872
    %v942 = vunpack.c.l.b16 %v873
    %v943 = vunpack.c.h.b16 %v873
    %v944 = vunpack.c.l.b16 %v874
    %v945 = vunpack.c.l.b16 %v875
    %v946 = vunpack.c.h.b16 %v875
    %v947 = vunpack.c.l.b16 %v876
    %v948 = vunpack.c.l.b16 %v877
    %v949 = vunpack.c.h.b16 %v877
    %v950 = vunpack.c.l.b16 %v878
    %v951 = vunpack.c.l.b16 %v879
    %v952 = vunpack.c.h.b16 %v879
    %v953 = vunpack.c.l.b16 %v880
    %v954 = vunpack.c.l.b16 %v881
    %v955 = vunpack.c.h.b16 %v881
    %v956 = vunpack.c.l.b16 %v882
    %v957 = vunpack.c.l.b16 %v883
    %v958 = vunpack.c.h.b16 %v883
    %v959 = vunpack.c.l.b16 %v884
    %v960 = vunpack.c.l.b16 %v885
    %v961 = vunpack.c.h.b16 %v885
    %v962 = vunpack.c.l.b16 %v886
    %v963 = vunpack.c.l.b16 %v887
    %v964 = vunpack.c.h.b16 %v887
    %v965 = vunpack.c.l.b16 %v888
    %v966 = vunpack.c.l.b16 %v889
    %v967 = vunpack.c.h.b16 %v889
    %v968 = vunpack.c.l.b16 %v890
    %v969 = vunpack.c.l.b16 %v891
    %v970 = vunpack.c.h.b16 %v891
    %v971 = vunpack.c.l.b16 %v892
    %v972 = vunpack.c.l.b16 %v893
    %v973 = vunpack.c.h.b16 %v893
    %v974 = vunpack.c.l.b16 %v894
    %v975 = vpack.c.b16 %v930, %v927
    %v976 = vpack.c.b16 %v931, %v928
    %v977 = vpack.c.b16 %v932, %v929
    %v978 = vpack.c.b16 %v936, %v933
    %v979 = vpack.c.b16 %v937, %v934
    %v980 = vpack.c.b16 %v938, %v935
    %v981 = vpack.c.b16 %v942, %v939
    %v982 = vpack.c.b16 %v943, %v940
    %v983 = vpack.c.b16 %v944, %v941
    %v984 = vpack.c.b16 %v948, %v945
    %v985 = vpack.c.b16 %v949, %v946
    %v986 = vpack.c.b16 %v950, %v947
    %v987 = vpack.c.b16 %v954, %v951
    %v988 = vpack.c.b16 %v955, %v952
    %v989 = vpack.c.b16 %v956, %v953
    %v990 = vpack.c.b16 %v960, %v957
    %v991 = vpack.c.b16 %v961, %v958
    %v992 = vpack.c.b16 %v962, %v959
    %v993 = vpack.c.b16 %v966, %v963
    %v994 = vpack.c.b16 %v967, %v964
    %v995 = vpack.c.b16 %v968, %v965
    %v996 = vpack.c.b16 %v972, %v969
    %v997 = vpack.c.b16 %v973, %v970
    %v998 = vpack.c.b16 %v974, %v971
    %1023 = vmatprep.subr.bf16.mxu0 %v997
    %1024 = vmatpush1.bf16.msra.mxu0 %v996
    %1025 = vmatprep.subr.bf16.mxu0 %v994
    %1026 = vmatpush1.bf16.msra.mxu0 %v993
    %1027 = vmatprep.subr.bf16.mxu0 %v991
    %1028 = vmatpush1.bf16.msra.mxu0 %v990
    %1029 = vmatprep.subr.bf16.mxu0 %v988
    %1030 = vmatpush1.bf16.msra.mxu0 %v987
    %1031 = vmatprep.subr.bf16.mxu0 %v985
    %1032 = vmatpush1.bf16.msra.mxu0 %v984
    %1033 = vmatprep.subr.bf16.mxu0 %v982
    %1034 = vmatpush1.bf16.msra.mxu0 %v981
    %1035 = vmatprep.subr.bf16.mxu0 %v979
    %1036 = vmatpush1.bf16.msra.mxu0 %v978
    %1037 = vmatprep.subr.bf16.mxu0 %v976
    %1038 = vmatpush1.bf16.msra.mxu0 %v975
    %1039 = vmatprep.subr.bf16.mxu0 0
    %1040 = vmatpush2.bf16.msra.mxu0 0
    %1041 = vmatprep.subr.bf16.mxu0 0
    %1042 = vmatpush2.bf16.msra.mxu0 0
    %1043 = vmatprep.subr.bf16.mxu0 0
    %1044 = vmatpush2.bf16.msra.mxu0 0
    %1045 = vmatprep.subr.bf16.mxu0 0
    %1046 = vmatpush2.bf16.msra.mxu0 0
    %1047 = vmatprep.subr.bf16.mxu0 0
    %1048 = vmatpush2.bf16.msra.mxu0 0
    %1049 = vmatprep.subr.bf16.mxu0 0
    %1050 = vmatpush2.bf16.msra.mxu0 0
    %1051 = vmatprep.subr.bf16.mxu0 0
    %1052 = vmatpush2.bf16.msra.mxu0 0
    %1053 = vmatprep.subr.bf16.mxu0 0
    %1054 = vmatpush2.bf16.msra.mxu0 0
    %1055 = vmatprep.mubr.bf16.mxu0 0
    %1056 = vmatmul.mubr.bf16.gmra.mxu0 %v862
    %v1057 = vpop.f32.mrf.mxu0
    %v1058 = vadd.f32 0.0, %v1057
    %v1059 = vpop.f32.mrf.mxu0
    %v1060 = vadd.f32 0.0, %v1059
    %v1061 = vpop.f32.mrf.mxu0
    %v1062 = vpop.f32.mrf.mxu0
    %1063 = vdwg.mxu0
    %1064 = vmatprep.subr.bf16.mxu0 0
    %1065 = vmatpush1.bf16.msra.mxu0 %v998
    %1066 = vmatprep.subr.bf16.mxu0 0
    %1067 = vmatpush1.bf16.msra.mxu0 %v995
    %1068 = vmatprep.subr.bf16.mxu0 0
    %1069 = vmatpush1.bf16.msra.mxu0 %v992
    %1070 = vmatprep.subr.bf16.mxu0 0
    %1071 = vmatpush1.bf16.msra.mxu0 %v989
    %1072 = vmatprep.subr.bf16.mxu0 0
    %1073 = vmatpush1.bf16.msra.mxu0 %v986
    %1074 = vmatprep.subr.bf16.mxu0 0
    %1075 = vmatpush1.bf16.msra.mxu0 %v983
    %1076 = vmatprep.subr.bf16.mxu0 0
    %1077 = vmatpush1.bf16.msra.mxu0 %v980
    %1078 = vmatprep.subr.bf16.mxu0 0
    %1079 = vmatpush1.bf16.msra.mxu0 %v977
    %1080 = vmatprep.subr.bf16.mxu0 0
    %1081 = vmatpush2.bf16.msra.mxu0 0
    %1082 = vmatprep.subr.bf16.mxu0 0
    %1083 = vmatpush2.bf16.msra.mxu0 0
    %1084 = vmatprep.subr.bf16.mxu0 0
    %1085 = vmatpush2.bf16.msra.mxu0 0
    %1086 = vmatprep.subr.bf16.mxu0 0
    %1087 = vmatpush2.bf16.msra.mxu0 0
    %1088 = vmatprep.subr.bf16.mxu0 0
    %1089 = vmatpush2.bf16.msra.mxu0 0
    %1090 = vmatprep.subr.bf16.mxu0 0
    %1091 = vmatpush2.bf16.msra.mxu0 0
    %1092 = vmatprep.subr.bf16.mxu0 0
    %1093 = vmatpush2.bf16.msra.mxu0 0
    %1094 = vmatprep.subr.bf16.mxu0 0
    %1095 = vmatpush2.bf16.msra.mxu0 0
    %1096 = vmatprep.mubr.bf16.mxu0 0
    %1097 = vmatmul.mubr.bf16.gmra.mxu0 %v862
    %v1098 = vpop.f32.mrf.mxu0
    %v1099 = vadd.f32 0.0, %v1098
    %v1100 = vpop.f32.mrf.mxu0
    %v1101 = vpop.f32.mrf.mxu0
    %v1102 = vpop.f32.mrf.mxu0
    %1103 = vdwg.mxu0
    %s1104 = scalar_lea.vmem [#allocation2], 48
    %v1105 = vld [vmem:[%s1104] sm:$0xff]
    %v1106 = vld [vmem:[%s1104 + $0x8] sm:$0xff]
    %v1107 = vld [vmem:[%s1104 + $0x10] sm:$0xff]
    %v1108 = vadd.f32 %v1105, %v1058
    %v1109 = vxor.u32 %v1108, 2147483648
    %v1110 = vmul.f32 %v1109, 1.442695
    %v1111 = vpow.pop %v1110
    %v1112 = vadd.f32 %v1111, 1.0
    %v1113 = vrcp.pop %v1112
    %v1114 = vmul.f32 1.0, %v1113
    %v1115 = vadd.f32 %v1106, %v1060
    %v1116 = vxor.u32 %v1115, 2147483648
    %v1117 = vmul.f32 %v1116, 1.442695
    %v1118 = vpow.pop %v1117
    %v1119 = vadd.f32 %v1118, 1.0
    %v1120 = vrcp.pop %v1119
    %v1121 = vmul.f32 1.0, %v1120
    %v1122 = vadd.f32 %v1099, %v577
    %v1123 = vmul.f32 %v1114, %v1122
    %v1124 = vadd.f32 %v1107, %v1123
    %v1125 = vtanh.pop %v1124
    %v1126 = vsub.f32 1.0, %v1121
    %v1127 = vmul.f32 %v1126, %v1125
    %v1128 = vmul.f32 %v1121, %v861
    %v1129 = vadd.f32 %v1127, %v1128
    %1130 = vst [vmem:[#allocation4] sm:$0xff] %v1129
    %s1131 = scalar_lea.vmem [#allocation3], 16
    %1132 = vst [vmem:[%s1131] sm:$0xff] %v1129
    %v1133 = vld [vmem:[#allocation4] sm:$0xff]
    %v1134 = vpack.c.bf16 %v1133, %v1133
    %v1135 = vld [vmem:[#allocation5] sm:$0xff]
    %v1136 = vld [vmem:[#allocation5 + $0x8] sm:$0xf]
    %v1137 = vld [vmem:[#allocation5 + $0xc] sm:$0xff]
    %v1138 = vld [vmem:[#allocation5 + $0x14] sm:$0xf]
    %v1139 = vld [vmem:[#allocation5 + $0x18] sm:$0xff]
    %v1140 = vld [vmem:[#allocation5 + $0x20] sm:$0xf]
    %v1141 = vld [vmem:[#allocation5 + $0x24] sm:$0xff]
    %v1142 = vld [vmem:[#allocation5 + $0x2c] sm:$0xf]
    %v1143 = vld [vmem:[#allocation5 + $0x30] sm:$0xff]
    %v1144 = vld [vmem:[#allocation5 + $0x38] sm:$0xf]
    %v1145 = vld [vmem:[#allocation5 + $0x3c] sm:$0xff]
    %v1146 = vld [vmem:[#allocation5 + $0x44] sm:$0xf]
    %v1147 = vld [vmem:[#allocation5 + $0x48] sm:$0xff]
    %v1148 = vld [vmem:[#allocation5 + $0x50] sm:$0xf]
    %v1149 = vld [vmem:[#allocation5 + $0x54] sm:$0xff]
    %v1150 = vld [vmem:[#allocation5 + $0x5c] sm:$0xf]
    %v1151 = vld [vmem:[#allocation5 + $0x60] sm:$0xff]
    %v1152 = vld [vmem:[#allocation5 + $0x68] sm:$0xf]
    %v1153 = vld [vmem:[#allocation5 + $0x6c] sm:$0xff]
    %v1154 = vld [vmem:[#allocation5 + $0x74] sm:$0xf]
    %v1155 = vld [vmem:[#allocation5 + $0x78] sm:$0xff]
    %v1156 = vld [vmem:[#allocation5 + $0x80] sm:$0xf]
    %v1157 = vld [vmem:[#allocation5 + $0x84] sm:$0xff]
    %v1158 = vld [vmem:[#allocation5 + $0x8c] sm:$0xf]
    %v1159 = vld [vmem:[#allocation5 + $0x90] sm:$0xff]
    %v1160 = vld [vmem:[#allocation5 + $0x98] sm:$0xf]
    %v1161 = vld [vmem:[#allocation5 + $0x9c] sm:$0xff]
    %v1162 = vld [vmem:[#allocation5 + $0xa4] sm:$0xf]
    %v1163 = vld [vmem:[#allocation5 + $0xa8] sm:$0xff]
    %v1164 = vld [vmem:[#allocation5 + $0xb0] sm:$0xf]
    %v1165 = vld [vmem:[#allocation5 + $0xb4] sm:$0xff]
    %v1166 = vld [vmem:[#allocation5 + $0xbc] sm:$0xf]
    %v1199 = vunpack.c.l.b16 %v1135
    %v1200 = vunpack.c.h.b16 %v1135
    %v1201 = vunpack.c.l.b16 %v1136
    %v1202 = vunpack.c.l.b16 %v1137
    %v1203 = vunpack.c.h.b16 %v1137
    %v1204 = vunpack.c.l.b16 %v1138
    %v1205 = vunpack.c.l.b16 %v1139
    %v1206 = vunpack.c.h.b16 %v1139
    %v1207 = vunpack.c.l.b16 %v1140
    %v1208 = vunpack.c.l.b16 %v1141
    %v1209 = vunpack.c.h.b16 %v1141
    %v1210 = vunpack.c.l.b16 %v1142
    %v1211 = vunpack.c.l.b16 %v1143
    %v1212 = vunpack.c.h.b16 %v1143
    %v1213 = vunpack.c.l.b16 %v1144
    %v1214 = vunpack.c.l.b16 %v1145
    %v1215 = vunpack.c.h.b16 %v1145
    %v1216 = vunpack.c.l.b16 %v1146
    %v1217 = vunpack.c.l.b16 %v1147
    %v1218 = vunpack.c.h.b16 %v1147
    %v1219 = vunpack.c.l.b16 %v1148
    %v1220 = vunpack.c.l.b16 %v1149
    %v1221 = vunpack.c.h.b16 %v1149
    %v1222 = vunpack.c.l.b16 %v1150
    %v1223 = vunpack.c.l.b16 %v1151
    %v1224 = vunpack.c.h.b16 %v1151
    %v1225 = vunpack.c.l.b16 %v1152
    %v1226 = vunpack.c.l.b16 %v1153
    %v1227 = vunpack.c.h.b16 %v1153
    %v1228 = vunpack.c.l.b16 %v1154
    %v1229 = vunpack.c.l.b16 %v1155
    %v1230 = vunpack.c.h.b16 %v1155
    %v1231 = vunpack.c.l.b16 %v1156
    %v1232 = vunpack.c.l.b16 %v1157
    %v1233 = vunpack.c.h.b16 %v1157
    %v1234 = vunpack.c.l.b16 %v1158
    %v1235 = vunpack.c.l.b16 %v1159
    %v1236 = vunpack.c.h.b16 %v1159
    %v1237 = vunpack.c.l.b16 %v1160
    %v1238 = vunpack.c.l.b16 %v1161
    %v1239 = vunpack.c.h.b16 %v1161
    %v1240 = vunpack.c.l.b16 %v1162
    %v1241 = vunpack.c.l.b16 %v1163
    %v1242 = vunpack.c.h.b16 %v1163
    %v1243 = vunpack.c.l.b16 %v1164
    %v1244 = vunpack.c.l.b16 %v1165
    %v1245 = vunpack.c.h.b16 %v1165
    %v1246 = vunpack.c.l.b16 %v1166
    %v1247 = vpack.c.b16 %v1202, %v1199
    %v1248 = vpack.c.b16 %v1203, %v1200
    %v1249 = vpack.c.b16 %v1204, %v1201
    %v1250 = vpack.c.b16 %v1208, %v1205
    %v1251 = vpack.c.b16 %v1209, %v1206
    %v1252 = vpack.c.b16 %v1210, %v1207
    %v1253 = vpack.c.b16 %v1214, %v1211
    %v1254 = vpack.c.b16 %v1215, %v1212
    %v1255 = vpack.c.b16 %v1216, %v1213
    %v1256 = vpack.c.b16 %v1220, %v1217
    %v1257 = vpack.c.b16 %v1221, %v1218
    %v1258 = vpack.c.b16 %v1222, %v1219
    %v1259 = vpack.c.b16 %v1226, %v1223
    %v1260 = vpack.c.b16 %v1227, %v1224
    %v1261 = vpack.c.b16 %v1228, %v1225
    %v1262 = vpack.c.b16 %v1232, %v1229
    %v1263 = vpack.c.b16 %v1233, %v1230
    %v1264 = vpack.c.b16 %v1234, %v1231
    %v1265 = vpack.c.b16 %v1238, %v1235
    %v1266 = vpack.c.b16 %v1239, %v1236
    %v1267 = vpack.c.b16 %v1240, %v1237
    %v1268 = vpack.c.b16 %v1244, %v1241
    %v1269 = vpack.c.b16 %v1245, %v1242
    %v1270 = vpack.c.b16 %v1246, %v1243
    %1295 = vmatprep.subr.bf16.mxu0 %v1269
    %1296 = vmatpush1.bf16.msra.mxu0 %v1268
    %1297 = vmatprep.subr.bf16.mxu0 %v1266
    %1298 = vmatpush1.bf16.msra.mxu0 %v1265
    %1299 = vmatprep.subr.bf16.mxu0 %v1263
    %1300 = vmatpush1.bf16.msra.mxu0 %v1262
    %1301 = vmatprep.subr.bf16.mxu0 %v1260
    %1302 = vmatpush1.bf16.msra.mxu0 %v1259
    %1303 = vmatprep.subr.bf16.mxu0 %v1257
    %1304 = vmatpush1.bf16.msra.mxu0 %v1256
    %1305 = vmatprep.subr.bf16.mxu0 %v1254
    %1306 = vmatpush1.bf16.msra.mxu0 %v1253
    %1307 = vmatprep.subr.bf16.mxu0 %v1251
    %1308 = vmatpush1.bf16.msra.mxu0 %v1250
    %1309 = vmatprep.subr.bf16.mxu0 %v1248
    %1310 = vmatpush1.bf16.msra.mxu0 %v1247
    %1311 = vmatprep.subr.bf16.mxu0 0
    %1312 = vmatpush2.bf16.msra.mxu0 0
    %1313 = vmatprep.subr.bf16.mxu0 0
    %1314 = vmatpush2.bf16.msra.mxu0 0
    %1315 = vmatprep.subr.bf16.mxu0 0
    %1316 = vmatpush2.bf16.msra.mxu0 0
    %1317 = vmatprep.subr.bf16.mxu0 0
    %1318 = vmatpush2.bf16.msra.mxu0 0
    %1319 = vmatprep.subr.bf16.mxu0 0
    %1320 = vmatpush2.bf16.msra.mxu0 0
    %1321 = vmatprep.subr.bf16.mxu0 0
    %1322 = vmatpush2.bf16.msra.mxu0 0
    %1323 = vmatprep.subr.bf16.mxu0 0
    %1324 = vmatpush2.bf16.msra.mxu0 0
    %1325 = vmatprep.subr.bf16.mxu0 0
    %1326 = vmatpush2.bf16.msra.mxu0 0
    %1327 = vmatprep.mubr.bf16.mxu0 0
    %1328 = vmatmul.mubr.bf16.gmra.mxu0 %v1134
    %v1329 = vpop.f32.mrf.mxu0
    %v1330 = vadd.f32 0.0, %v1329
    %v1331 = vpop.f32.mrf.mxu0
    %v1332 = vadd.f32 0.0, %v1331
    %v1333 = vpop.f32.mrf.mxu0
    %v1334 = vpop.f32.mrf.mxu0
    %1335 = vdwg.mxu0
    %1336 = vmatprep.subr.bf16.mxu0 0
    %1337 = vmatpush1.bf16.msra.mxu0 %v1270
    %1338 = vmatprep.subr.bf16.mxu0 0
    %1339 = vmatpush1.bf16.msra.mxu0 %v1267
    %1340 = vmatprep.subr.bf16.mxu0 0
    %1341 = vmatpush1.bf16.msra.mxu0 %v1264
    %1342 = vmatprep.subr.bf16.mxu0 0
    %1343 = vmatpush1.bf16.msra.mxu0 %v1261
    %1344 = vmatprep.subr.bf16.mxu0 0
    %1345 = vmatpush1.bf16.msra.mxu0 %v1258
    %1346 = vmatprep.subr.bf16.mxu0 0
    %1347 = vmatpush1.bf16.msra.mxu0 %v1255
    %1348 = vmatprep.subr.bf16.mxu0 0
    %1349 = vmatpush1.bf16.msra.mxu0 %v1252
    %1350 = vmatprep.subr.bf16.mxu0 0
    %1351 = vmatpush1.bf16.msra.mxu0 %v1249
    %1352 = vmatprep.subr.bf16.mxu0 0
    %1353 = vmatpush2.bf16.msra.mxu0 0
    %1354 = vmatprep.subr.bf16.mxu0 0
    %1355 = vmatpush2.bf16.msra.mxu0 0
    %1356 = vmatprep.subr.bf16.mxu0 0
    %1357 = vmatpush2.bf16.msra.mxu0 0
    %1358 = vmatprep.subr.bf16.mxu0 0
    %1359 = vmatpush2.bf16.msra.mxu0 0
    %1360 = vmatprep.subr.bf16.mxu0 0
    %1361 = vmatpush2.bf16.msra.mxu0 0
    %1362 = vmatprep.subr.bf16.mxu0 0
    %1363 = vmatpush2.bf16.msra.mxu0 0
    %1364 = vmatprep.subr.bf16.mxu0 0
    %1365 = vmatpush2.bf16.msra.mxu0 0
    %1366 = vmatprep.subr.bf16.mxu0 0
    %1367 = vmatpush2.bf16.msra.mxu0 0
    %1368 = vmatprep.mubr.bf16.mxu0 0
    %1369 = vmatmul.mubr.bf16.gmra.mxu0 %v1134
    %v1370 = vpop.f32.mrf.mxu0
    %v1371 = vadd.f32 0.0, %v1370
    %v1372 = vpop.f32.mrf.mxu0
    %v1373 = vpop.f32.mrf.mxu0
    %v1374 = vpop.f32.mrf.mxu0
    %1375 = vdwg.mxu0
    %s1376 = scalar_lea.vmem [#allocation2], 72
    %v1377 = vld [vmem:[%s1376] sm:$0xff]
    %v1378 = vld [vmem:[%s1376 + $0x8] sm:$0xff]
    %v1379 = vld [vmem:[%s1376 + $0x10] sm:$0xff]
    %v1380 = vadd.f32 %v1377, %v1330
    %v1381 = vxor.u32 %v1380, 2147483648
    %v1382 = vmul.f32 %v1381, 1.442695
    %v1383 = vpow.pop %v1382
    %v1384 = vadd.f32 %v1383, 1.0
    %v1385 = vrcp.pop %v1384
    %v1386 = vmul.f32 1.0, %v1385
    %v1387 = vadd.f32 %v1378, %v1332
    %v1388 = vxor.u32 %v1387, 2147483648
    %v1389 = vmul.f32 %v1388, 1.442695
    %v1390 = vpow.pop %v1389
    %v1391 = vadd.f32 %v1390, 1.0
    %v1392 = vrcp.pop %v1391
    %v1393 = vmul.f32 1.0, %v1392
    %v1394 = vadd.f32 %v1371, %v577
    %v1395 = vmul.f32 %v1386, %v1394
    %v1396 = vadd.f32 %v1379, %v1395
    %v1397 = vtanh.pop %v1396
    %v1398 = vsub.f32 1.0, %v1393
    %v1399 = vmul.f32 %v1398, %v1397
    %v1400 = vmul.f32 %v1393, %v1133
    %v1401 = vadd.f32 %v1399, %v1400
    %1402 = vst [vmem:[#allocation4] sm:$0xff] %v1401
    %s1403 = scalar_lea.vmem [#allocation3], 24
    %1404 = vst [vmem:[%s1403] sm:$0xff] %v1401
    %v1405 = vld [vmem:[#allocation4] sm:$0xff]
    %v1406 = vpack.c.bf16 %v1405, %v1405
    %v1407 = vld [vmem:[#allocation5] sm:$0xff]
    %v1408 = vld [vmem:[#allocation5 + $0x8] sm:$0xf]
    %v1409 = vld [vmem:[#allocation5 + $0xc] sm:$0xff]
    %v1410 = vld [vmem:[#allocation5 + $0x14] sm:$0xf]
    %v1411 = vld [vmem:[#allocation5 + $0x18] sm:$0xff]
    %v1412 = vld [vmem:[#allocation5 + $0x20] sm:$0xf]
    %v1413 = vld [vmem:[#allocation5 + $0x24] sm:$0xff]
    %v1414 = vld [vmem:[#allocation5 + $0x2c] sm:$0xf]
    %v1415 = vld [vmem:[#allocation5 + $0x30] sm:$0xff]
    %v1416 = vld [vmem:[#allocation5 + $0x38] sm:$0xf]
    %v1417 = vld [vmem:[#allocation5 + $0x3c] sm:$0xff]
    %v1418 = vld [vmem:[#allocation5 + $0x44] sm:$0xf]
    %v1419 = vld [vmem:[#allocation5 + $0x48] sm:$0xff]
    %v1420 = vld [vmem:[#allocation5 + $0x50] sm:$0xf]
    %v1421 = vld [vmem:[#allocation5 + $0x54] sm:$0xff]
    %v1422 = vld [vmem:[#allocation5 + $0x5c] sm:$0xf]
    %v1423 = vld [vmem:[#allocation5 + $0x60] sm:$0xff]
    %v1424 = vld [vmem:[#allocation5 + $0x68] sm:$0xf]
    %v1425 = vld [vmem:[#allocation5 + $0x6c] sm:$0xff]
    %v1426 = vld [vmem:[#allocation5 + $0x74] sm:$0xf]
    %v1427 = vld [vmem:[#allocation5 + $0x78] sm:$0xff]
    %v1428 = vld [vmem:[#allocation5 + $0x80] sm:$0xf]
    %v1429 = vld [vmem:[#allocation5 + $0x84] sm:$0xff]
    %v1430 = vld [vmem:[#allocation5 + $0x8c] sm:$0xf]
    %v1431 = vld [vmem:[#allocation5 + $0x90] sm:$0xff]
    %v1432 = vld [vmem:[#allocation5 + $0x98] sm:$0xf]
    %v1433 = vld [vmem:[#allocation5 + $0x9c] sm:$0xff]
    %v1434 = vld [vmem:[#allocation5 + $0xa4] sm:$0xf]
    %v1435 = vld [vmem:[#allocation5 + $0xa8] sm:$0xff]
    %v1436 = vld [vmem:[#allocation5 + $0xb0] sm:$0xf]
    %v1437 = vld [vmem:[#allocation5 + $0xb4] sm:$0xff]
    %v1438 = vld [vmem:[#allocation5 + $0xbc] sm:$0xf]
    %v1471 = vunpack.c.l.b16 %v1407
    %v1472 = vunpack.c.h.b16 %v1407
    %v1473 = vunpack.c.l.b16 %v1408
    %v1474 = vunpack.c.l.b16 %v1409
    %v1475 = vunpack.c.h.b16 %v1409
    %v1476 = vunpack.c.l.b16 %v1410
    %v1477 = vunpack.c.l.b16 %v1411
    %v1478 = vunpack.c.h.b16 %v1411
    %v1479 = vunpack.c.l.b16 %v1412
    %v1480 = vunpack.c.l.b16 %v1413
    %v1481 = vunpack.c.h.b16 %v1413
    %v1482 = vunpack.c.l.b16 %v1414
    %v1483 = vunpack.c.l.b16 %v1415
    %v1484 = vunpack.c.h.b16 %v1415
    %v1485 = vunpack.c.l.b16 %v1416
    %v1486 = vunpack.c.l.b16 %v1417
    %v1487 = vunpack.c.h.b16 %v1417
    %v1488 = vunpack.c.l.b16 %v1418
    %v1489 = vunpack.c.l.b16 %v1419
    %v1490 = vunpack.c.h.b16 %v1419
    %v1491 = vunpack.c.l.b16 %v1420
    %v1492 = vunpack.c.l.b16 %v1421
    %v1493 = vunpack.c.h.b16 %v1421
    %v1494 = vunpack.c.l.b16 %v1422
    %v1495 = vunpack.c.l.b16 %v1423
    %v1496 = vunpack.c.h.b16 %v1423
    %v1497 = vunpack.c.l.b16 %v1424
    %v1498 = vunpack.c.l.b16 %v1425
    %v1499 = vunpack.c.h.b16 %v1425
    %v1500 = vunpack.c.l.b16 %v1426
    %v1501 = vunpack.c.l.b16 %v1427
    %v1502 = vunpack.c.h.b16 %v1427
    %v1503 = vunpack.c.l.b16 %v1428
    %v1504 = vunpack.c.l.b16 %v1429
    %v1505 = vunpack.c.h.b16 %v1429
    %v1506 = vunpack.c.l.b16 %v1430
    %v1507 = vunpack.c.l.b16 %v1431
    %v1508 = vunpack.c.h.b16 %v1431
    %v1509 = vunpack.c.l.b16 %v1432
    %v1510 = vunpack.c.l.b16 %v1433
    %v1511 = vunpack.c.h.b16 %v1433
    %v1512 = vunpack.c.l.b16 %v1434
    %v1513 = vunpack.c.l.b16 %v1435
    %v1514 = vunpack.c.h.b16 %v1435
    %v1515 = vunpack.c.l.b16 %v1436
    %v1516 = vunpack.c.l.b16 %v1437
    %v1517 = vunpack.c.h.b16 %v1437
    %v1518 = vunpack.c.l.b16 %v1438
    %v1519 = vpack.c.b16 %v1474, %v1471
    %v1520 = vpack.c.b16 %v1475, %v1472
    %v1521 = vpack.c.b16 %v1476, %v1473
    %v1522 = vpack.c.b16 %v1480, %v1477
    %v1523 = vpack.c.b16 %v1481, %v1478
    %v1524 = vpack.c.b16 %v1482, %v1479
    %v1525 = vpack.c.b16 %v1486, %v1483
    %v1526 = vpack.c.b16 %v1487, %v1484
    %v1527 = vpack.c.b16 %v1488, %v1485
    %v1528 = vpack.c.b16 %v1492, %v1489
    %v1529 = vpack.c.b16 %v1493, %v1490
    %v1530 = vpack.c.b16 %v1494, %v1491
    %v1531 = vpack.c.b16 %v1498, %v1495
    %v1532 = vpack.c.b16 %v1499, %v1496
    %v1533 = vpack.c.b16 %v1500, %v1497
    %v1534 = vpack.c.b16 %v1504, %v1501
    %v1535 = vpack.c.b16 %v1505, %v1502
    %v1536 = vpack.c.b16 %v1506, %v1503
    %v1537 = vpack.c.b16 %v1510, %v1507
    %v1538 = vpack.c.b16 %v1511, %v1508
    %v1539 = vpack.c.b16 %v1512, %v1509
    %v1540 = vpack.c.b16 %v1516, %v1513
    %v1541 = vpack.c.b16 %v1517, %v1514
    %v1542 = vpack.c.b16 %v1518, %v1515
    %1567 = vmatprep.subr.bf16.mxu0 %v1541
    %1568 = vmatpush1.bf16.msra.mxu0 %v1540
    %1569 = vmatprep.subr.bf16.mxu0 %v1538
    %1570 = vmatpush1.bf16.msra.mxu0 %v1537
    %1571 = vmatprep.subr.bf16.mxu0 %v1535
    %1572 = vmatpush1.bf16.msra.mxu0 %v1534
    %1573 = vmatprep.subr.bf16.mxu0 %v1532
    %1574 = vmatpush1.bf16.msra.mxu0 %v1531
    %1575 = vmatprep.subr.bf16.mxu0 %v1529
    %1576 = vmatpush1.bf16.msra.mxu0 %v1528
    %1577 = vmatprep.subr.bf16.mxu0 %v1526
    %1578 = vmatpush1.bf16.msra.mxu0 %v1525
    %1579 = vmatprep.subr.bf16.mxu0 %v1523
    %1580 = vmatpush1.bf16.msra.mxu0 %v1522
    %1581 = vmatprep.subr.bf16.mxu0 %v1520
    %1582 = vmatpush1.bf16.msra.mxu0 %v1519
    %1583 = vmatprep.subr.bf16.mxu0 0
    %1584 = vmatpush2.bf16.msra.mxu0 0
    %1585 = vmatprep.subr.bf16.mxu0 0
    %1586 = vmatpush2.bf16.msra.mxu0 0
    %1587 = vmatprep.subr.bf16.mxu0 0
    %1588 = vmatpush2.bf16.msra.mxu0 0
    %1589 = vmatprep.subr.bf16.mxu0 0
    %1590 = vmatpush2.bf16.msra.mxu0 0
    %1591 = vmatprep.subr.bf16.mxu0 0
    %1592 = vmatpush2.bf16.msra.mxu0 0
    %1593 = vmatprep.subr.bf16.mxu0 0
    %1594 = vmatpush2.bf16.msra.mxu0 0
    %1595 = vmatprep.subr.bf16.mxu0 0
    %1596 = vmatpush2.bf16.msra.mxu0 0
    %1597 = vmatprep.subr.bf16.mxu0 0
    %1598 = vmatpush2.bf16.msra.mxu0 0
    %1599 = vmatprep.mubr.bf16.mxu0 0
    %1600 = vmatmul.mubr.bf16.gmra.mxu0 %v1406
    %v1601 = vpop.f32.mrf.mxu0
    %v1602 = vadd.f32 0.0, %v1601
    %v1603 = vpop.f32.mrf.mxu0
    %v1604 = vadd.f32 0.0, %v1603
    %v1605 = vpop.f32.mrf.mxu0
    %v1606 = vpop.f32.mrf.mxu0
    %1607 = vdwg.mxu0
    %1608 = vmatprep.subr.bf16.mxu0 0
    %1609 = vmatpush1.bf16.msra.mxu0 %v1542
    %1610 = vmatprep.subr.bf16.mxu0 0
    %1611 = vmatpush1.bf16.msra.mxu0 %v1539
    %1612 = vmatprep.subr.bf16.mxu0 0
    %1613 = vmatpush1.bf16.msra.mxu0 %v1536
    %1614 = vmatprep.subr.bf16.mxu0 0
    %1615 = vmatpush1.bf16.msra.mxu0 %v1533
    %1616 = vmatprep.subr.bf16.mxu0 0
    %1617 = vmatpush1.bf16.msra.mxu0 %v1530
    %1618 = vmatprep.subr.bf16.mxu0 0
    %1619 = vmatpush1.bf16.msra.mxu0 %v1527
    %1620 = vmatprep.subr.bf16.mxu0 0
    %1621 = vmatpush1.bf16.msra.mxu0 %v1524
    %1622 = vmatprep.subr.bf16.mxu0 0
    %1623 = vmatpush1.bf16.msra.mxu0 %v1521
    %1624 = vmatprep.subr.bf16.mxu0 0
    %1625 = vmatpush2.bf16.msra.mxu0 0
    %1626 = vmatprep.subr.bf16.mxu0 0
    %1627 = vmatpush2.bf16.msra.mxu0 0
    %1628 = vmatprep.subr.bf16.mxu0 0
    %1629 = vmatpush2.bf16.msra.mxu0 0
    %1630 = vmatprep.subr.bf16.mxu0 0
    %1631 = vmatpush2.bf16.msra.mxu0 0
    %1632 = vmatprep.subr.bf16.mxu0 0
    %1633 = vmatpush2.bf16.msra.mxu0 0
    %1634 = vmatprep.subr.bf16.mxu0 0
    %1635 = vmatpush2.bf16.msra.mxu0 0
    %1636 = vmatprep.subr.bf16.mxu0 0
    %1637 = vmatpush2.bf16.msra.mxu0 0
    %1638 = vmatprep.subr.bf16.mxu0 0
    %1639 = vmatpush2.bf16.msra.mxu0 0
    %1640 = vmatprep.mubr.bf16.mxu0 0
    %1641 = vmatmul.mubr.bf16.gmra.mxu0 %v1406
    %v1642 = vpop.f32.mrf.mxu0
    %v1643 = vadd.f32 0.0, %v1642
    %v1644 = vpop.f32.mrf.mxu0
    %v1645 = vpop.f32.mrf.mxu0
    %v1646 = vpop.f32.mrf.mxu0
    %1647 = vdwg.mxu0
    %s1648 = scalar_lea.vmem [#allocation2], 96
    %v1649 = vld [vmem:[%s1648] sm:$0xff]
    %v1650 = vld [vmem:[%s1648 + $0x8] sm:$0xff]
    %v1651 = vld [vmem:[%s1648 + $0x10] sm:$0xff]
    %v1652 = vadd.f32 %v1649, %v1602
    %v1653 = vxor.u32 %v1652, 2147483648
    %v1654 = vmul.f32 %v1653, 1.442695
    %v1655 = vpow.pop %v1654
    %v1656 = vadd.f32 %v1655, 1.0
    %v1657 = vrcp.pop %v1656
    %v1658 = vmul.f32 1.0, %v1657
    %v1659 = vadd.f32 %v1650, %v1604
    %v1660 = vxor.u32 %v1659, 2147483648
    %v1661 = vmul.f32 %v1660, 1.442695
    %v1662 = vpow.pop %v1661
    %v1663 = vadd.f32 %v1662, 1.0
    %v1664 = vrcp.pop %v1663
    %v1665 = vmul.f32 1.0, %v1664
    %v1666 = vadd.f32 %v1643, %v577
    %v1667 = vmul.f32 %v1658, %v1666
    %v1668 = vadd.f32 %v1651, %v1667
    %v1669 = vtanh.pop %v1668
    %v1670 = vsub.f32 1.0, %v1665
    %v1671 = vmul.f32 %v1670, %v1669
    %v1672 = vmul.f32 %v1665, %v1405
    %v1673 = vadd.f32 %v1671, %v1672
    %1674 = vst [vmem:[#allocation4] sm:$0xff] %v1673
    %s1675 = scalar_lea.vmem [#allocation3], 32
    %1676 = vst [vmem:[%s1675] sm:$0xff] %v1673
    %v1677 = vld [vmem:[#allocation4] sm:$0xff]
    %v1678 = vpack.c.bf16 %v1677, %v1677
    %v1679 = vld [vmem:[#allocation5] sm:$0xff]
    %v1680 = vld [vmem:[#allocation5 + $0x8] sm:$0xf]
    %v1681 = vld [vmem:[#allocation5 + $0xc] sm:$0xff]
    %v1682 = vld [vmem:[#allocation5 + $0x14] sm:$0xf]
    %v1683 = vld [vmem:[#allocation5 + $0x18] sm:$0xff]
    %v1684 = vld [vmem:[#allocation5 + $0x20] sm:$0xf]
    %v1685 = vld [vmem:[#allocation5 + $0x24] sm:$0xff]
    %v1686 = vld [vmem:[#allocation5 + $0x2c] sm:$0xf]
    %v1687 = vld [vmem:[#allocation5 + $0x30] sm:$0xff]
    %v1688 = vld [vmem:[#allocation5 + $0x38] sm:$0xf]
    %v1689 = vld [vmem:[#allocation5 + $0x3c] sm:$0xff]
    %v1690 = vld [vmem:[#allocation5 + $0x44] sm:$0xf]
    %v1691 = vld [vmem:[#allocation5 + $0x48] sm:$0xff]
    %v1692 = vld [vmem:[#allocation5 + $0x50] sm:$0xf]
    %v1693 = vld [vmem:[#allocation5 + $0x54] sm:$0xff]
    %v1694 = vld [vmem:[#allocation5 + $0x5c] sm:$0xf]
    %v1695 = vld [vmem:[#allocation5 + $0x60] sm:$0xff]
    %v1696 = vld [vmem:[#allocation5 + $0x68] sm:$0xf]
    %v1697 = vld [vmem:[#allocation5 + $0x6c] sm:$0xff]
    %v1698 = vld [vmem:[#allocation5 + $0x74] sm:$0xf]
    %v1699 = vld [vmem:[#allocation5 + $0x78] sm:$0xff]
    %v1700 = vld [vmem:[#allocation5 + $0x80] sm:$0xf]
    %v1701 = vld [vmem:[#allocation5 + $0x84] sm:$0xff]
    %v1702 = vld [vmem:[#allocation5 + $0x8c] sm:$0xf]
    %v1703 = vld [vmem:[#allocation5 + $0x90] sm:$0xff]
    %v1704 = vld [vmem:[#allocation5 + $0x98] sm:$0xf]
    %v1705 = vld [vmem:[#allocation5 + $0x9c] sm:$0xff]
    %v1706 = vld [vmem:[#allocation5 + $0xa4] sm:$0xf]
    %v1707 = vld [vmem:[#allocation5 + $0xa8] sm:$0xff]
    %v1708 = vld [vmem:[#allocation5 + $0xb0] sm:$0xf]
    %v1709 = vld [vmem:[#allocation5 + $0xb4] sm:$0xff]
    %v1710 = vld [vmem:[#allocation5 + $0xbc] sm:$0xf]
    %v1743 = vunpack.c.l.b16 %v1679
    %v1744 = vunpack.c.h.b16 %v1679
    %v1745 = vunpack.c.l.b16 %v1680
    %v1746 = vunpack.c.l.b16 %v1681
    %v1747 = vunpack.c.h.b16 %v1681
    %v1748 = vunpack.c.l.b16 %v1682
    %v1749 = vunpack.c.l.b16 %v1683
    %v1750 = vunpack.c.h.b16 %v1683
    %v1751 = vunpack.c.l.b16 %v1684
    %v1752 = vunpack.c.l.b16 %v1685
    %v1753 = vunpack.c.h.b16 %v1685
    %v1754 = vunpack.c.l.b16 %v1686
    %v1755 = vunpack.c.l.b16 %v1687
    %v1756 = vunpack.c.h.b16 %v1687
    %v1757 = vunpack.c.l.b16 %v1688
    %v1758 = vunpack.c.l.b16 %v1689
    %v1759 = vunpack.c.h.b16 %v1689
    %v1760 = vunpack.c.l.b16 %v1690
    %v1761 = vunpack.c.l.b16 %v1691
    %v1762 = vunpack.c.h.b16 %v1691
    %v1763 = vunpack.c.l.b16 %v1692
    %v1764 = vunpack.c.l.b16 %v1693
    %v1765 = vunpack.c.h.b16 %v1693
    %v1766 = vunpack.c.l.b16 %v1694
    %v1767 = vunpack.c.l.b16 %v1695
    %v1768 = vunpack.c.h.b16 %v1695
    %v1769 = vunpack.c.l.b16 %v1696
    %v1770 = vunpack.c.l.b16 %v1697
    %v1771 = vunpack.c.h.b16 %v1697
    %v1772 = vunpack.c.l.b16 %v1698
    %v1773 = vunpack.c.l.b16 %v1699
    %v1774 = vunpack.c.h.b16 %v1699
    %v1775 = vunpack.c.l.b16 %v1700
    %v1776 = vunpack.c.l.b16 %v1701
    %v1777 = vunpack.c.h.b16 %v1701
    %v1778 = vunpack.c.l.b16 %v1702
    %v1779 = vunpack.c.l.b16 %v1703
    %v1780 = vunpack.c.h.b16 %v1703
    %v1781 = vunpack.c.l.b16 %v1704
    %v1782 = vunpack.c.l.b16 %v1705
    %v1783 = vunpack.c.h.b16 %v1705
    %v1784 = vunpack.c.l.b16 %v1706
    %v1785 = vunpack.c.l.b16 %v1707
    %v1786 = vunpack.c.h.b16 %v1707
    %v1787 = vunpack.c.l.b16 %v1708
    %v1788 = vunpack.c.l.b16 %v1709
    %v1789 = vunpack.c.h.b16 %v1709
    %v1790 = vunpack.c.l.b16 %v1710
    %v1791 = vpack.c.b16 %v1746, %v1743
    %v1792 = vpack.c.b16 %v1747, %v1744
    %v1793 = vpack.c.b16 %v1748, %v1745
    %v1794 = vpack.c.b16 %v1752, %v1749
    %v1795 = vpack.c.b16 %v1753, %v1750
    %v1796 = vpack.c.b16 %v1754, %v1751
    %v1797 = vpack.c.b16 %v1758, %v1755
    %v1798 = vpack.c.b16 %v1759, %v1756
    %v1799 = vpack.c.b16 %v1760, %v1757
    %v1800 = vpack.c.b16 %v1764, %v1761
    %v1801 = vpack.c.b16 %v1765, %v1762
    %v1802 = vpack.c.b16 %v1766, %v1763
    %v1803 = vpack.c.b16 %v1770, %v1767
    %v1804 = vpack.c.b16 %v1771, %v1768
    %v1805 = vpack.c.b16 %v1772, %v1769
    %v1806 = vpack.c.b16 %v1776, %v1773
    %v1807 = vpack.c.b16 %v1777, %v1774
    %v1808 = vpack.c.b16 %v1778, %v1775
    %v1809 = vpack.c.b16 %v1782, %v1779
    %v1810 = vpack.c.b16 %v1783, %v1780
    %v1811 = vpack.c.b16 %v1784, %v1781
    %v1812 = vpack.c.b16 %v1788, %v1785
    %v1813 = vpack.c.b16 %v1789, %v1786
    %v1814 = vpack.c.b16 %v1790, %v1787
    %1839 = vmatprep.subr.bf16.mxu0 %v1813
    %1840 = vmatpush1.bf16.msra.mxu0 %v1812
    %1841 = vmatprep.subr.bf16.mxu0 %v1810
    %1842 = vmatpush1.bf16.msra.mxu0 %v1809
    %1843 = vmatprep.subr.bf16.mxu0 %v1807
    %1844 = vmatpush1.bf16.msra.mxu0 %v1806
    %1845 = vmatprep.subr.bf16.mxu0 %v1804
    %1846 = vmatpush1.bf16.msra.mxu0 %v1803
    %1847 = vmatprep.subr.bf16.mxu0 %v1801
    %1848 = vmatpush1.bf16.msra.mxu0 %v1800
    %1849 = vmatprep.subr.bf16.mxu0 %v1798
    %1850 = vmatpush1.bf16.msra.mxu0 %v1797
    %1851 = vmatprep.subr.bf16.mxu0 %v1795
    %1852 = vmatpush1.bf16.msra.mxu0 %v1794
    %1853 = vmatprep.subr.bf16.mxu0 %v1792
    %1854 = vmatpush1.bf16.msra.mxu0 %v1791
    %1855 = vmatprep.subr.bf16.mxu0 0
    %1856 = vmatpush2.bf16.msra.mxu0 0
    %1857 = vmatprep.subr.bf16.mxu0 0
    %1858 = vmatpush2.bf16.msra.mxu0 0
    %1859 = vmatprep.subr.bf16.mxu0 0
    %1860 = vmatpush2.bf16.msra.mxu0 0
    %1861 = vmatprep.subr.bf16.mxu0 0
    %1862 = vmatpush2.bf16.msra.mxu0 0
    %1863 = vmatprep.subr.bf16.mxu0 0
    %1864 = vmatpush2.bf16.msra.mxu0 0
    %1865 = vmatprep.subr.bf16.mxu0 0
    %1866 = vmatpush2.bf16.msra.mxu0 0
    %1867 = vmatprep.subr.bf16.mxu0 0
    %1868 = vmatpush2.bf16.msra.mxu0 0
    %1869 = vmatprep.subr.bf16.mxu0 0
    %1870 = vmatpush2.bf16.msra.mxu0 0
    %1871 = vmatprep.mubr.bf16.mxu0 0
    %1872 = vmatmul.mubr.bf16.gmra.mxu0 %v1678
    %v1873 = vpop.f32.mrf.mxu0
    %v1874 = vadd.f32 0.0, %v1873
    %v1875 = vpop.f32.mrf.mxu0
    %v1876 = vadd.f32 0.0, %v1875
    %v1877 = vpop.f32.mrf.mxu0
    %v1878 = vpop.f32.mrf.mxu0
    %1879 = vdwg.mxu0
    %1880 = vmatprep.subr.bf16.mxu0 0
    %1881 = vmatpush1.bf16.msra.mxu0 %v1814
    %1882 = vmatprep.subr.bf16.mxu0 0
    %1883 = vmatpush1.bf16.msra.mxu0 %v1811
    %1884 = vmatprep.subr.bf16.mxu0 0
    %1885 = vmatpush1.bf16.msra.mxu0 %v1808
    %1886 = vmatprep.subr.bf16.mxu0 0
    %1887 = vmatpush1.bf16.msra.mxu0 %v1805
    %1888 = vmatprep.subr.bf16.mxu0 0
    %1889 = vmatpush1.bf16.msra.mxu0 %v1802
    %1890 = vmatprep.subr.bf16.mxu0 0
    %1891 = vmatpush1.bf16.msra.mxu0 %v1799
    %1892 = vmatprep.subr.bf16.mxu0 0
    %1893 = vmatpush1.bf16.msra.mxu0 %v1796
    %1894 = vmatprep.subr.bf16.mxu0 0
    %1895 = vmatpush1.bf16.msra.mxu0 %v1793
    %1896 = vmatprep.subr.bf16.mxu0 0
    %1897 = vmatpush2.bf16.msra.mxu0 0
    %1898 = vmatprep.subr.bf16.mxu0 0
    %1899 = vmatpush2.bf16.msra.mxu0 0
    %1900 = vmatprep.subr.bf16.mxu0 0
    %1901 = vmatpush2.bf16.msra.mxu0 0
    %1902 = vmatprep.subr.bf16.mxu0 0
    %1903 = vmatpush2.bf16.msra.mxu0 0
    %1904 = vmatprep.subr.bf16.mxu0 0
    %1905 = vmatpush2.bf16.msra.mxu0 0
    %1906 = vmatprep.subr.bf16.mxu0 0
    %1907 = vmatpush2.bf16.msra.mxu0 0
    %1908 = vmatprep.subr.bf16.mxu0 0
    %1909 = vmatpush2.bf16.msra.mxu0 0
    %1910 = vmatprep.subr.bf16.mxu0 0
    %1911 = vmatpush2.bf16.msra.mxu0 0
    %1912 = vmatprep.mubr.bf16.mxu0 0
    %1913 = vmatmul.mubr.bf16.gmra.mxu0 %v1678
    %v1914 = vpop.f32.mrf.mxu0
    %v1915 = vadd.f32 0.0, %v1914
    %v1916 = vpop.f32.mrf.mxu0
    %v1917 = vpop.f32.mrf.mxu0
    %v1918 = vpop.f32.mrf.mxu0
    %1919 = vdwg.mxu0
    %s1920 = scalar_lea.vmem [#allocation2], 120
    %v1921 = vld [vmem:[%s1920] sm:$0xff]
    %v1922 = vld [vmem:[%s1920 + $0x8] sm:$0xff]
    %v1923 = vld [vmem:[%s1920 + $0x10] sm:$0xff]
    %v1924 = vadd.f32 %v1921, %v1874
    %v1925 = vxor.u32 %v1924, 2147483648
    %v1926 = vmul.f32 %v1925, 1.442695
    %v1927 = vpow.pop %v1926
    %v1928 = vadd.f32 %v1927, 1.0
    %v1929 = vrcp.pop %v1928
    %v1930 = vmul.f32 1.0, %v1929
    %v1931 = vadd.f32 %v1922, %v1876
    %v1932 = vxor.u32 %v1931, 2147483648
    %v1933 = vmul.f32 %v1932, 1.442695
    %v1934 = vpow.pop %v1933
    %v1935 = vadd.f32 %v1934, 1.0
    %v1936 = vrcp.pop %v1935
    %v1937 = vmul.f32 1.0, %v1936
    %v1938 = vadd.f32 %v1915, %v577
    %v1939 = vmul.f32 %v1930, %v1938
    %v1940 = vadd.f32 %v1923, %v1939
    %v1941 = vtanh.pop %v1940
    %v1942 = vsub.f32 1.0, %v1937
    %v1943 = vmul.f32 %v1942, %v1941
    %v1944 = vmul.f32 %v1937, %v1677
    %v1945 = vadd.f32 %v1943, %v1944
    %1946 = vst [vmem:[#allocation4] sm:$0xff] %v1945
    %s1947 = scalar_lea.vmem [#allocation3], 40
    %1948 = vst [vmem:[%s1947] sm:$0xff] %v1945
    %v1949 = vld [vmem:[#allocation4] sm:$0xff]
    %v1950 = vpack.c.bf16 %v1949, %v1949
    %v1951 = vld [vmem:[#allocation5] sm:$0xff]
    %v1952 = vld [vmem:[#allocation5 + $0x8] sm:$0xf]
    %v1953 = vld [vmem:[#allocation5 + $0xc] sm:$0xff]
    %v1954 = vld [vmem:[#allocation5 + $0x14] sm:$0xf]
    %v1955 = vld [vmem:[#allocation5 + $0x18] sm:$0xff]
    %v1956 = vld [vmem:[#allocation5 + $0x20] sm:$0xf]
    %v1957 = vld [vmem:[#allocation5 + $0x24] sm:$0xff]
    %v1958 = vld [vmem:[#allocation5 + $0x2c] sm:$0xf]
    %v1959 = vld [vmem:[#allocation5 + $0x30] sm:$0xff]
    %v1960 = vld [vmem:[#allocation5 + $0x38] sm:$0xf]
    %v1961 = vld [vmem:[#allocation5 + $0x3c] sm:$0xff]
    %v1962 = vld [vmem:[#allocation5 + $0x44] sm:$0xf]
    %v1963 = vld [vmem:[#allocation5 + $0x48] sm:$0xff]
    %v1964 = vld [vmem:[#allocation5 + $0x50] sm:$0xf]
    %v1965 = vld [vmem:[#allocation5 + $0x54] sm:$0xff]
    %v1966 = vld [vmem:[#allocation5 + $0x5c] sm:$0xf]
    %v1967 = vld [vmem:[#allocation5 + $0x60] sm:$0xff]
    %v1968 = vld [vmem:[#allocation5 + $0x68] sm:$0xf]
    %v1969 = vld [vmem:[#allocation5 + $0x6c] sm:$0xff]
    %v1970 = vld [vmem:[#allocation5 + $0x74] sm:$0xf]
    %v1971 = vld [vmem:[#allocation5 + $0x78] sm:$0xff]
    %v1972 = vld [vmem:[#allocation5 + $0x80] sm:$0xf]
    %v1973 = vld [vmem:[#allocation5 + $0x84] sm:$0xff]
    %v1974 = vld [vmem:[#allocation5 + $0x8c] sm:$0xf]
    %v1975 = vld [vmem:[#allocation5 + $0x90] sm:$0xff]
    %v1976 = vld [vmem:[#allocation5 + $0x98] sm:$0xf]
    %v1977 = vld [vmem:[#allocation5 + $0x9c] sm:$0xff]
    %v1978 = vld [vmem:[#allocation5 + $0xa4] sm:$0xf]
    %v1979 = vld [vmem:[#allocation5 + $0xa8] sm:$0xff]
    %v1980 = vld [vmem:[#allocation5 + $0xb0] sm:$0xf]
    %v1981 = vld [vmem:[#allocation5 + $0xb4] sm:$0xff]
    %v1982 = vld [vmem:[#allocation5 + $0xbc] sm:$0xf]
    %v2015 = vunpack.c.l.b16 %v1951
    %v2016 = vunpack.c.h.b16 %v1951
    %v2017 = vunpack.c.l.b16 %v1952
    %v2018 = vunpack.c.l.b16 %v1953
    %v2019 = vunpack.c.h.b16 %v1953
    %v2020 = vunpack.c.l.b16 %v1954
    %v2021 = vunpack.c.l.b16 %v1955
    %v2022 = vunpack.c.h.b16 %v1955
    %v2023 = vunpack.c.l.b16 %v1956
    %v2024 = vunpack.c.l.b16 %v1957
    %v2025 = vunpack.c.h.b16 %v1957
    %v2026 = vunpack.c.l.b16 %v1958
    %v2027 = vunpack.c.l.b16 %v1959
    %v2028 = vunpack.c.h.b16 %v1959
    %v2029 = vunpack.c.l.b16 %v1960
    %v2030 = vunpack.c.l.b16 %v1961
    %v2031 = vunpack.c.h.b16 %v1961
    %v2032 = vunpack.c.l.b16 %v1962
    %v2033 = vunpack.c.l.b16 %v1963
    %v2034 = vunpack.c.h.b16 %v1963
    %v2035 = vunpack.c.l.b16 %v1964
    %v2036 = vunpack.c.l.b16 %v1965
    %v2037 = vunpack.c.h.b16 %v1965
    %v2038 = vunpack.c.l.b16 %v1966
    %v2039 = vunpack.c.l.b16 %v1967
    %v2040 = vunpack.c.h.b16 %v1967
    %v2041 = vunpack.c.l.b16 %v1968
    %v2042 = vunpack.c.l.b16 %v1969
    %v2043 = vunpack.c.h.b16 %v1969
    %v2044 = vunpack.c.l.b16 %v1970
    %v2045 = vunpack.c.l.b16 %v1971
    %v2046 = vunpack.c.h.b16 %v1971
    %v2047 = vunpack.c.l.b16 %v1972
    %v2048 = vunpack.c.l.b16 %v1973
    %v2049 = vunpack.c.h.b16 %v1973
    %v2050 = vunpack.c.l.b16 %v1974
    %v2051 = vunpack.c.l.b16 %v1975
    %v2052 = vunpack.c.h.b16 %v1975
    %v2053 = vunpack.c.l.b16 %v1976
    %v2054 = vunpack.c.l.b16 %v1977
    %v2055 = vunpack.c.h.b16 %v1977
    %v2056 = vunpack.c.l.b16 %v1978
    %v2057 = vunpack.c.l.b16 %v1979
    %v2058 = vunpack.c.h.b16 %v1979
    %v2059 = vunpack.c.l.b16 %v1980
    %v2060 = vunpack.c.l.b16 %v1981
    %v2061 = vunpack.c.h.b16 %v1981
    %v2062 = vunpack.c.l.b16 %v1982
    %v2063 = vpack.c.b16 %v2018, %v2015
    %v2064 = vpack.c.b16 %v2019, %v2016
    %v2065 = vpack.c.b16 %v2020, %v2017
    %v2066 = vpack.c.b16 %v2024, %v2021
    %v2067 = vpack.c.b16 %v2025, %v2022
    %v2068 = vpack.c.b16 %v2026, %v2023
    %v2069 = vpack.c.b16 %v2030, %v2027
    %v2070 = vpack.c.b16 %v2031, %v2028
    %v2071 = vpack.c.b16 %v2032, %v2029
    %v2072 = vpack.c.b16 %v2036, %v2033
    %v2073 = vpack.c.b16 %v2037, %v2034
    %v2074 = vpack.c.b16 %v2038, %v2035
    %v2075 = vpack.c.b16 %v2042, %v2039
    %v2076 = vpack.c.b16 %v2043, %v2040
    %v2077 = vpack.c.b16 %v2044, %v2041
    %v2078 = vpack.c.b16 %v2048, %v2045
    %v2079 = vpack.c.b16 %v2049, %v2046
    %v2080 = vpack.c.b16 %v2050, %v2047
    %v2081 = vpack.c.b16 %v2054, %v2051
    %v2082 = vpack.c.b16 %v2055, %v2052
    %v2083 = vpack.c.b16 %v2056, %v2053
    %v2084 = vpack.c.b16 %v2060, %v2057
    %v2085 = vpack.c.b16 %v2061, %v2058
    %v2086 = vpack.c.b16 %v2062, %v2059
    %2111 = vmatprep.subr.bf16.mxu0 %v2085
    %2112 = vmatpush1.bf16.msra.mxu0 %v2084
    %2113 = vmatprep.subr.bf16.mxu0 %v2082
    %2114 = vmatpush1.bf16.msra.mxu0 %v2081
    %2115 = vmatprep.subr.bf16.mxu0 %v2079
    %2116 = vmatpush1.bf16.msra.mxu0 %v2078
    %2117 = vmatprep.subr.bf16.mxu0 %v2076
    %2118 = vmatpush1.bf16.msra.mxu0 %v2075
    %2119 = vmatprep.subr.bf16.mxu0 %v2073
    %2120 = vmatpush1.bf16.msra.mxu0 %v2072
    %2121 = vmatprep.subr.bf16.mxu0 %v2070
    %2122 = vmatpush1.bf16.msra.mxu0 %v2069
    %2123 = vmatprep.subr.bf16.mxu0 %v2067
    %2124 = vmatpush1.bf16.msra.mxu0 %v2066
    %2125 = vmatprep.subr.bf16.mxu0 %v2064
    %2126 = vmatpush1.bf16.msra.mxu0 %v2063
    %2127 = vmatprep.subr.bf16.mxu0 0
    %2128 = vmatpush2.bf16.msra.mxu0 0
    %2129 = vmatprep.subr.bf16.mxu0 0
    %2130 = vmatpush2.bf16.msra.mxu0 0
    %2131 = vmatprep.subr.bf16.mxu0 0
    %2132 = vmatpush2.bf16.msra.mxu0 0
    %2133 = vmatprep.subr.bf16.mxu0 0
    %2134 = vmatpush2.bf16.msra.mxu0 0
    %2135 = vmatprep.subr.bf16.mxu0 0
    %2136 = vmatpush2.bf16.msra.mxu0 0
    %2137 = vmatprep.subr.bf16.mxu0 0
    %2138 = vmatpush2.bf16.msra.mxu0 0
    %2139 = vmatprep.subr.bf16.mxu0 0
    %2140 = vmatpush2.bf16.msra.mxu0 0
    %2141 = vmatprep.subr.bf16.mxu0 0
    %2142 = vmatpush2.bf16.msra.mxu0 0
    %2143 = vmatprep.mubr.bf16.mxu0 0
    %2144 = vmatmul.mubr.bf16.gmra.mxu0 %v1950
    %v2145 = vpop.f32.mrf.mxu0
    %v2146 = vadd.f32 0.0, %v2145
    %v2147 = vpop.f32.mrf.mxu0
    %v2148 = vadd.f32 0.0, %v2147
    %v2149 = vpop.f32.mrf.mxu0
    %v2150 = vpop.f32.mrf.mxu0
    %2151 = vdwg.mxu0
    %2152 = vmatprep.subr.bf16.mxu0 0
    %2153 = vmatpush1.bf16.msra.mxu0 %v2086
    %2154 = vmatprep.subr.bf16.mxu0 0
    %2155 = vmatpush1.bf16.msra.mxu0 %v2083
    %2156 = vmatprep.subr.bf16.mxu0 0
    %2157 = vmatpush1.bf16.msra.mxu0 %v2080
    %2158 = vmatprep.subr.bf16.mxu0 0
    %2159 = vmatpush1.bf16.msra.mxu0 %v2077
    %2160 = vmatprep.subr.bf16.mxu0 0
    %2161 = vmatpush1.bf16.msra.mxu0 %v2074
    %2162 = vmatprep.subr.bf16.mxu0 0
    %2163 = vmatpush1.bf16.msra.mxu0 %v2071
    %2164 = vmatprep.subr.bf16.mxu0 0
    %2165 = vmatpush1.bf16.msra.mxu0 %v2068
    %2166 = vmatprep.subr.bf16.mxu0 0
    %2167 = vmatpush1.bf16.msra.mxu0 %v2065
    %2168 = vmatprep.subr.bf16.mxu0 0
    %2169 = vmatpush2.bf16.msra.mxu0 0
    %2170 = vmatprep.subr.bf16.mxu0 0
    %2171 = vmatpush2.bf16.msra.mxu0 0
    %2172 = vmatprep.subr.bf16.mxu0 0
    %2173 = vmatpush2.bf16.msra.mxu0 0
    %2174 = vmatprep.subr.bf16.mxu0 0
    %2175 = vmatpush2.bf16.msra.mxu0 0
    %2176 = vmatprep.subr.bf16.mxu0 0
    %2177 = vmatpush2.bf16.msra.mxu0 0
    %2178 = vmatprep.subr.bf16.mxu0 0
    %2179 = vmatpush2.bf16.msra.mxu0 0
    %2180 = vmatprep.subr.bf16.mxu0 0
    %2181 = vmatpush2.bf16.msra.mxu0 0
    %2182 = vmatprep.subr.bf16.mxu0 0
    %2183 = vmatpush2.bf16.msra.mxu0 0
    %2184 = vmatprep.mubr.bf16.mxu0 0
    %2185 = vmatmul.mubr.bf16.gmra.mxu0 %v1950
    %v2186 = vpop.f32.mrf.mxu0
    %v2187 = vadd.f32 0.0, %v2186
    %v2188 = vpop.f32.mrf.mxu0
    %v2189 = vpop.f32.mrf.mxu0
    %v2190 = vpop.f32.mrf.mxu0
    %2191 = vdwg.mxu0
    %s2192 = scalar_lea.vmem [#allocation2], 144
    %v2193 = vld [vmem:[%s2192] sm:$0xff]
    %v2194 = vld [vmem:[%s2192 + $0x8] sm:$0xff]
    %v2195 = vld [vmem:[%s2192 + $0x10] sm:$0xff]
    %v2196 = vadd.f32 %v2193, %v2146
    %v2197 = vxor.u32 %v2196, 2147483648
    %v2198 = vmul.f32 %v2197, 1.442695
    %v2199 = vpow.pop %v2198
    %v2200 = vadd.f32 %v2199, 1.0
    %v2201 = vrcp.pop %v2200
    %v2202 = vmul.f32 1.0, %v2201
    %v2203 = vadd.f32 %v2194, %v2148
    %v2204 = vxor.u32 %v2203, 2147483648
    %v2205 = vmul.f32 %v2204, 1.442695
    %v2206 = vpow.pop %v2205
    %v2207 = vadd.f32 %v2206, 1.0
    %v2208 = vrcp.pop %v2207
    %v2209 = vmul.f32 1.0, %v2208
    %v2210 = vadd.f32 %v2187, %v577
    %v2211 = vmul.f32 %v2202, %v2210
    %v2212 = vadd.f32 %v2195, %v2211
    %v2213 = vtanh.pop %v2212
    %v2214 = vsub.f32 1.0, %v2209
    %v2215 = vmul.f32 %v2214, %v2213
    %v2216 = vmul.f32 %v2209, %v1949
    %v2217 = vadd.f32 %v2215, %v2216
    %2218 = vst [vmem:[#allocation4] sm:$0xff] %v2217
    %s2219 = scalar_lea.vmem [#allocation3], 48
    %2220 = vst [vmem:[%s2219] sm:$0xff] %v2217
    %v2221 = vld [vmem:[#allocation4] sm:$0xff]
    %v2222 = vpack.c.bf16 %v2221, %v2221
    %v2223 = vld [vmem:[#allocation5] sm:$0xff]
    %v2224 = vld [vmem:[#allocation5 + $0x8] sm:$0xf]
    %v2225 = vld [vmem:[#allocation5 + $0xc] sm:$0xff]
    %v2226 = vld [vmem:[#allocation5 + $0x14] sm:$0xf]
    %v2227 = vld [vmem:[#allocation5 + $0x18] sm:$0xff]
    %v2228 = vld [vmem:[#allocation5 + $0x20] sm:$0xf]
    %v2229 = vld [vmem:[#allocation5 + $0x24] sm:$0xff]
    %v2230 = vld [vmem:[#allocation5 + $0x2c] sm:$0xf]
    %v2231 = vld [vmem:[#allocation5 + $0x30] sm:$0xff]
    %v2232 = vld [vmem:[#allocation5 + $0x38] sm:$0xf]
    %v2233 = vld [vmem:[#allocation5 + $0x3c] sm:$0xff]
    %v2234 = vld [vmem:[#allocation5 + $0x44] sm:$0xf]
    %v2235 = vld [vmem:[#allocation5 + $0x48] sm:$0xff]
    %v2236 = vld [vmem:[#allocation5 + $0x50] sm:$0xf]
    %v2237 = vld [vmem:[#allocation5 + $0x54] sm:$0xff]
    %v2238 = vld [vmem:[#allocation5 + $0x5c] sm:$0xf]
    %v2239 = vld [vmem:[#allocation5 + $0x60] sm:$0xff]
    %v2240 = vld [vmem:[#allocation5 + $0x68] sm:$0xf]
    %v2241 = vld [vmem:[#allocation5 + $0x6c] sm:$0xff]
    %v2242 = vld [vmem:[#allocation5 + $0x74] sm:$0xf]
    %v2243 = vld [vmem:[#allocation5 + $0x78] sm:$0xff]
    %v2244 = vld [vmem:[#allocation5 + $0x80] sm:$0xf]
    %v2245 = vld [vmem:[#allocation5 + $0x84] sm:$0xff]
    %v2246 = vld [vmem:[#allocation5 + $0x8c] sm:$0xf]
    %v2247 = vld [vmem:[#allocation5 + $0x90] sm:$0xff]
    %v2248 = vld [vmem:[#allocation5 + $0x98] sm:$0xf]
    %v2249 = vld [vmem:[#allocation5 + $0x9c] sm:$0xff]
    %v2250 = vld [vmem:[#allocation5 + $0xa4] sm:$0xf]
    %v2251 = vld [vmem:[#allocation5 + $0xa8] sm:$0xff]
    %v2252 = vld [vmem:[#allocation5 + $0xb0] sm:$0xf]
    %v2253 = vld [vmem:[#allocation5 + $0xb4] sm:$0xff]
    %v2254 = vld [vmem:[#allocation5 + $0xbc] sm:$0xf]
    %v2287 = vunpack.c.l.b16 %v2223
    %v2288 = vunpack.c.h.b16 %v2223
    %v2289 = vunpack.c.l.b16 %v2224
    %v2290 = vunpack.c.l.b16 %v2225
    %v2291 = vunpack.c.h.b16 %v2225
    %v2292 = vunpack.c.l.b16 %v2226
    %v2293 = vunpack.c.l.b16 %v2227
    %v2294 = vunpack.c.h.b16 %v2227
    %v2295 = vunpack.c.l.b16 %v2228
    %v2296 = vunpack.c.l.b16 %v2229
    %v2297 = vunpack.c.h.b16 %v2229
    %v2298 = vunpack.c.l.b16 %v2230
    %v2299 = vunpack.c.l.b16 %v2231
    %v2300 = vunpack.c.h.b16 %v2231
    %v2301 = vunpack.c.l.b16 %v2232
    %v2302 = vunpack.c.l.b16 %v2233
    %v2303 = vunpack.c.h.b16 %v2233
    %v2304 = vunpack.c.l.b16 %v2234
    %v2305 = vunpack.c.l.b16 %v2235
    %v2306 = vunpack.c.h.b16 %v2235
    %v2307 = vunpack.c.l.b16 %v2236
    %v2308 = vunpack.c.l.b16 %v2237
    %v2309 = vunpack.c.h.b16 %v2237
    %v2310 = vunpack.c.l.b16 %v2238
    %v2311 = vunpack.c.l.b16 %v2239
    %v2312 = vunpack.c.h.b16 %v2239
    %v2313 = vunpack.c.l.b16 %v2240
    %v2314 = vunpack.c.l.b16 %v2241
    %v2315 = vunpack.c.h.b16 %v2241
    %v2316 = vunpack.c.l.b16 %v2242
    %v2317 = vunpack.c.l.b16 %v2243
    %v2318 = vunpack.c.h.b16 %v2243
    %v2319 = vunpack.c.l.b16 %v2244
    %v2320 = vunpack.c.l.b16 %v2245
    %v2321 = vunpack.c.h.b16 %v2245
    %v2322 = vunpack.c.l.b16 %v2246
    %v2323 = vunpack.c.l.b16 %v2247
    %v2324 = vunpack.c.h.b16 %v2247
    %v2325 = vunpack.c.l.b16 %v2248
    %v2326 = vunpack.c.l.b16 %v2249
    %v2327 = vunpack.c.h.b16 %v2249
    %v2328 = vunpack.c.l.b16 %v2250
    %v2329 = vunpack.c.l.b16 %v2251
    %v2330 = vunpack.c.h.b16 %v2251
    %v2331 = vunpack.c.l.b16 %v2252
    %v2332 = vunpack.c.l.b16 %v2253
    %v2333 = vunpack.c.h.b16 %v2253
    %v2334 = vunpack.c.l.b16 %v2254
    %v2335 = vpack.c.b16 %v2290, %v2287
    %v2336 = vpack.c.b16 %v2291, %v2288
    %v2337 = vpack.c.b16 %v2292, %v2289
    %v2338 = vpack.c.b16 %v2296, %v2293
    %v2339 = vpack.c.b16 %v2297, %v2294
    %v2340 = vpack.c.b16 %v2298, %v2295
    %v2341 = vpack.c.b16 %v2302, %v2299
    %v2342 = vpack.c.b16 %v2303, %v2300
    %v2343 = vpack.c.b16 %v2304, %v2301
    %v2344 = vpack.c.b16 %v2308, %v2305
    %v2345 = vpack.c.b16 %v2309, %v2306
    %v2346 = vpack.c.b16 %v2310, %v2307
    %v2347 = vpack.c.b16 %v2314, %v2311
    %v2348 = vpack.c.b16 %v2315, %v2312
    %v2349 = vpack.c.b16 %v2316, %v2313
    %v2350 = vpack.c.b16 %v2320, %v2317
    %v2351 = vpack.c.b16 %v2321, %v2318
    %v2352 = vpack.c.b16 %v2322, %v2319
    %v2353 = vpack.c.b16 %v2326, %v2323
    %v2354 = vpack.c.b16 %v2327, %v2324
    %v2355 = vpack.c.b16 %v2328, %v2325
    %v2356 = vpack.c.b16 %v2332, %v2329
    %v2357 = vpack.c.b16 %v2333, %v2330
    %v2358 = vpack.c.b16 %v2334, %v2331
    %2383 = vmatprep.subr.bf16.mxu0 %v2357
    %2384 = vmatpush1.bf16.msra.mxu0 %v2356
    %2385 = vmatprep.subr.bf16.mxu0 %v2354
    %2386 = vmatpush1.bf16.msra.mxu0 %v2353
    %2387 = vmatprep.subr.bf16.mxu0 %v2351
    %2388 = vmatpush1.bf16.msra.mxu0 %v2350
    %2389 = vmatprep.subr.bf16.mxu0 %v2348
    %2390 = vmatpush1.bf16.msra.mxu0 %v2347
    %2391 = vmatprep.subr.bf16.mxu0 %v2345
    %2392 = vmatpush1.bf16.msra.mxu0 %v2344
    %2393 = vmatprep.subr.bf16.mxu0 %v2342
    %2394 = vmatpush1.bf16.msra.mxu0 %v2341
    %2395 = vmatprep.subr.bf16.mxu0 %v2339
    %2396 = vmatpush1.bf16.msra.mxu0 %v2338
    %2397 = vmatprep.subr.bf16.mxu0 %v2336
    %2398 = vmatpush1.bf16.msra.mxu0 %v2335
    %2399 = vmatprep.subr.bf16.mxu0 0
    %2400 = vmatpush2.bf16.msra.mxu0 0
    %2401 = vmatprep.subr.bf16.mxu0 0
    %2402 = vmatpush2.bf16.msra.mxu0 0
    %2403 = vmatprep.subr.bf16.mxu0 0
    %2404 = vmatpush2.bf16.msra.mxu0 0
    %2405 = vmatprep.subr.bf16.mxu0 0
    %2406 = vmatpush2.bf16.msra.mxu0 0
    %2407 = vmatprep.subr.bf16.mxu0 0
    %2408 = vmatpush2.bf16.msra.mxu0 0
    %2409 = vmatprep.subr.bf16.mxu0 0
    %2410 = vmatpush2.bf16.msra.mxu0 0
    %2411 = vmatprep.subr.bf16.mxu0 0
    %2412 = vmatpush2.bf16.msra.mxu0 0
    %2413 = vmatprep.subr.bf16.mxu0 0
    %2414 = vmatpush2.bf16.msra.mxu0 0
    %2415 = vmatprep.mubr.bf16.mxu0 0
    %2416 = vmatmul.mubr.bf16.gmra.mxu0 %v2222
    %v2417 = vpop.f32.mrf.mxu0
    %v2418 = vadd.f32 0.0, %v2417
    %v2419 = vpop.f32.mrf.mxu0
    %v2420 = vadd.f32 0.0, %v2419
    %v2421 = vpop.f32.mrf.mxu0
    %v2422 = vpop.f32.mrf.mxu0
    %2423 = vdwg.mxu0
    %2424 = vmatprep.subr.bf16.mxu0 0
    %2425 = vmatpush1.bf16.msra.mxu0 %v2358
    %2426 = vmatprep.subr.bf16.mxu0 0
    %2427 = vmatpush1.bf16.msra.mxu0 %v2355
    %2428 = vmatprep.subr.bf16.mxu0 0
    %2429 = vmatpush1.bf16.msra.mxu0 %v2352
    %2430 = vmatprep.subr.bf16.mxu0 0
    %2431 = vmatpush1.bf16.msra.mxu0 %v2349
    %2432 = vmatprep.subr.bf16.mxu0 0
    %2433 = vmatpush1.bf16.msra.mxu0 %v2346
    %2434 = vmatprep.subr.bf16.mxu0 0
    %2435 = vmatpush1.bf16.msra.mxu0 %v2343
    %2436 = vmatprep.subr.bf16.mxu0 0
    %2437 = vmatpush1.bf16.msra.mxu0 %v2340
    %2438 = vmatprep.subr.bf16.mxu0 0
    %2439 = vmatpush1.bf16.msra.mxu0 %v2337
    %2440 = vmatprep.subr.bf16.mxu0 0
    %2441 = vmatpush2.bf16.msra.mxu0 0
    %2442 = vmatprep.subr.bf16.mxu0 0
    %2443 = vmatpush2.bf16.msra.mxu0 0
    %2444 = vmatprep.subr.bf16.mxu0 0
    %2445 = vmatpush2.bf16.msra.mxu0 0
    %2446 = vmatprep.subr.bf16.mxu0 0
    %2447 = vmatpush2.bf16.msra.mxu0 0
    %2448 = vmatprep.subr.bf16.mxu0 0
    %2449 = vmatpush2.bf16.msra.mxu0 0
    %2450 = vmatprep.subr.bf16.mxu0 0
    %2451 = vmatpush2.bf16.msra.mxu0 0
    %2452 = vmatprep.subr.bf16.mxu0 0
    %2453 = vmatpush2.bf16.msra.mxu0 0
    %2454 = vmatprep.subr.bf16.mxu0 0
    %2455 = vmatpush2.bf16.msra.mxu0 0
    %2456 = vmatprep.mubr.bf16.mxu0 0
    %2457 = vmatmul.mubr.bf16.gmra.mxu0 %v2222
    %v2458 = vpop.f32.mrf.mxu0
    %v2459 = vadd.f32 0.0, %v2458
    %v2460 = vpop.f32.mrf.mxu0
    %v2461 = vpop.f32.mrf.mxu0
    %v2462 = vpop.f32.mrf.mxu0
    %2463 = vdwg.mxu0
    %s2464 = scalar_lea.vmem [#allocation2], 168
    %v2465 = vld [vmem:[%s2464] sm:$0xff]
    %v2466 = vld [vmem:[%s2464 + $0x8] sm:$0xff]
    %v2467 = vld [vmem:[%s2464 + $0x10] sm:$0xff]
    %v2468 = vadd.f32 %v2465, %v2418
    %v2469 = vxor.u32 %v2468, 2147483648
    %v2470 = vmul.f32 %v2469, 1.442695
    %v2471 = vpow.pop %v2470
    %v2472 = vadd.f32 %v2471, 1.0
    %v2473 = vrcp.pop %v2472
    %v2474 = vmul.f32 1.0, %v2473
    %v2475 = vadd.f32 %v2466, %v2420
    %v2476 = vxor.u32 %v2475, 2147483648
    %v2477 = vmul.f32 %v2476, 1.442695
    %v2478 = vpow.pop %v2477
    %v2479 = vadd.f32 %v2478, 1.0
    %v2480 = vrcp.pop %v2479
    %v2481 = vmul.f32 1.0, %v2480
    %v2482 = vadd.f32 %v2459, %v577
    %v2483 = vmul.f32 %v2474, %v2482
    %v2484 = vadd.f32 %v2467, %v2483
    %v2485 = vtanh.pop %v2484
    %v2486 = vsub.f32 1.0, %v2481
    %v2487 = vmul.f32 %v2486, %v2485
    %v2488 = vmul.f32 %v2481, %v2221
    %v2489 = vadd.f32 %v2487, %v2488
    %2490 = vst [vmem:[#allocation4] sm:$0xff] %v2489
    %s2491 = scalar_lea.vmem [#allocation3], 56
    %2492 = vst [vmem:[%s2491] sm:$0xff] %v2489
    %v2493 = vld [vmem:[#allocation3] sm:$0xff]
    %v2494 = vld [vmem:[#allocation3 + $0x8] sm:$0xff]
    %v2495 = vld [vmem:[#allocation3 + $0x10] sm:$0xff]
    %v2496 = vld [vmem:[#allocation3 + $0x18] sm:$0xff]
    %v2497 = vld [vmem:[#allocation3 + $0x20] sm:$0xff]
    %v2498 = vld [vmem:[#allocation3 + $0x28] sm:$0xff]
    %v2499 = vld [vmem:[#allocation3 + $0x30] sm:$0xff]
    %v2500 = vld [vmem:[#allocation3 + $0x38] sm:$0xff]
    %v2501 = vpack.c.bf16 %v2494, %v2493
    %v2502 = vpack.c.bf16 %v2496, %v2495
    %v2503 = vpack.c.bf16 %v2498, %v2497
    %v2504 = vpack.c.bf16 %v2500, %v2499
    %v2505 = vld [vmem:[#allocation8] sm:$0xf]
    %v2506 = vld [vmem:[#allocation8 + $0x4] sm:$0xf]
    %v2507 = vld [vmem:[#allocation8 + $0x8] sm:$0xf]
    %v2508 = vld [vmem:[#allocation8 + $0xc] sm:$0xf]
    %v2509 = vld [vmem:[#allocation8 + $0x10] sm:$0xf]
    %v2510 = vld [vmem:[#allocation8 + $0x14] sm:$0xf]
    %v2511 = vld [vmem:[#allocation8 + $0x18] sm:$0xf]
    %v2512 = vld [vmem:[#allocation8 + $0x1c] sm:$0xf]
    %v2513 = vld [vmem:[#allocation8 + $0x20] sm:$0xf]
    %v2514 = vld [vmem:[#allocation8 + $0x24] sm:$0xf]
    %v2515 = vld [vmem:[#allocation8 + $0x28] sm:$0xf]
    %v2516 = vld [vmem:[#allocation8 + $0x2c] sm:$0xf]
    %v2517 = vld [vmem:[#allocation8 + $0x30] sm:$0xf]
    %v2518 = vld [vmem:[#allocation8 + $0x34] sm:$0xf]
    %v2519 = vld [vmem:[#allocation8 + $0x38] sm:$0xf]
    %v2520 = vld [vmem:[#allocation8 + $0x3c] sm:$0xf]
    %v2521 = vld [vmem:[%s6] sm:$0x1]
    %v2523 = vlaneseq
    %v2524 = vshrl.u32 %v2523, 7
    %v2525 = vsub.s32 0, %v2524
    %v2526 = vrot.slane %v2521, %v2525
    %v2544 = vunpack.c.l.b16 %v2505
    %v2545 = vunpack.c.l.b16 %v2506
    %v2546 = vunpack.c.l.b16 %v2507
    %v2547 = vunpack.c.l.b16 %v2508
    %v2548 = vunpack.c.l.b16 %v2509
    %v2549 = vunpack.c.l.b16 %v2510
    %v2550 = vunpack.c.l.b16 %v2511
    %v2551 = vunpack.c.l.b16 %v2512
    %v2552 = vunpack.c.l.b16 %v2513
    %v2553 = vunpack.c.l.b16 %v2514
    %v2554 = vunpack.c.l.b16 %v2515
    %v2555 = vunpack.c.l.b16 %v2516
    %v2556 = vunpack.c.l.b16 %v2517
    %v2557 = vunpack.c.l.b16 %v2518
    %v2558 = vunpack.c.l.b16 %v2519
    %v2559 = vunpack.c.l.b16 %v2520
    %v2560 = vpack.c.b16 %v2545, %v2544
    %v2561 = vpack.c.b16 %v2547, %v2546
    %v2562 = vpack.c.b16 %v2549, %v2548
    %v2563 = vpack.c.b16 %v2551, %v2550
    %v2564 = vpack.c.b16 %v2553, %v2552
    %v2565 = vpack.c.b16 %v2555, %v2554
    %v2566 = vpack.c.b16 %v2557, %v2556
    %v2567 = vpack.c.b16 %v2559, %v2558
    %2576 = vmatprep.subr.bf16.mxu0 0
    %2577 = vmatpush1.bf16.msra.mxu0 %v2567
    %2578 = vmatprep.subr.bf16.mxu0 0
    %2579 = vmatpush1.bf16.msra.mxu0 %v2566
    %2580 = vmatprep.subr.bf16.mxu0 0
    %2581 = vmatpush1.bf16.msra.mxu0 %v2565
    %2582 = vmatprep.subr.bf16.mxu0 0
    %2583 = vmatpush1.bf16.msra.mxu0 %v2564
    %2584 = vmatprep.subr.bf16.mxu0 0
    %2585 = vmatpush1.bf16.msra.mxu0 %v2563
    %2586 = vmatprep.subr.bf16.mxu0 0
    %2587 = vmatpush1.bf16.msra.mxu0 %v2562
    %2588 = vmatprep.subr.bf16.mxu0 0
    %2589 = vmatpush1.bf16.msra.mxu0 %v2561
    %2590 = vmatprep.subr.bf16.mxu0 0
    %2591 = vmatpush1.bf16.msra.mxu0 %v2560
    %2592 = vmatprep.subr.bf16.mxu0 0
    %2593 = vmatpush2.bf16.msra.mxu0 0
    %2594 = vmatprep.subr.bf16.mxu0 0
    %2595 = vmatpush2.bf16.msra.mxu0 0
    %2596 = vmatprep.subr.bf16.mxu0 0
    %2597 = vmatpush2.bf16.msra.mxu0 0
    %2598 = vmatprep.subr.bf16.mxu0 0
    %2599 = vmatpush2.bf16.msra.mxu0 0
    %2600 = vmatprep.subr.bf16.mxu0 0
    %2601 = vmatpush2.bf16.msra.mxu0 0
    %2602 = vmatprep.subr.bf16.mxu0 0
    %2603 = vmatpush2.bf16.msra.mxu0 0
    %2604 = vmatprep.subr.bf16.mxu0 0
    %2605 = vmatpush2.bf16.msra.mxu0 0
    %2606 = vmatprep.subr.bf16.mxu0 0
    %2607 = vmatpush2.bf16.msra.mxu0 0
    %2608 = vmatprep.mubr.bf16.mxu0 0
    %2609 = vmatmul.mubr.bf16.gmra.mxu0 %v2501
    %v2610 = vpop.f32.mrf.mxu0
    %v2611 = vadd.f32 %v2526, %v2610
    %v2612 = vpop.f32.mrf.mxu0
    %v2613 = vpop.f32.mrf.mxu0
    %v2614 = vadd.f32 %v2526, %v2613
    %v2615 = vpop.f32.mrf.mxu0
    %2616 = vmatprep.mubr.bf16.mxu0 0
    %2617 = vmatmul.mubr.bf16.gmra.mxu0 %v2502
    %v2618 = vpop.f32.mrf.mxu0
    %v2619 = vadd.f32 %v2526, %v2618
    %v2620 = vpop.f32.mrf.mxu0
    %v2621 = vpop.f32.mrf.mxu0
    %v2622 = vadd.f32 %v2526, %v2621
    %v2623 = vpop.f32.mrf.mxu0
    %2624 = vmatprep.mubr.bf16.mxu0 0
    %2625 = vmatmul.mubr.bf16.gmra.mxu0 %v2503
    %v2626 = vpop.f32.mrf.mxu0
    %v2627 = vadd.f32 %v2526, %v2626
    %v2628 = vpop.f32.mrf.mxu0
    %v2629 = vpop.f32.mrf.mxu0
    %v2630 = vadd.f32 %v2526, %v2629
    %v2631 = vpop.f32.mrf.mxu0
    %2632 = vmatprep.mubr.bf16.mxu0 0
    %2633 = vmatmul.mubr.bf16.gmra.mxu0 %v2504
    %v2634 = vpop.f32.mrf.mxu0
    %v2635 = vadd.f32 %v2526, %v2634
    %v2636 = vpop.f32.mrf.mxu0
    %v2637 = vpop.f32.mrf.mxu0
    %v2638 = vadd.f32 %v2526, %v2637
    %v2639 = vpop.f32.mrf.mxu0
    %2640 = vdwg.mxu0
    %v2641 = vlaneseq
    %v2642 = vand.u32 %v2641, 127
    %vm2643 = vcmp.ge.s32.totalorder %v2642, 3
    %vm2644 = vcmp.lt.s32.totalorder %v2642, 6
    %vm2645 = vmand %vm2643, %vm2644
    %v2646 = vmax.f32 %v2611, 0.0
    %v2647 = vmax.f32 %v2614, 0.0
    %v2648 = vmax.f32 %v2619, 0.0
    %v2649 = vmax.f32 %v2622, 0.0
    %v2650 = vmax.f32 %v2627, 0.0
    %v2651 = vmax.f32 %v2630, 0.0
    %v2652 = vmax.f32 %v2635, 0.0
    %v2653 = vmax.f32 %v2638, 0.0
    %v2654 = vand.u32 2147483647, %v2611
    %v2655 = vand.u32 2147483647, %v2614
    %v2656 = vand.u32 2147483647, %v2619
    %v2657 = vand.u32 2147483647, %v2622
    %v2658 = vand.u32 2147483647, %v2627
    %v2659 = vand.u32 2147483647, %v2630
    %v2660 = vand.u32 2147483647, %v2635
    %v2661 = vand.u32 2147483647, %v2638
    %v2662 = vsub.f32 0.0, %v2654
    %v2663 = vsub.f32 0.0, %v2655
    %v2664 = vsub.f32 0.0, %v2656
    %v2665 = vsub.f32 0.0, %v2657
    %v2666 = vsub.f32 0.0, %v2658
    %v2667 = vsub.f32 0.0, %v2659
    %v2668 = vsub.f32 0.0, %v2660
    %v2669 = vsub.f32 0.0, %v2661
    %v2670 = vmul.f32 %v2662, 1.442695
    %v2671 = vpow.pop %v2670
    %v2672 = vmul.f32 %v2663, 1.442695
    %v2673 = vpow.pop %v2672
    %v2674 = vmul.f32 %v2664, 1.442695
    %v2675 = vpow.pop %v2674
    %v2676 = vmul.f32 %v2665, 1.442695
    %v2677 = vpow.pop %v2676
    %v2678 = vmul.f32 %v2666, 1.442695
    %v2679 = vpow.pop %v2678
    %v2680 = vmul.f32 %v2667, 1.442695
    %v2681 = vpow.pop %v2680
    %v2682 = vmul.f32 %v2668, 1.442695
    %v2683 = vpow.pop %v2682
    %v2684 = vmul.f32 %v2669, 1.442695
    %v2685 = vpow.pop %v2684
    %v2686 = vadd.f32 %v2671, 1.0
    %v2687 = vlog2.pop %v2686
    %v2688 = vmul.f32 %v2687, 0.6931472
    %v2689 = vmul.f32 -0.5, %v2671
    %v2690 = vadd.f32 %v2689, 1.0
    %v2691 = vmul.f32 %v2690, %v2671
    %v2692 = vand.u32 2147483647, %v2671
    %vm2693 = vcmp.lt.f32.partialorder %v2692, 0.0004427343
    %v2694 = vsel %vm2693, %v2691, %v2688
    %v2695 = vadd.f32 %v2673, 1.0
    %v2696 = vlog2.pop %v2695
    %v2697 = vmul.f32 %v2696, 0.6931472
    %v2698 = vmul.f32 -0.5, %v2673
    %v2699 = vadd.f32 %v2698, 1.0
    %v2700 = vmul.f32 %v2699, %v2673
    %v2701 = vand.u32 2147483647, %v2673
    %vm2702 = vcmp.lt.f32.partialorder %v2701, 0.0004427343
    %v2703 = vsel %vm2702, %v2700, %v2697
    %v2704 = vadd.f32 %v2675, 1.0
    %v2705 = vlog2.pop %v2704
    %v2706 = vmul.f32 %v2705, 0.6931472
    %v2707 = vmul.f32 -0.5, %v2675
    %v2708 = vadd.f32 %v2707, 1.0
    %v2709 = vmul.f32 %v2708, %v2675
    %v2710 = vand.u32 2147483647, %v2675
    %vm2711 = vcmp.lt.f32.partialorder %v2710, 0.0004427343
    %v2712 = vsel %vm2711, %v2709, %v2706
    %v2713 = vadd.f32 %v2677, 1.0
    %v2714 = vlog2.pop %v2713
    %v2715 = vmul.f32 %v2714, 0.6931472
    %v2716 = vmul.f32 -0.5, %v2677
    %v2717 = vadd.f32 %v2716, 1.0
    %v2718 = vmul.f32 %v2717, %v2677
    %v2719 = vand.u32 2147483647, %v2677
    %vm2720 = vcmp.lt.f32.partialorder %v2719, 0.0004427343
    %v2721 = vsel %vm2720, %v2718, %v2715
    %v2722 = vadd.f32 %v2679, 1.0
    %v2723 = vlog2.pop %v2722
    %v2724 = vmul.f32 %v2723, 0.6931472
    %v2725 = vmul.f32 -0.5, %v2679
    %v2726 = vadd.f32 %v2725, 1.0
    %v2727 = vmul.f32 %v2726, %v2679
    %v2728 = vand.u32 2147483647, %v2679
    %vm2729 = vcmp.lt.f32.partialorder %v2728, 0.0004427343
    %v2730 = vsel %vm2729, %v2727, %v2724
    %v2731 = vadd.f32 %v2681, 1.0
    %v2732 = vlog2.pop %v2731
    %v2733 = vmul.f32 %v2732, 0.6931472
    %v2734 = vmul.f32 -0.5, %v2681
    %v2735 = vadd.f32 %v2734, 1.0
    %v2736 = vmul.f32 %v2735, %v2681
    %v2737 = vand.u32 2147483647, %v2681
    %vm2738 = vcmp.lt.f32.partialorder %v2737, 0.0004427343
    %v2739 = vsel %vm2738, %v2736, %v2733
    %v2740 = vadd.f32 %v2683, 1.0
    %v2741 = vlog2.pop %v2740
    %v2742 = vmul.f32 %v2741, 0.6931472
    %v2743 = vmul.f32 -0.5, %v2683
    %v2744 = vadd.f32 %v2743, 1.0
    %v2745 = vmul.f32 %v2744, %v2683
    %v2746 = vand.u32 2147483647, %v2683
    %vm2747 = vcmp.lt.f32.partialorder %v2746, 0.0004427343
    %v2748 = vsel %vm2747, %v2745, %v2742
    %v2749 = vadd.f32 %v2685, 1.0
    %v2750 = vlog2.pop %v2749
    %v2751 = vmul.f32 %v2750, 0.6931472
    %v2752 = vmul.f32 -0.5, %v2685
    %v2753 = vadd.f32 %v2752, 1.0
    %v2754 = vmul.f32 %v2753, %v2685
    %v2755 = vand.u32 2147483647, %v2685
    %vm2756 = vcmp.lt.f32.partialorder %v2755, 0.0004427343
    %v2757 = vsel %vm2756, %v2754, %v2751
    %v2758 = vadd.f32 %v2646, %v2694
    %v2759 = vadd.f32 %v2647, %v2703
    %v2760 = vadd.f32 %v2648, %v2712
    %v2761 = vadd.f32 %v2649, %v2721
    %v2762 = vadd.f32 %v2650, %v2730
    %v2763 = vadd.f32 %v2651, %v2739
    %v2764 = vadd.f32 %v2652, %v2748
    %v2765 = vadd.f32 %v2653, %v2757
    %v2766 = vsel %vm2645, %v2758, %v2611
    %v2767 = vsel %vm2645, %v2759, %v2614
    %v2768 = vsel %vm2645, %v2760, %v2619
    %v2769 = vsel %vm2645, %v2761, %v2622
    %v2770 = vsel %vm2645, %v2762, %v2627
    %v2771 = vsel %vm2645, %v2763, %v2630
    %v2772 = vsel %vm2645, %v2764, %v2635
    %v2773 = vsel %vm2645, %v2765, %v2638
    %2774 = vst [vmem:[#allocation10] sm:$0xff] %v2766
    %2775 = vst [vmem:[#allocation10 + $0x8] sm:$0xff] %v2767
    %2776 = vst [vmem:[#allocation10 + $0x10] sm:$0xff] %v2768
    %2777 = vst [vmem:[#allocation10 + $0x18] sm:$0xff] %v2769
    %2778 = vst [vmem:[#allocation10 + $0x20] sm:$0xff] %v2770
    %2779 = vst [vmem:[#allocation10 + $0x28] sm:$0xff] %v2771
    %2780 = vst [vmem:[#allocation10 + $0x30] sm:$0xff] %v2772
    %2781 = vst [vmem:[#allocation10 + $0x38] sm:$0xff] %v2773
    // Predicated region
    $region38: #{tpu_custom_call.1} parent=1 // pred_check
      _
    $region39: #{tpu_custom_call.1} parent=1 // pred_check_branch
      %2783 = sbr.rel (0) target = $region41
    $region40: #{tpu_custom_call.1} parent=1 // pred_region
      %s2785 = ssub.s32 1024, 1024
      %2786 = vsyncadd [#allocation7], %s2785
      %s2787 = sshll.u32 [#allocation10], 4
      %s2788 = int_to_ptr.vmem [resolvable:$true] %s2787
      %2793 = dma.vmem_to_hbm [thread:$0]  %s2788, 1024, %s7, [#allocation7], 128, 128, 8
    $region41: #{tpu_custom_call.1} parent=1 // pred_fallthru
      _
    // Predicated region
    $region42: #{tpu_custom_call.1} parent=1 // pred_check
      _
    $region43: #{tpu_custom_call.1} parent=1 // pred_check_branch
      %2795 = sbr.rel (0) target = $region45
    $region44: #{tpu_custom_call.1} parent=1 // pred_region
      %2796 = dma.done [#allocation7], 1024
    $region45: #{tpu_custom_call.1} parent=1 // pred_fallthru
      _
    %2797 = vsyncpa [#allocation6], 1
    %2798 = vsyncpa [#allocation9], 1
    %2799 = vsyncpa [#allocation7], 1

</llo_original>
